<compile_context>
chip_gen: v7x
topology: tpu7x:2x2x1
jax: 0.10.0
libtpu: 0.0.40
codegen_flags: <defaults>
</compile_context>

<pallas_src>
import functools
import math

import jax
import jax.numpy as jnp
import numpy as np
from jax import lax
from jax.experimental import pallas as pl
from jax.experimental.pallas import tpu as pltpu


# ------------------------------ Pallas kernel -------------------------------

def lambda_fused_kernel(x_ref, w_ref, shift_ref, w2_ref, tapmask_ref,
                        blkmask_ref, bconv_ref, o_ref, x2_ref,
                        *, Nh, dk, du, dv, H, W, r, tap_group, n_taps_pad):
    M = H * W
    pad = (r - 1) // 2
    cq = Nh * dk
    ck = dk * du
    cvu = du * dv
    n_taps = r * r
    f32 = jnp.float32

    # (1) 1x1 qkv conv on the MXU; folded-BN shift applied as an f32 bias.  [MXU]
    qkv = jnp.dot(w_ref[...], x_ref[...], preferred_element_type=f32)   # (Cout, M)
    qkv = qkv + shift_ref[...]                                          # (Cout, 1) bias
    q = qkv[:cq, :]                       # (Nh*dk, M)  rows (h, k)
    kk = qkv[cq:cq + ck, :]               # (du*dk, M)  rows (u, k)
    v = qkv[cq + ck:, :]                  # (du*dv, M)  rows (u, v)

    # (2) softmax over spatial positions (lane axis); exact reciprocal (dk*du values).
    kk = kk - jnp.max(kk, axis=-1, keepdims=True)
    kk = jnp.exp(kk)
    kk = kk * pl.reciprocal(jnp.sum(kk, axis=-1, keepdims=True), approx=False)

    # (3) content lambda (transposed): lam_t (dv, dk); conv bias folded in.  [MXU]
    lam_t = jnp.zeros((dv, dk), f32)
    for u in range(du):
        lam_t = lam_t + lax.dot_general(
            v[u * dv:(u + 1) * dv, :], kk[u * dk:(u + 1) * dk, :],
            (((1,), (1,)), ((), ())), preferred_element_type=f32)
    lam_t = lam_t + bconv_ref[...]        # (1, dk) broadcast over dv rows

    # (4) im2col tap matrix: XLU lane-rotates of v + combined validity mask,
    #     stored in full-tile groups (pairs for bf16, singles for f32).
    for g0 in range(0, n_taps_pad, tap_group):
        slabs = []
        for t in range(g0, g0 + tap_group):
            if t < n_taps:
                a, b = divmod(t, r)
                off = (a - pad) * W + (b - pad)
                shift = (-off) % M
                rolled = pltpu.roll(v, shift, 1) if shift else v
            else:
                rolled = v                # dummy pad tap; its mask row is all zero
            slabs.append(rolled * tapmask_ref[t:t + 1, :])
        grp = slabs[0] if tap_group == 1 else jnp.concatenate(slabs, axis=0)
        x2_ref[g0 * cvu:(g0 + tap_group) * cvu, :] = grp.astype(x2_ref.dtype)

    # (5) all (k, v) position lambdas with ONE MXU matmul; row order v*dk + k
    #     (bias excluded -- folded into lam_t).                            [MXU]
    l2 = jnp.dot(w2_ref[...], x2_ref[...], preferred_element_type=f32)   # (dv*dk, M)

    # (6) yc for ALL heads as one block-diagonal matmul, rows already in
    #     output order (h*dv + v).                                         [MXU]
    lam_row = jnp.concatenate([lam_t] * Nh, axis=1)                      # (dv, Nh*dk)
    lam_blk = jnp.concatenate([lam_row] * Nh, axis=0) * blkmask_ref[...] # (Nh*dv, Nh*dk)
    yc = jnp.dot(lam_blk, q, preferred_element_type=f32)                 # (Nh*dv, M)

    # (7) position term: per-(head, v) contiguous sublane reduce over k (XLU),
    #     one aligned (dv, M) store per head.
    for h in range(Nh):
        qh = q[h * dk:(h + 1) * dk, :]                                   # (dk, M)
        rows = []
        for vi in range(dv):
            rows.append(jnp.sum(qh * l2[vi * dk:(vi + 1) * dk, :],
                                axis=0, keepdims=True))                  # (1, M)
        y_h = yc[h * dv:(h + 1) * dv, :] + jnp.concatenate(rows, axis=0)
        o_ref[h * dv:(h + 1) * dv, :] = y_h.astype(o_ref.dtype)


# -------------------------------- Wrapper ------------------------------------

def lambda_layer_pallas(x, params, *, Nh, dk, du, r, mxu_dtype=jnp.bfloat16):
    N, C, H, W = x.shape
    d = C
    dv = d // Nh
    M = H * W
    pad = (r - 1) // 2
    cq, ck, cv = Nh * dk, dk * du, dv * du
    cvu = cv
    Cout = cq + ck + cv
    eps = 1e-5
    n_taps = r * r

    # ---- fold BatchNorm (inference mode) into the 1x1 qkv weight; shift stays f32 ----
    scale_q = params["gamma_q"] / jnp.sqrt(params["var_q"] + eps)
    shift_q = params["beta_q"] - params["mean_q"] * scale_q
    scale_v = params["gamma_v"] / jnp.sqrt(params["var_v"] + eps)
    shift_v = params["beta_v"] - params["mean_v"] * scale_v
    scale = jnp.concatenate([scale_q, jnp.ones((ck,), jnp.float32), scale_v])
    shift = jnp.concatenate([shift_q, jnp.zeros((ck,), jnp.float32), shift_v])
    w_eff = (params["w_qkv"].astype(jnp.float32) * scale[:, None]).astype(mxu_dtype)
    shift_col = shift.reshape(Cout, 1).astype(jnp.float32)

    # ---- x as (N, C, M): pure reshape for f32, half-size copy for bf16 ----
    x_in = x.reshape(N, C, M).astype(mxu_dtype)

    # ---- tap grouping so every x2 store is a full packed sublane tile ----
    rows_per_tile = 32 // jnp.dtype(mxu_dtype).itemsize          # 8 (f32) / 16 (bf16)
    tap_group = rows_per_tile // math.gcd(cvu, rows_per_tile)
    n_taps_pad = ((n_taps + tap_group - 1) // tap_group) * tap_group
    K2p = n_taps_pad * cvu

    # ---- block-diagonal im2col weight (row order v*dk + k, tap-major columns) ----
    wc = np.asarray(params["w_conv"], dtype=np.float32)          # (dk, du, r, r)
    w2_np = np.zeros((dv * dk, K2p), np.float32)
    for a in range(r):
        for b in range(r):
            t = a * r + b
            for u in range(du):
                for vi in range(dv):
                    w2_np[vi * dk:(vi + 1) * dk, t * cvu + u * dv + vi] = wc[:, u, a, b]

    # ---- combined (row + column) validity mask per tap; dummy taps stay zero ----
    ii, jj = np.arange(M) // W, np.arange(M) % W
    tap_mask = np.zeros((n_taps_pad, M), np.float32)
    for a in range(r):
        for b in range(r):
            da, db = a - pad, b - pad
            ok = (ii + da >= 0) & (ii + da < H) & (jj + db >= 0) & (jj + db < W)
            tap_mask[a * r + b] = ok.astype(np.float32)

    # ---- {0,1} block-diagonal mask for the fused yc matmul ----
    rh = np.arange(Nh * dv) // dv
    ch = np.arange(Nh * dk) // dk
    blk_mask = (rh[:, None] == ch[None, :]).astype(np.float32)

    bconv_row = params["b_conv"].reshape(1, dk).astype(jnp.float32)

    itm = jnp.dtype(mxu_dtype).itemsize
    flops = N * (2 * Cout * C * M          # qkv projection
                 + 2 * du * dv * dk * M    # content lambda
                 + 2 * (dv * dk) * K2p * M # position lambdas (im2col matmul)
                 + 2 * (Nh * dv) * (Nh * dk) * M   # yc
                 + 2 * Nh * dv * dk * M)   # position apply
    transcendentals = N * ck * M
    bytes_accessed = (N * C * M * itm + N * d * M * 4
                      + Cout * C * itm + (dv * dk) * K2p * itm
                      + n_taps_pad * M * 4 + Nh * dv * Nh * dk * 4
                      + Cout * 4 + dk * 4)

    kern = functools.partial(lambda_fused_kernel,
                             Nh=Nh, dk=dk, du=du, dv=dv, H=H, W=W, r=r,
                             tap_group=tap_group, n_taps_pad=n_taps_pad)
    out_flat = pl.pallas_call(
        kern,
        out_shape=jax.ShapeDtypeStruct((N, d, M), jnp.float32),
        grid=(N,),
        in_specs=[
            pl.BlockSpec((None, C, M), lambda b: (b, 0, 0)),      # x (mxu dtype)
            pl.BlockSpec((Cout, C), lambda b: (0, 0)),            # BN-folded qkv weight
            pl.BlockSpec((Cout, 1), lambda b: (0, 0)),            # f32 post-matmul shift
            pl.BlockSpec((dv * dk, K2p), lambda b: (0, 0)),       # block-diag conv weight
            pl.BlockSpec((n_taps_pad, M), lambda b: (0, 0)),      # tap validity masks
            pl.BlockSpec((Nh * dv, Nh * dk), lambda b: (0, 0)),   # block-diag mask
            pl.BlockSpec((1, dk), lambda b: (0, 0)),              # conv bias row
        ],
        out_specs=pl.BlockSpec((None, d, M), lambda b: (b, 0, 0)),
        scratch_shapes=[pltpu.VMEM((K2p, M), mxu_dtype)],         # im2col tap matrix
        compiler_params=pltpu.CompilerParams(
            dimension_semantics=("parallel",)),                   # megacore on v7x
        cost_estimate=pl.CostEstimate(flops=flops,
                                      transcendentals=transcendentals,
                                      bytes_accessed=bytes_accessed),
    )(x_in, w_eff, shift_col, jnp.asarray(w2_np).astype(mxu_dtype),
      jnp.asarray(tap_mask), jnp.asarray(blk_mask), bconv_row)

    return out_flat.reshape(N, d, H, W)


# --------------------------- pure-JAX reference ------------------------------

def lambda_layer_ref(x, params, *, Nh, dk, du, r):
    N, C, H, W = x.shape
    dv = C // Nh
    M = H * W
    pad = (r - 1) // 2
    cq, ck, cv = Nh * dk, dk * du, dv * du
    eps = 1e-5
    hp = lax.Precision.HIGHEST

    qkv = jnp.einsum('oc,nchw->nohw', params["w_qkv"], x, precision=hp)
    q, k, v = qkv[:, :cq], qkv[:, cq:cq + ck], qkv[:, cq + ck:]

    def bn(t, g, b, m, var):
        return ((t - m[None, :, None, None]) / jnp.sqrt(var + eps)[None, :, None, None]
                * g[None, :, None, None] + b[None, :, None, None])

    q = bn(q, params["gamma_q"], params["beta_q"], params["mean_q"], params["var_q"])
    v = bn(v, params["gamma_v"], params["beta_v"], params["mean_v"], params["var_v"])
    q = q.reshape(N, Nh, dk, M)
    v = v.reshape(N, du, dv, M)
    k = jax.nn.softmax(k.reshape(N, du, dk, M), axis=-1)

    lambda_c = jnp.einsum('bukm,buvm->bkv', k, v, precision=hp)
    yc = jnp.einsum('bhkm,bkv->bhvm', q, lambda_c, precision=hp)

    v4 = v.reshape(N, du, dv, H, W).transpose(0, 2, 1, 3, 4).reshape(N * dv, du, H, W)
    lp = lax.conv_general_dilated(
        v4, params["w_conv"], window_strides=(1, 1), padding=((pad, pad), (pad, pad)),
        dimension_numbers=('NCHW', 'OIHW', 'NCHW'), precision=hp)
    lp = lp.reshape(N, dv, dk, H, W).transpose(0, 2, 1, 3, 4)
    lp = lp + params["b_conv"][None, :, None, None, None]
    lambda_p = lp.reshape(N, dk, dv, M)

    yp = jnp.einsum('bhkm,bkvm->bhvm', q, lambda_p, precision=hp)
    return (yc + yp).reshape(N, C, H, W)


# ---------------------------------- main -------------------------------------

if __name__ == "__main__":
    # LambdaLayer(d=32, dk=16, du=1, Nh=4, r=5, stride=1) -> dv = 8
    d, dk, du, Nh, r = 32, 16, 1, 4, 5
    dv = d // Nh
    N, H, W = 2, 16, 16
    cq, ck, cv = Nh * dk, dk * du, dv * du
    Cout = cq + ck + cv

    key = jax.random.PRNGKey(0)
    kx, kw, kc, kb, kg1, kb1, km1, kg2, kb2, km2 = jax.random.split(key, 10)

    x = jax.random.normal(kx, (N, d, H, W), jnp.float32)
    params = {
        "w_qkv": jax.random.normal(kw, (Cout, d), jnp.float32) / jnp.sqrt(d),
        "w_conv": jax.random.normal(kc, (dk, du, r, r), jnp.float32) / (r * np.sqrt(du)),
        "b_conv": 0.1 * jax.random.normal(kb, (dk,), jnp.float32),
        "gamma_q": 1.0 + 0.1 * jax.random.normal(kg1, (cq,), jnp.float32),
        "beta_q": 0.1 * jax.random.normal(kb1, (cq,), jnp.float32),
        "mean_q": 0.1 * jax.random.normal(km1, (cq,), jnp.float32),
        "var_q": jnp.ones((cq,), jnp.float32),
        "gamma_v": 1.0 + 0.1 * jax.random.normal(kg2, (cv,), jnp.float32),
        "beta_v": 0.1 * jax.random.normal(kb2, (cv,), jnp.float32),
        "mean_v": 0.1 * jax.random.normal(km2, (cv,), jnp.float32),
        "var_v": jnp.ones((cv,), jnp.float32),
    }

    ref = lambda_layer_ref(x, params, Nh=Nh, dk=dk, du=du, r=r)

    # f32 MXU-operand path: stricter numerical check (exact reciprocal, f32 math).
    out = lambda_layer_pallas(x, params, Nh=Nh, dk=dk, du=du, r=r,
                              mxu_dtype=jnp.float32)
    out = jax.block_until_ready(out)
    np.testing.assert_allclose(np.asarray(out), np.asarray(ref), rtol=2e-2, atol=2e-2)

    # Default (perf) path: bf16 MXU operands, f32 accumulation, f32 VPU math.
    out_bf16 = lambda_layer_pallas(x, params, Nh=Nh, dk=dk, du=du, r=r)
    out_bf16 = jax.block_until_ready(out_bf16)
    np.testing.assert_allclose(np.asarray(out_bf16), np.asarray(ref), rtol=1e-1, atol=5e-1)

    print("KERNEL_OK")
</pallas_src>

<mosaic_0001>
module attributes {stable_mosaic.version = 11 : i64} {
  func.func @lambda_fused_kernel(%arg0: i32, %arg1: memref<1x32x256xf32, #tpu.memory_space<vmem>>, %arg2: memref<88x32xf32, #tpu.memory_space<vmem>>, %arg3: memref<88x1xf32, #tpu.memory_space<vmem>>, %arg4: memref<128x200xf32, #tpu.memory_space<vmem>>, %arg5: memref<25x256xf32, #tpu.memory_space<vmem>>, %arg6: memref<32x64xf32, #tpu.memory_space<vmem>>, %arg7: memref<1x16xf32, #tpu.memory_space<vmem>>, %arg8: memref<1x32x256xf32, #tpu.memory_space<vmem>>, %arg9: memref<200x256xf32, #tpu.memory_space<vmem>>) attributes {dimension_semantics = [#tpu.dimension_semantics<parallel>], iteration_bounds = array<i64: 2>, scalar_prefetch = 0 : i64, scratch_operands = 1 : i64, tpu.core_type = #tpu.core_type<tc>, window_params = [{transform_indices = @transform_0, window_bounds = array<i64: 1, 32, 256>}, {pipeline_mode = #tpu.pipeline_mode<synchronous>, transform_indices = @transform_1, window_bounds = array<i64: 88, 32>}, {pipeline_mode = #tpu.pipeline_mode<synchronous>, transform_indices = @transform_2, window_bounds = array<i64: 88, 1>}, {pipeline_mode = #tpu.pipeline_mode<synchronous>, transform_indices = @transform_3, window_bounds = array<i64: 128, 200>}, {pipeline_mode = #tpu.pipeline_mode<synchronous>, transform_indices = @transform_4, window_bounds = array<i64: 25, 256>}, {pipeline_mode = #tpu.pipeline_mode<synchronous>, transform_indices = @transform_5, window_bounds = array<i64: 32, 64>}, {pipeline_mode = #tpu.pipeline_mode<synchronous>, transform_indices = @transform_6, window_bounds = array<i64: 1, 16>}, {transform_indices = @transform_7, window_bounds = array<i64: 1, 32, 256>}]} {
    %c0 = arith.constant 0 : index
    %c0_0 = arith.constant 0 : index
    %0 = vector.load %arg2[%c0, %c0_0] : memref<88x32xf32, #tpu.memory_space<vmem>>, vector<88x32xf32>
    %c0_1 = arith.constant 0 : index
    %c0_2 = arith.constant 0 : index
    %c0_3 = arith.constant 0 : index
    %1 = vector.load %arg1[%c0_1, %c0_2, %c0_3] : memref<1x32x256xf32, #tpu.memory_space<vmem>>, vector<1x32x256xf32>
    %2 = vector.shape_cast %1 : vector<1x32x256xf32> to vector<32x256xf32>
    %cst = arith.constant dense<0.000000e+00> : vector<88x256xf32>
    %3 = tpu.matmul %0, %2, %cst {dimension_numbers = #tpu.dot_dimension_numbers<[1], [0], [0], [1], [0, 0, 1, 1], [], []>} : vector<88x32xf32>, vector<32x256xf32>, vector<88x256xf32> -> vector<88x256xf32>
    %c0_4 = arith.constant 0 : index
    %c0_5 = arith.constant 0 : index
    %4 = vector.load %arg3[%c0_4, %c0_5] : memref<88x1xf32, #tpu.memory_space<vmem>>, vector<88x1xf32>
    %5 = vector.broadcast %4 : vector<88x1xf32> to vector<88x256xf32>
    %6 = arith.addf %3, %5 : vector<88x256xf32>
    %7 = vector.extract_strided_slice %6 {offsets = [0, 0], sizes = [64, 256], strides = [1, 1]} : vector<88x256xf32> to vector<64x256xf32>
    %8 = vector.extract_strided_slice %6 {offsets = [64, 0], sizes = [16, 256], strides = [1, 1]} : vector<88x256xf32> to vector<16x256xf32>
    %9 = vector.extract_strided_slice %6 {offsets = [80, 0], sizes = [8, 256], strides = [1, 1]} : vector<88x256xf32> to vector<8x256xf32>
    %cst_6 = arith.constant dense<0xFF800000> : vector<16xf32>
    %10 = vector.multi_reduction <maximumf>, %8, %cst_6 [1] : vector<16x256xf32> to vector<16xf32>
    %11 = vector.shape_cast %10 : vector<16xf32> to vector<16x1xf32>
    %12 = vector.broadcast %11 : vector<16x1xf32> to vector<16x256xf32>
    %13 = arith.subf %8, %12 : vector<16x256xf32>
    %14 = math.exp %13 : vector<16x256xf32>
    %cst_7 = arith.constant dense<0.000000e+00> : vector<16xf32>
    %15 = vector.multi_reduction <add>, %14, %cst_7 [1] : vector<16x256xf32> to vector<16xf32>
    %16 = vector.shape_cast %15 : vector<16xf32> to vector<16x1xf32>
    %17 = tpu.reciprocal %16 : vector<16x1xf32> -> vector<16x1xf32>
    %18 = vector.broadcast %17 : vector<16x1xf32> to vector<16x256xf32>
    %19 = arith.mulf %14, %18 : vector<16x256xf32>
    %cst_8 = arith.constant 0.000000e+00 : f32
    %20 = vector.broadcast %cst_8 : f32 to vector<8x16xf32>
    %cst_9 = arith.constant dense<0.000000e+00> : vector<8x16xf32>
    %21 = tpu.matmul %9, %19, %cst_9 {dimension_numbers = #tpu.dot_dimension_numbers<[1], [1], [0], [0], [0, 0, 1, 0], [], []>} : vector<8x256xf32>, vector<16x256xf32>, vector<8x16xf32> -> vector<8x16xf32>
    %22 = arith.addf %20, %21 : vector<8x16xf32>
    %c0_10 = arith.constant 0 : index
    %c0_11 = arith.constant 0 : index
    %23 = vector.load %arg7[%c0_10, %c0_11] : memref<1x16xf32, #tpu.memory_space<vmem>>, vector<1x16xf32>
    %24 = vector.broadcast %23 : vector<1x16xf32> to vector<8x16xf32>
    %25 = arith.addf %22, %24 : vector<8x16xf32>
    %c34_i32 = arith.constant 34 : i32
    %26 = tpu.dynamic_rotate %9 by %c34_i32 dim 1 : vector<8x256xf32>, i32 -> vector<8x256xf32>
    %c0_12 = arith.constant 0 : index
    %c0_13 = arith.constant 0 : index
    %27 = vector.load %arg5[%c0_12, %c0_13] : memref<25x256xf32, #tpu.memory_space<vmem>>, vector<1x256xf32>
    %28 = vector.broadcast %27 : vector<1x256xf32> to vector<8x256xf32>
    %29 = arith.mulf %26, %28 : vector<8x256xf32>
    %c0_14 = arith.constant 0 : index
    %c0_15 = arith.constant 0 : index
    %30 = vector.load %arg9[%c0_14, %c0_15] : memref<200x256xf32, #tpu.memory_space<vmem>>, vector<8x256xf32>
    tpu.vector_store %arg9[%c0_14, %c0_15], %29 {strides = array<i32>} : memref<200x256xf32, #tpu.memory_space<vmem>>, vector<8x256xf32>,
    %c33_i32 = arith.constant 33 : i32
    %31 = tpu.dynamic_rotate %9 by %c33_i32 dim 1 : vector<8x256xf32>, i32 -> vector<8x256xf32>
    %c1 = arith.constant 1 : index
    %c0_16 = arith.constant 0 : index
    %32 = vector.load %arg5[%c1, %c0_16] : memref<25x256xf32, #tpu.memory_space<vmem>>, vector<1x256xf32>
    %33 = vector.broadcast %32 : vector<1x256xf32> to vector<8x256xf32>
    %34 = arith.mulf %31, %33 : vector<8x256xf32>
    %c8 = arith.constant 8 : index
    %c0_17 = arith.constant 0 : index
    %35 = vector.load %arg9[%c8, %c0_17] : memref<200x256xf32, #tpu.memory_space<vmem>>, vector<8x256xf32>
    tpu.vector_store %arg9[%c8, %c0_17], %34 {strides = array<i32>} : memref<200x256xf32, #tpu.memory_space<vmem>>, vector<8x256xf32>,
    %c32_i32 = arith.constant 32 : i32
    %36 = tpu.dynamic_rotate %9 by %c32_i32 dim 1 : vector<8x256xf32>, i32 -> vector<8x256xf32>
    %c2 = arith.constant 2 : index
    %c0_18 = arith.constant 0 : index
    %37 = vector.load %arg5[%c2, %c0_18] : memref<25x256xf32, #tpu.memory_space<vmem>>, vector<1x256xf32>
    %38 = vector.broadcast %37 : vector<1x256xf32> to vector<8x256xf32>
    %39 = arith.mulf %36, %38 : vector<8x256xf32>
    %c16 = arith.constant 16 : index
    %c0_19 = arith.constant 0 : index
    %40 = vector.load %arg9[%c16, %c0_19] : memref<200x256xf32, #tpu.memory_space<vmem>>, vector<8x256xf32>
    tpu.vector_store %arg9[%c16, %c0_19], %39 {strides = array<i32>} : memref<200x256xf32, #tpu.memory_space<vmem>>, vector<8x256xf32>,
    %c31_i32 = arith.constant 31 : i32
    %41 = tpu.dynamic_rotate %9 by %c31_i32 dim 1 : vector<8x256xf32>, i32 -> vector<8x256xf32>
    %c3 = arith.constant 3 : index
    %c0_20 = arith.constant 0 : index
    %42 = vector.load %arg5[%c3, %c0_20] : memref<25x256xf32, #tpu.memory_space<vmem>>, vector<1x256xf32>
    %43 = vector.broadcast %42 : vector<1x256xf32> to vector<8x256xf32>
    %44 = arith.mulf %41, %43 : vector<8x256xf32>
    %c24 = arith.constant 24 : index
    %c0_21 = arith.constant 0 : index
    %45 = vector.load %arg9[%c24, %c0_21] : memref<200x256xf32, #tpu.memory_space<vmem>>, vector<8x256xf32>
    tpu.vector_store %arg9[%c24, %c0_21], %44 {strides = array<i32>} : memref<200x256xf32, #tpu.memory_space<vmem>>, vector<8x256xf32>,
    %c30_i32 = arith.constant 30 : i32
    %46 = tpu.dynamic_rotate %9 by %c30_i32 dim 1 : vector<8x256xf32>, i32 -> vector<8x256xf32>
    %c4 = arith.constant 4 : index
    %c0_22 = arith.constant 0 : index
    %47 = vector.load %arg5[%c4, %c0_22] : memref<25x256xf32, #tpu.memory_space<vmem>>, vector<1x256xf32>
    %48 = vector.broadcast %47 : vector<1x256xf32> to vector<8x256xf32>
    %49 = arith.mulf %46, %48 : vector<8x256xf32>
    %c32 = arith.constant 32 : index
    %c0_23 = arith.constant 0 : index
    %50 = vector.load %arg9[%c32, %c0_23] : memref<200x256xf32, #tpu.memory_space<vmem>>, vector<8x256xf32>
    tpu.vector_store %arg9[%c32, %c0_23], %49 {strides = array<i32>} : memref<200x256xf32, #tpu.memory_space<vmem>>, vector<8x256xf32>,
    %c18_i32 = arith.constant 18 : i32
    %51 = tpu.dynamic_rotate %9 by %c18_i32 dim 1 : vector<8x256xf32>, i32 -> vector<8x256xf32>
    %c5 = arith.constant 5 : index
    %c0_24 = arith.constant 0 : index
    %52 = vector.load %arg5[%c5, %c0_24] : memref<25x256xf32, #tpu.memory_space<vmem>>, vector<1x256xf32>
    %53 = vector.broadcast %52 : vector<1x256xf32> to vector<8x256xf32>
    %54 = arith.mulf %51, %53 : vector<8x256xf32>
    %c40 = arith.constant 40 : index
    %c0_25 = arith.constant 0 : index
    %55 = vector.load %arg9[%c40, %c0_25] : memref<200x256xf32, #tpu.memory_space<vmem>>, vector<8x256xf32>
    tpu.vector_store %arg9[%c40, %c0_25], %54 {strides = array<i32>} : memref<200x256xf32, #tpu.memory_space<vmem>>, vector<8x256xf32>,
    %c17_i32 = arith.constant 17 : i32
    %56 = tpu.dynamic_rotate %9 by %c17_i32 dim 1 : vector<8x256xf32>, i32 -> vector<8x256xf32>
    %c6 = arith.constant 6 : index
    %c0_26 = arith.constant 0 : index
    %57 = vector.load %arg5[%c6, %c0_26] : memref<25x256xf32, #tpu.memory_space<vmem>>, vector<1x256xf32>
    %58 = vector.broadcast %57 : vector<1x256xf32> to vector<8x256xf32>
    %59 = arith.mulf %56, %58 : vector<8x256xf32>
    %c48 = arith.constant 48 : index
    %c0_27 = arith.constant 0 : index
    %60 = vector.load %arg9[%c48, %c0_27] : memref<200x256xf32, #tpu.memory_space<vmem>>, vector<8x256xf32>
    tpu.vector_store %arg9[%c48, %c0_27], %59 {strides = array<i32>} : memref<200x256xf32, #tpu.memory_space<vmem>>, vector<8x256xf32>,
    %c16_i32 = arith.constant 16 : i32
    %61 = tpu.dynamic_rotate %9 by %c16_i32 dim 1 : vector<8x256xf32>, i32 -> vector<8x256xf32>
    %c7 = arith.constant 7 : index
    %c0_28 = arith.constant 0 : index
    %62 = vector.load %arg5[%c7, %c0_28] : memref<25x256xf32, #tpu.memory_space<vmem>>, vector<1x256xf32>
    %63 = vector.broadcast %62 : vector<1x256xf32> to vector<8x256xf32>
    %64 = arith.mulf %61, %63 : vector<8x256xf32>
    %c56 = arith.constant 56 : index
    %c0_29 = arith.constant 0 : index
    %65 = vector.load %arg9[%c56, %c0_29] : memref<200x256xf32, #tpu.memory_space<vmem>>, vector<8x256xf32>
    tpu.vector_store %arg9[%c56, %c0_29], %64 {strides = array<i32>} : memref<200x256xf32, #tpu.memory_space<vmem>>, vector<8x256xf32>,
    %c15_i32 = arith.constant 15 : i32
    %66 = tpu.dynamic_rotate %9 by %c15_i32 dim 1 : vector<8x256xf32>, i32 -> vector<8x256xf32>
    %c8_30 = arith.constant 8 : index
    %c0_31 = arith.constant 0 : index
    %67 = vector.load %arg5[%c8_30, %c0_31] : memref<25x256xf32, #tpu.memory_space<vmem>>, vector<1x256xf32>
    %68 = vector.broadcast %67 : vector<1x256xf32> to vector<8x256xf32>
    %69 = arith.mulf %66, %68 : vector<8x256xf32>
    %c64 = arith.constant 64 : index
    %c0_32 = arith.constant 0 : index
    %70 = vector.load %arg9[%c64, %c0_32] : memref<200x256xf32, #tpu.memory_space<vmem>>, vector<8x256xf32>
    tpu.vector_store %arg9[%c64, %c0_32], %69 {strides = array<i32>} : memref<200x256xf32, #tpu.memory_space<vmem>>, vector<8x256xf32>,
    %c14_i32 = arith.constant 14 : i32
    %71 = tpu.dynamic_rotate %9 by %c14_i32 dim 1 : vector<8x256xf32>, i32 -> vector<8x256xf32>
    %c9 = arith.constant 9 : index
    %c0_33 = arith.constant 0 : index
    %72 = vector.load %arg5[%c9, %c0_33] : memref<25x256xf32, #tpu.memory_space<vmem>>, vector<1x256xf32>
    %73 = vector.broadcast %72 : vector<1x256xf32> to vector<8x256xf32>
    %74 = arith.mulf %71, %73 : vector<8x256xf32>
    %c72 = arith.constant 72 : index
    %c0_34 = arith.constant 0 : index
    %75 = vector.load %arg9[%c72, %c0_34] : memref<200x256xf32, #tpu.memory_space<vmem>>, vector<8x256xf32>
    tpu.vector_store %arg9[%c72, %c0_34], %74 {strides = array<i32>} : memref<200x256xf32, #tpu.memory_space<vmem>>, vector<8x256xf32>,
    %c2_i32 = arith.constant 2 : i32
    %76 = tpu.dynamic_rotate %9 by %c2_i32 dim 1 : vector<8x256xf32>, i32 -> vector<8x256xf32>
    %c10 = arith.constant 10 : index
    %c0_35 = arith.constant 0 : index
    %77 = vector.load %arg5[%c10, %c0_35] : memref<25x256xf32, #tpu.memory_space<vmem>>, vector<1x256xf32>
    %78 = vector.broadcast %77 : vector<1x256xf32> to vector<8x256xf32>
    %79 = arith.mulf %76, %78 : vector<8x256xf32>
    %c80 = arith.constant 80 : index
    %c0_36 = arith.constant 0 : index
    %80 = vector.load %arg9[%c80, %c0_36] : memref<200x256xf32, #tpu.memory_space<vmem>>, vector<8x256xf32>
    tpu.vector_store %arg9[%c80, %c0_36], %79 {strides = array<i32>} : memref<200x256xf32, #tpu.memory_space<vmem>>, vector<8x256xf32>,
    %c1_i32 = arith.constant 1 : i32
    %81 = tpu.dynamic_rotate %9 by %c1_i32 dim 1 : vector<8x256xf32>, i32 -> vector<8x256xf32>
    %c11 = arith.constant 11 : index
    %c0_37 = arith.constant 0 : index
    %82 = vector.load %arg5[%c11, %c0_37] : memref<25x256xf32, #tpu.memory_space<vmem>>, vector<1x256xf32>
    %83 = vector.broadcast %82 : vector<1x256xf32> to vector<8x256xf32>
    %84 = arith.mulf %81, %83 : vector<8x256xf32>
    %c88 = arith.constant 88 : index
    %c0_38 = arith.constant 0 : index
    %85 = vector.load %arg9[%c88, %c0_38] : memref<200x256xf32, #tpu.memory_space<vmem>>, vector<8x256xf32>
    tpu.vector_store %arg9[%c88, %c0_38], %84 {strides = array<i32>} : memref<200x256xf32, #tpu.memory_space<vmem>>, vector<8x256xf32>,
    %c12 = arith.constant 12 : index
    %c0_39 = arith.constant 0 : index
    %86 = vector.load %arg5[%c12, %c0_39] : memref<25x256xf32, #tpu.memory_space<vmem>>, vector<1x256xf32>
    %87 = vector.broadcast %86 : vector<1x256xf32> to vector<8x256xf32>
    %88 = arith.mulf %9, %87 : vector<8x256xf32>
    %c96 = arith.constant 96 : index
    %c0_40 = arith.constant 0 : index
    %89 = vector.load %arg9[%c96, %c0_40] : memref<200x256xf32, #tpu.memory_space<vmem>>, vector<8x256xf32>
    tpu.vector_store %arg9[%c96, %c0_40], %88 {strides = array<i32>} : memref<200x256xf32, #tpu.memory_space<vmem>>, vector<8x256xf32>,
    %c255_i32 = arith.constant 255 : i32
    %90 = tpu.dynamic_rotate %9 by %c255_i32 dim 1 : vector<8x256xf32>, i32 -> vector<8x256xf32>
    %c13 = arith.constant 13 : index
    %c0_41 = arith.constant 0 : index
    %91 = vector.load %arg5[%c13, %c0_41] : memref<25x256xf32, #tpu.memory_space<vmem>>, vector<1x256xf32>
    %92 = vector.broadcast %91 : vector<1x256xf32> to vector<8x256xf32>
    %93 = arith.mulf %90, %92 : vector<8x256xf32>
    %c104 = arith.constant 104 : index
    %c0_42 = arith.constant 0 : index
    %94 = vector.load %arg9[%c104, %c0_42] : memref<200x256xf32, #tpu.memory_space<vmem>>, vector<8x256xf32>
    tpu.vector_store %arg9[%c104, %c0_42], %93 {strides = array<i32>} : memref<200x256xf32, #tpu.memory_space<vmem>>, vector<8x256xf32>,
    %c254_i32 = arith.constant 254 : i32
    %95 = tpu.dynamic_rotate %9 by %c254_i32 dim 1 : vector<8x256xf32>, i32 -> vector<8x256xf32>
    %c14 = arith.constant 14 : index
    %c0_43 = arith.constant 0 : index
    %96 = vector.load %arg5[%c14, %c0_43] : memref<25x256xf32, #tpu.memory_space<vmem>>, vector<1x256xf32>
    %97 = vector.broadcast %96 : vector<1x256xf32> to vector<8x256xf32>
    %98 = arith.mulf %95, %97 : vector<8x256xf32>
    %c112 = arith.constant 112 : index
    %c0_44 = arith.constant 0 : index
    %99 = vector.load %arg9[%c112, %c0_44] : memref<200x256xf32, #tpu.memory_space<vmem>>, vector<8x256xf32>
    tpu.vector_store %arg9[%c112, %c0_44], %98 {strides = array<i32>} : memref<200x256xf32, #tpu.memory_space<vmem>>, vector<8x256xf32>,
    %c242_i32 = arith.constant 242 : i32
    %100 = tpu.dynamic_rotate %9 by %c242_i32 dim 1 : vector<8x256xf32>, i32 -> vector<8x256xf32>
    %c15 = arith.constant 15 : index
    %c0_45 = arith.constant 0 : index
    %101 = vector.load %arg5[%c15, %c0_45] : memref<25x256xf32, #tpu.memory_space<vmem>>, vector<1x256xf32>
    %102 = vector.broadcast %101 : vector<1x256xf32> to vector<8x256xf32>
    %103 = arith.mulf %100, %102 : vector<8x256xf32>
    %c120 = arith.constant 120 : index
    %c0_46 = arith.constant 0 : index
    %104 = vector.load %arg9[%c120, %c0_46] : memref<200x256xf32, #tpu.memory_space<vmem>>, vector<8x256xf32>
    tpu.vector_store %arg9[%c120, %c0_46], %103 {strides = array<i32>} : memref<200x256xf32, #tpu.memory_space<vmem>>, vector<8x256xf32>,
    %c241_i32 = arith.constant 241 : i32
    %105 = tpu.dynamic_rotate %9 by %c241_i32 dim 1 : vector<8x256xf32>, i32 -> vector<8x256xf32>
    %c16_47 = arith.constant 16 : index
    %c0_48 = arith.constant 0 : index
    %106 = vector.load %arg5[%c16_47, %c0_48] : memref<25x256xf32, #tpu.memory_space<vmem>>, vector<1x256xf32>
    %107 = vector.broadcast %106 : vector<1x256xf32> to vector<8x256xf32>
    %108 = arith.mulf %105, %107 : vector<8x256xf32>
    %c128 = arith.constant 128 : index
    %c0_49 = arith.constant 0 : index
    %109 = vector.load %arg9[%c128, %c0_49] : memref<200x256xf32, #tpu.memory_space<vmem>>, vector<8x256xf32>
    tpu.vector_store %arg9[%c128, %c0_49], %108 {strides = array<i32>} : memref<200x256xf32, #tpu.memory_space<vmem>>, vector<8x256xf32>,
    %c240_i32 = arith.constant 240 : i32
    %110 = tpu.dynamic_rotate %9 by %c240_i32 dim 1 : vector<8x256xf32>, i32 -> vector<8x256xf32>
    %c17 = arith.constant 17 : index
    %c0_50 = arith.constant 0 : index
    %111 = vector.load %arg5[%c17, %c0_50] : memref<25x256xf32, #tpu.memory_space<vmem>>, vector<1x256xf32>
    %112 = vector.broadcast %111 : vector<1x256xf32> to vector<8x256xf32>
    %113 = arith.mulf %110, %112 : vector<8x256xf32>
    %c136 = arith.constant 136 : index
    %c0_51 = arith.constant 0 : index
    %114 = vector.load %arg9[%c136, %c0_51] : memref<200x256xf32, #tpu.memory_space<vmem>>, vector<8x256xf32>
    tpu.vector_store %arg9[%c136, %c0_51], %113 {strides = array<i32>} : memref<200x256xf32, #tpu.memory_space<vmem>>, vector<8x256xf32>,
    %c239_i32 = arith.constant 239 : i32
    %115 = tpu.dynamic_rotate %9 by %c239_i32 dim 1 : vector<8x256xf32>, i32 -> vector<8x256xf32>
    %c18 = arith.constant 18 : index
    %c0_52 = arith.constant 0 : index
    %116 = vector.load %arg5[%c18, %c0_52] : memref<25x256xf32, #tpu.memory_space<vmem>>, vector<1x256xf32>
    %117 = vector.broadcast %116 : vector<1x256xf32> to vector<8x256xf32>
    %118 = arith.mulf %115, %117 : vector<8x256xf32>
    %c144 = arith.constant 144 : index
    %c0_53 = arith.constant 0 : index
    %119 = vector.load %arg9[%c144, %c0_53] : memref<200x256xf32, #tpu.memory_space<vmem>>, vector<8x256xf32>
    tpu.vector_store %arg9[%c144, %c0_53], %118 {strides = array<i32>} : memref<200x256xf32, #tpu.memory_space<vmem>>, vector<8x256xf32>,
    %c238_i32 = arith.constant 238 : i32
    %120 = tpu.dynamic_rotate %9 by %c238_i32 dim 1 : vector<8x256xf32>, i32 -> vector<8x256xf32>
    %c19 = arith.constant 19 : index
    %c0_54 = arith.constant 0 : index
    %121 = vector.load %arg5[%c19, %c0_54] : memref<25x256xf32, #tpu.memory_space<vmem>>, vector<1x256xf32>
    %122 = vector.broadcast %121 : vector<1x256xf32> to vector<8x256xf32>
    %123 = arith.mulf %120, %122 : vector<8x256xf32>
    %c152 = arith.constant 152 : index
    %c0_55 = arith.constant 0 : index
    %124 = vector.load %arg9[%c152, %c0_55] : memref<200x256xf32, #tpu.memory_space<vmem>>, vector<8x256xf32>
    tpu.vector_store %arg9[%c152, %c0_55], %123 {strides = array<i32>} : memref<200x256xf32, #tpu.memory_space<vmem>>, vector<8x256xf32>,
    %c226_i32 = arith.constant 226 : i32
    %125 = tpu.dynamic_rotate %9 by %c226_i32 dim 1 : vector<8x256xf32>, i32 -> vector<8x256xf32>
    %c20 = arith.constant 20 : index
    %c0_56 = arith.constant 0 : index
    %126 = vector.load %arg5[%c20, %c0_56] : memref<25x256xf32, #tpu.memory_space<vmem>>, vector<1x256xf32>
    %127 = vector.broadcast %126 : vector<1x256xf32> to vector<8x256xf32>
    %128 = arith.mulf %125, %127 : vector<8x256xf32>
    %c160 = arith.constant 160 : index
    %c0_57 = arith.constant 0 : index
    %129 = vector.load %arg9[%c160, %c0_57] : memref<200x256xf32, #tpu.memory_space<vmem>>, vector<8x256xf32>
    tpu.vector_store %arg9[%c160, %c0_57], %128 {strides = array<i32>} : memref<200x256xf32, #tpu.memory_space<vmem>>, vector<8x256xf32>,
    %c225_i32 = arith.constant 225 : i32
    %130 = tpu.dynamic_rotate %9 by %c225_i32 dim 1 : vector<8x256xf32>, i32 -> vector<8x256xf32>
    %c21 = arith.constant 21 : index
    %c0_58 = arith.constant 0 : index
    %131 = vector.load %arg5[%c21, %c0_58] : memref<25x256xf32, #tpu.memory_space<vmem>>, vector<1x256xf32>
    %132 = vector.broadcast %131 : vector<1x256xf32> to vector<8x256xf32>
    %133 = arith.mulf %130, %132 : vector<8x256xf32>
    %c168 = arith.constant 168 : index
    %c0_59 = arith.constant 0 : index
    %134 = vector.load %arg9[%c168, %c0_59] : memref<200x256xf32, #tpu.memory_space<vmem>>, vector<8x256xf32>
    tpu.vector_store %arg9[%c168, %c0_59], %133 {strides = array<i32>} : memref<200x256xf32, #tpu.memory_space<vmem>>, vector<8x256xf32>,
    %c224_i32 = arith.constant 224 : i32
    %135 = tpu.dynamic_rotate %9 by %c224_i32 dim 1 : vector<8x256xf32>, i32 -> vector<8x256xf32>
    %c22 = arith.constant 22 : index
    %c0_60 = arith.constant 0 : index
    %136 = vector.load %arg5[%c22, %c0_60] : memref<25x256xf32, #tpu.memory_space<vmem>>, vector<1x256xf32>
    %137 = vector.broadcast %136 : vector<1x256xf32> to vector<8x256xf32>
    %138 = arith.mulf %135, %137 : vector<8x256xf32>
    %c176 = arith.constant 176 : index
    %c0_61 = arith.constant 0 : index
    %139 = vector.load %arg9[%c176, %c0_61] : memref<200x256xf32, #tpu.memory_space<vmem>>, vector<8x256xf32>
    tpu.vector_store %arg9[%c176, %c0_61], %138 {strides = array<i32>} : memref<200x256xf32, #tpu.memory_space<vmem>>, vector<8x256xf32>,
    %c223_i32 = arith.constant 223 : i32
    %140 = tpu.dynamic_rotate %9 by %c223_i32 dim 1 : vector<8x256xf32>, i32 -> vector<8x256xf32>
    %c23 = arith.constant 23 : index
    %c0_62 = arith.constant 0 : index
    %141 = vector.load %arg5[%c23, %c0_62] : memref<25x256xf32, #tpu.memory_space<vmem>>, vector<1x256xf32>
    %142 = vector.broadcast %141 : vector<1x256xf32> to vector<8x256xf32>
    %143 = arith.mulf %140, %142 : vector<8x256xf32>
    %c184 = arith.constant 184 : index
    %c0_63 = arith.constant 0 : index
    %144 = vector.load %arg9[%c184, %c0_63] : memref<200x256xf32, #tpu.memory_space<vmem>>, vector<8x256xf32>
    tpu.vector_store %arg9[%c184, %c0_63], %143 {strides = array<i32>} : memref<200x256xf32, #tpu.memory_space<vmem>>, vector<8x256xf32>,
    %c222_i32 = arith.constant 222 : i32
    %145 = tpu.dynamic_rotate %9 by %c222_i32 dim 1 : vector<8x256xf32>, i32 -> vector<8x256xf32>
    %c24_64 = arith.constant 24 : index
    %c0_65 = arith.constant 0 : index
    %146 = vector.load %arg5[%c24_64, %c0_65] : memref<25x256xf32, #tpu.memory_space<vmem>>, vector<1x256xf32>
    %147 = vector.broadcast %146 : vector<1x256xf32> to vector<8x256xf32>
    %148 = arith.mulf %145, %147 : vector<8x256xf32>
    %c192 = arith.constant 192 : index
    %c0_66 = arith.constant 0 : index
    %149 = vector.load %arg9[%c192, %c0_66] : memref<200x256xf32, #tpu.memory_space<vmem>>, vector<8x256xf32>
    tpu.vector_store %arg9[%c192, %c0_66], %148 {strides = array<i32>} : memref<200x256xf32, #tpu.memory_space<vmem>>, vector<8x256xf32>,
    %c0_67 = arith.constant 0 : index
    %c0_68 = arith.constant 0 : index
    %150 = vector.load %arg4[%c0_67, %c0_68] : memref<128x200xf32, #tpu.memory_space<vmem>>, vector<128x200xf32>
    %c0_69 = arith.constant 0 : index
    %c0_70 = arith.constant 0 : index
    %151 = vector.load %arg9[%c0_69, %c0_70] : memref<200x256xf32, #tpu.memory_space<vmem>>, vector<200x256xf32>
    %cst_71 = arith.constant dense<0.000000e+00> : vector<128x256xf32>
    %152 = tpu.matmul %150, %151, %cst_71 {dimension_numbers = #tpu.dot_dimension_numbers<[1], [0], [0], [1], [0, 0, 1, 1], [], []>} : vector<128x200xf32>, vector<200x256xf32>, vector<128x256xf32> -> vector<128x256xf32>
    %153 = tpu.concatenate %25, %25, %25, %25 in 1 : vector<8x16xf32>, vector<8x16xf32>, vector<8x16xf32>, vector<8x16xf32> -> vector<8x64xf32>
    %154 = tpu.concatenate %153, %153, %153, %153 in 0 : vector<8x64xf32>, vector<8x64xf32>, vector<8x64xf32>, vector<8x64xf32> -> vector<32x64xf32>
    %c0_72 = arith.constant 0 : index
    %c0_73 = arith.constant 0 : index
    %155 = vector.load %arg6[%c0_72, %c0_73] : memref<32x64xf32, #tpu.memory_space<vmem>>, vector<32x64xf32>
    %156 = arith.mulf %154, %155 : vector<32x64xf32>
    %cst_74 = arith.constant dense<0.000000e+00> : vector<32x256xf32>
    %157 = tpu.matmul %156, %7, %cst_74 {dimension_numbers = #tpu.dot_dimension_numbers<[1], [0], [0], [1], [0, 0, 1, 1], [], []>} : vector<32x64xf32>, vector<64x256xf32>, vector<32x256xf32> -> vector<32x256xf32>
    %158 = vector.extract_strided_slice %7 {offsets = [0, 0], sizes = [16, 256], strides = [1, 1]} : vector<64x256xf32> to vector<16x256xf32>
    %159 = vector.extract_strided_slice %152 {offsets = [0, 0], sizes = [16, 256], strides = [1, 1]} : vector<128x256xf32> to vector<16x256xf32>
    %160 = arith.mulf %158, %159 : vector<16x256xf32>
    %cst_75 = arith.constant dense<0.000000e+00> : vector<256xf32>
    %161 = vector.multi_reduction <add>, %160, %cst_75 [0] : vector<16x256xf32> to vector<256xf32>
    %162 = vector.shape_cast %161 : vector<256xf32> to vector<1x256xf32>
    %163 = vector.extract_strided_slice %152 {offsets = [16, 0], sizes = [16, 256], strides = [1, 1]} : vector<128x256xf32> to vector<16x256xf32>
    %164 = arith.mulf %158, %163 : vector<16x256xf32>
    %cst_76 = arith.constant dense<0.000000e+00> : vector<256xf32>
    %165 = vector.multi_reduction <add>, %164, %cst_76 [0] : vector<16x256xf32> to vector<256xf32>
    %166 = vector.shape_cast %165 : vector<256xf32> to vector<1x256xf32>
    %167 = vector.extract_strided_slice %152 {offsets = [32, 0], sizes = [16, 256], strides = [1, 1]} : vector<128x256xf32> to vector<16x256xf32>
    %168 = arith.mulf %158, %167 : vector<16x256xf32>
    %cst_77 = arith.constant dense<0.000000e+00> : vector<256xf32>
    %169 = vector.multi_reduction <add>, %168, %cst_77 [0] : vector<16x256xf32> to vector<256xf32>
    %170 = vector.shape_cast %169 : vector<256xf32> to vector<1x256xf32>
    %171 = vector.extract_strided_slice %152 {offsets = [48, 0], sizes = [16, 256], strides = [1, 1]} : vector<128x256xf32> to vector<16x256xf32>
    %172 = arith.mulf %158, %171 : vector<16x256xf32>
    %cst_78 = arith.constant dense<0.000000e+00> : vector<256xf32>
    %173 = vector.multi_reduction <add>, %172, %cst_78 [0] : vector<16x256xf32> to vector<256xf32>
    %174 = vector.shape_cast %173 : vector<256xf32> to vector<1x256xf32>
    %175 = vector.extract_strided_slice %152 {offsets = [64, 0], sizes = [16, 256], strides = [1, 1]} : vector<128x256xf32> to vector<16x256xf32>
    %176 = arith.mulf %158, %175 : vector<16x256xf32>
    %cst_79 = arith.constant dense<0.000000e+00> : vector<256xf32>
    %177 = vector.multi_reduction <add>, %176, %cst_79 [0] : vector<16x256xf32> to vector<256xf32>
    %178 = vector.shape_cast %177 : vector<256xf32> to vector<1x256xf32>
    %179 = vector.extract_strided_slice %152 {offsets = [80, 0], sizes = [16, 256], strides = [1, 1]} : vector<128x256xf32> to vector<16x256xf32>
    %180 = arith.mulf %158, %179 : vector<16x256xf32>
    %cst_80 = arith.constant dense<0.000000e+00> : vector<256xf32>
    %181 = vector.multi_reduction <add>, %180, %cst_80 [0] : vector<16x256xf32> to vector<256xf32>
    %182 = vector.shape_cast %181 : vector<256xf32> to vector<1x256xf32>
    %183 = vector.extract_strided_slice %152 {offsets = [96, 0], sizes = [16, 256], strides = [1, 1]} : vector<128x256xf32> to vector<16x256xf32>
    %184 = arith.mulf %158, %183 : vector<16x256xf32>
    %cst_81 = arith.constant dense<0.000000e+00> : vector<256xf32>
    %185 = vector.multi_reduction <add>, %184, %cst_81 [0] : vector<16x256xf32> to vector<256xf32>
    %186 = vector.shape_cast %185 : vector<256xf32> to vector<1x256xf32>
    %187 = vector.extract_strided_slice %152 {offsets = [112, 0], sizes = [16, 256], strides = [1, 1]} : vector<128x256xf32> to vector<16x256xf32>
    %188 = arith.mulf %158, %187 : vector<16x256xf32>
    %cst_82 = arith.constant dense<0.000000e+00> : vector<256xf32>
    %189 = vector.multi_reduction <add>, %188, %cst_82 [0] : vector<16x256xf32> to vector<256xf32>
    %190 = vector.shape_cast %189 : vector<256xf32> to vector<1x256xf32>
    %191 = vector.extract_strided_slice %157 {offsets = [0, 0], sizes = [8, 256], strides = [1, 1]} : vector<32x256xf32> to vector<8x256xf32>
    %192 = tpu.concatenate %162, %166, %170, %174, %178, %182, %186, %190 in 0 : vector<1x256xf32>, vector<1x256xf32>, vector<1x256xf32>, vector<1x256xf32>, vector<1x256xf32>, vector<1x256xf32>, vector<1x256xf32>, vector<1x256xf32> -> vector<8x256xf32>
    %193 = arith.addf %191, %192 : vector<8x256xf32>
    %c0_83 = arith.constant 0 : index
    %c0_84 = arith.constant 0 : index
    %c0_85 = arith.constant 0 : index
    %194 = vector.load %arg8[%c0_83, %c0_84, %c0_85] : memref<1x32x256xf32, #tpu.memory_space<vmem>>, vector<1x8x256xf32>
    %195 = vector.shape_cast %194 : vector<1x8x256xf32> to vector<8x256xf32>
    %196 = vector.shape_cast %193 : vector<8x256xf32> to vector<1x8x256xf32>
    tpu.vector_store %arg8[%c0_83, %c0_84, %c0_85], %196 {strides = array<i32>} : memref<1x32x256xf32, #tpu.memory_space<vmem>>, vector<1x8x256xf32>,
    %197 = vector.extract_strided_slice %7 {offsets = [16, 0], sizes = [16, 256], strides = [1, 1]} : vector<64x256xf32> to vector<16x256xf32>
    %198 = vector.extract_strided_slice %152 {offsets = [0, 0], sizes = [16, 256], strides = [1, 1]} : vector<128x256xf32> to vector<16x256xf32>
    %199 = arith.mulf %197, %198 : vector<16x256xf32>
    %cst_86 = arith.constant dense<0.000000e+00> : vector<256xf32>
    %200 = vector.multi_reduction <add>, %199, %cst_86 [0] : vector<16x256xf32> to vector<256xf32>
    %201 = vector.shape_cast %200 : vector<256xf32> to vector<1x256xf32>
    %202 = vector.extract_strided_slice %152 {offsets = [16, 0], sizes = [16, 256], strides = [1, 1]} : vector<128x256xf32> to vector<16x256xf32>
    %203 = arith.mulf %197, %202 : vector<16x256xf32>
    %cst_87 = arith.constant dense<0.000000e+00> : vector<256xf32>
    %204 = vector.multi_reduction <add>, %203, %cst_87 [0] : vector<16x256xf32> to vector<256xf32>
    %205 = vector.shape_cast %204 : vector<256xf32> to vector<1x256xf32>
    %206 = vector.extract_strided_slice %152 {offsets = [32, 0], sizes = [16, 256], strides = [1, 1]} : vector<128x256xf32> to vector<16x256xf32>
    %207 = arith.mulf %197, %206 : vector<16x256xf32>
    %cst_88 = arith.constant dense<0.000000e+00> : vector<256xf32>
    %208 = vector.multi_reduction <add>, %207, %cst_88 [0] : vector<16x256xf32> to vector<256xf32>
    %209 = vector.shape_cast %208 : vector<256xf32> to vector<1x256xf32>
    %210 = vector.extract_strided_slice %152 {offsets = [48, 0], sizes = [16, 256], strides = [1, 1]} : vector<128x256xf32> to vector<16x256xf32>
    %211 = arith.mulf %197, %210 : vector<16x256xf32>
    %cst_89 = arith.constant dense<0.000000e+00> : vector<256xf32>
    %212 = vector.multi_reduction <add>, %211, %cst_89 [0] : vector<16x256xf32> to vector<256xf32>
    %213 = vector.shape_cast %212 : vector<256xf32> to vector<1x256xf32>
    %214 = vector.extract_strided_slice %152 {offsets = [64, 0], sizes = [16, 256], strides = [1, 1]} : vector<128x256xf32> to vector<16x256xf32>
    %215 = arith.mulf %197, %214 : vector<16x256xf32>
    %cst_90 = arith.constant dense<0.000000e+00> : vector<256xf32>
    %216 = vector.multi_reduction <add>, %215, %cst_90 [0] : vector<16x256xf32> to vector<256xf32>
    %217 = vector.shape_cast %216 : vector<256xf32> to vector<1x256xf32>
    %218 = vector.extract_strided_slice %152 {offsets = [80, 0], sizes = [16, 256], strides = [1, 1]} : vector<128x256xf32> to vector<16x256xf32>
    %219 = arith.mulf %197, %218 : vector<16x256xf32>
    %cst_91 = arith.constant dense<0.000000e+00> : vector<256xf32>
    %220 = vector.multi_reduction <add>, %219, %cst_91 [0] : vector<16x256xf32> to vector<256xf32>
    %221 = vector.shape_cast %220 : vector<256xf32> to vector<1x256xf32>
    %222 = vector.extract_strided_slice %152 {offsets = [96, 0], sizes = [16, 256], strides = [1, 1]} : vector<128x256xf32> to vector<16x256xf32>
    %223 = arith.mulf %197, %222 : vector<16x256xf32>
    %cst_92 = arith.constant dense<0.000000e+00> : vector<256xf32>
    %224 = vector.multi_reduction <add>, %223, %cst_92 [0] : vector<16x256xf32> to vector<256xf32>
    %225 = vector.shape_cast %224 : vector<256xf32> to vector<1x256xf32>
    %226 = vector.extract_strided_slice %152 {offsets = [112, 0], sizes = [16, 256], strides = [1, 1]} : vector<128x256xf32> to vector<16x256xf32>
    %227 = arith.mulf %197, %226 : vector<16x256xf32>
    %cst_93 = arith.constant dense<0.000000e+00> : vector<256xf32>
    %228 = vector.multi_reduction <add>, %227, %cst_93 [0] : vector<16x256xf32> to vector<256xf32>
    %229 = vector.shape_cast %228 : vector<256xf32> to vector<1x256xf32>
    %230 = vector.extract_strided_slice %157 {offsets = [8, 0], sizes = [8, 256], strides = [1, 1]} : vector<32x256xf32> to vector<8x256xf32>
    %231 = tpu.concatenate %201, %205, %209, %213, %217, %221, %225, %229 in 0 : vector<1x256xf32>, vector<1x256xf32>, vector<1x256xf32>, vector<1x256xf32>, vector<1x256xf32>, vector<1x256xf32>, vector<1x256xf32>, vector<1x256xf32> -> vector<8x256xf32>
    %232 = arith.addf %230, %231 : vector<8x256xf32>
    %c0_94 = arith.constant 0 : index
    %c8_95 = arith.constant 8 : index
    %c0_96 = arith.constant 0 : index
    %233 = vector.load %arg8[%c0_94, %c8_95, %c0_96] : memref<1x32x256xf32, #tpu.memory_space<vmem>>, vector<1x8x256xf32>
    %234 = vector.shape_cast %233 : vector<1x8x256xf32> to vector<8x256xf32>
    %235 = vector.shape_cast %232 : vector<8x256xf32> to vector<1x8x256xf32>
    tpu.vector_store %arg8[%c0_94, %c8_95, %c0_96], %235 {strides = array<i32>} : memref<1x32x256xf32, #tpu.memory_space<vmem>>, vector<1x8x256xf32>,
    %236 = vector.extract_strided_slice %7 {offsets = [32, 0], sizes = [16, 256], strides = [1, 1]} : vector<64x256xf32> to vector<16x256xf32>
    %237 = vector.extract_strided_slice %152 {offsets = [0, 0], sizes = [16, 256], strides = [1, 1]} : vector<128x256xf32> to vector<16x256xf32>
    %238 = arith.mulf %236, %237 : vector<16x256xf32>
    %cst_97 = arith.constant dense<0.000000e+00> : vector<256xf32>
    %239 = vector.multi_reduction <add>, %238, %cst_97 [0] : vector<16x256xf32> to vector<256xf32>
    %240 = vector.shape_cast %239 : vector<256xf32> to vector<1x256xf32>
    %241 = vector.extract_strided_slice %152 {offsets = [16, 0], sizes = [16, 256], strides = [1, 1]} : vector<128x256xf32> to vector<16x256xf32>
    %242 = arith.mulf %236, %241 : vector<16x256xf32>
    %cst_98 = arith.constant dense<0.000000e+00> : vector<256xf32>
    %243 = vector.multi_reduction <add>, %242, %cst_98 [0] : vector<16x256xf32> to vector<256xf32>
    %244 = vector.shape_cast %243 : vector<256xf32> to vector<1x256xf32>
    %245 = vector.extract_strided_slice %152 {offsets = [32, 0], sizes = [16, 256], strides = [1, 1]} : vector<128x256xf32> to vector<16x256xf32>
    %246 = arith.mulf %236, %245 : vector<16x256xf32>
    %cst_99 = arith.constant dense<0.000000e+00> : vector<256xf32>
    %247 = vector.multi_reduction <add>, %246, %cst_99 [0] : vector<16x256xf32> to vector<256xf32>
    %248 = vector.shape_cast %247 : vector<256xf32> to vector<1x256xf32>
    %249 = vector.extract_strided_slice %152 {offsets = [48, 0], sizes = [16, 256], strides = [1, 1]} : vector<128x256xf32> to vector<16x256xf32>
    %250 = arith.mulf %236, %249 : vector<16x256xf32>
    %cst_100 = arith.constant dense<0.000000e+00> : vector<256xf32>
    %251 = vector.multi_reduction <add>, %250, %cst_100 [0] : vector<16x256xf32> to vector<256xf32>
    %252 = vector.shape_cast %251 : vector<256xf32> to vector<1x256xf32>
    %253 = vector.extract_strided_slice %152 {offsets = [64, 0], sizes = [16, 256], strides = [1, 1]} : vector<128x256xf32> to vector<16x256xf32>
    %254 = arith.mulf %236, %253 : vector<16x256xf32>
    %cst_101 = arith.constant dense<0.000000e+00> : vector<256xf32>
    %255 = vector.multi_reduction <add>, %254, %cst_101 [0] : vector<16x256xf32> to vector<256xf32>
    %256 = vector.shape_cast %255 : vector<256xf32> to vector<1x256xf32>
    %257 = vector.extract_strided_slice %152 {offsets = [80, 0], sizes = [16, 256], strides = [1, 1]} : vector<128x256xf32> to vector<16x256xf32>
    %258 = arith.mulf %236, %257 : vector<16x256xf32>
    %cst_102 = arith.constant dense<0.000000e+00> : vector<256xf32>
    %259 = vector.multi_reduction <add>, %258, %cst_102 [0] : vector<16x256xf32> to vector<256xf32>
    %260 = vector.shape_cast %259 : vector<256xf32> to vector<1x256xf32>
    %261 = vector.extract_strided_slice %152 {offsets = [96, 0], sizes = [16, 256], strides = [1, 1]} : vector<128x256xf32> to vector<16x256xf32>
    %262 = arith.mulf %236, %261 : vector<16x256xf32>
    %cst_103 = arith.constant dense<0.000000e+00> : vector<256xf32>
    %263 = vector.multi_reduction <add>, %262, %cst_103 [0] : vector<16x256xf32> to vector<256xf32>
    %264 = vector.shape_cast %263 : vector<256xf32> to vector<1x256xf32>
    %265 = vector.extract_strided_slice %152 {offsets = [112, 0], sizes = [16, 256], strides = [1, 1]} : vector<128x256xf32> to vector<16x256xf32>
    %266 = arith.mulf %236, %265 : vector<16x256xf32>
    %cst_104 = arith.constant dense<0.000000e+00> : vector<256xf32>
    %267 = vector.multi_reduction <add>, %266, %cst_104 [0] : vector<16x256xf32> to vector<256xf32>
    %268 = vector.shape_cast %267 : vector<256xf32> to vector<1x256xf32>
    %269 = vector.extract_strided_slice %157 {offsets = [16, 0], sizes = [8, 256], strides = [1, 1]} : vector<32x256xf32> to vector<8x256xf32>
    %270 = tpu.concatenate %240, %244, %248, %252, %256, %260, %264, %268 in 0 : vector<1x256xf32>, vector<1x256xf32>, vector<1x256xf32>, vector<1x256xf32>, vector<1x256xf32>, vector<1x256xf32>, vector<1x256xf32>, vector<1x256xf32> -> vector<8x256xf32>
    %271 = arith.addf %269, %270 : vector<8x256xf32>
    %c0_105 = arith.constant 0 : index
    %c16_106 = arith.constant 16 : index
    %c0_107 = arith.constant 0 : index
    %272 = vector.load %arg8[%c0_105, %c16_106, %c0_107] : memref<1x32x256xf32, #tpu.memory_space<vmem>>, vector<1x8x256xf32>
    %273 = vector.shape_cast %272 : vector<1x8x256xf32> to vector<8x256xf32>
    %274 = vector.shape_cast %271 : vector<8x256xf32> to vector<1x8x256xf32>
    tpu.vector_store %arg8[%c0_105, %c16_106, %c0_107], %274 {strides = array<i32>} : memref<1x32x256xf32, #tpu.memory_space<vmem>>, vector<1x8x256xf32>,
    %275 = vector.extract_strided_slice %7 {offsets = [48, 0], sizes = [16, 256], strides = [1, 1]} : vector<64x256xf32> to vector<16x256xf32>
    %276 = vector.extract_strided_slice %152 {offsets = [0, 0], sizes = [16, 256], strides = [1, 1]} : vector<128x256xf32> to vector<16x256xf32>
    %277 = arith.mulf %275, %276 : vector<16x256xf32>
    %cst_108 = arith.constant dense<0.000000e+00> : vector<256xf32>
    %278 = vector.multi_reduction <add>, %277, %cst_108 [0] : vector<16x256xf32> to vector<256xf32>
    %279 = vector.shape_cast %278 : vector<256xf32> to vector<1x256xf32>
    %280 = vector.extract_strided_slice %152 {offsets = [16, 0], sizes = [16, 256], strides = [1, 1]} : vector<128x256xf32> to vector<16x256xf32>
    %281 = arith.mulf %275, %280 : vector<16x256xf32>
    %cst_109 = arith.constant dense<0.000000e+00> : vector<256xf32>
    %282 = vector.multi_reduction <add>, %281, %cst_109 [0] : vector<16x256xf32> to vector<256xf32>
    %283 = vector.shape_cast %282 : vector<256xf32> to vector<1x256xf32>
    %284 = vector.extract_strided_slice %152 {offsets = [32, 0], sizes = [16, 256], strides = [1, 1]} : vector<128x256xf32> to vector<16x256xf32>
    %285 = arith.mulf %275, %284 : vector<16x256xf32>
    %cst_110 = arith.constant dense<0.000000e+00> : vector<256xf32>
    %286 = vector.multi_reduction <add>, %285, %cst_110 [0] : vector<16x256xf32> to vector<256xf32>
    %287 = vector.shape_cast %286 : vector<256xf32> to vector<1x256xf32>
    %288 = vector.extract_strided_slice %152 {offsets = [48, 0], sizes = [16, 256], strides = [1, 1]} : vector<128x256xf32> to vector<16x256xf32>
    %289 = arith.mulf %275, %288 : vector<16x256xf32>
    %cst_111 = arith.constant dense<0.000000e+00> : vector<256xf32>
    %290 = vector.multi_reduction <add>, %289, %cst_111 [0] : vector<16x256xf32> to vector<256xf32>
    %291 = vector.shape_cast %290 : vector<256xf32> to vector<1x256xf32>
    %292 = vector.extract_strided_slice %152 {offsets = [64, 0], sizes = [16, 256], strides = [1, 1]} : vector<128x256xf32> to vector<16x256xf32>
    %293 = arith.mulf %275, %292 : vector<16x256xf32>
    %cst_112 = arith.constant dense<0.000000e+00> : vector<256xf32>
    %294 = vector.multi_reduction <add>, %293, %cst_112 [0] : vector<16x256xf32> to vector<256xf32>
    %295 = vector.shape_cast %294 : vector<256xf32> to vector<1x256xf32>
    %296 = vector.extract_strided_slice %152 {offsets = [80, 0], sizes = [16, 256], strides = [1, 1]} : vector<128x256xf32> to vector<16x256xf32>
    %297 = arith.mulf %275, %296 : vector<16x256xf32>
    %cst_113 = arith.constant dense<0.000000e+00> : vector<256xf32>
    %298 = vector.multi_reduction <add>, %297, %cst_113 [0] : vector<16x256xf32> to vector<256xf32>
    %299 = vector.shape_cast %298 : vector<256xf32> to vector<1x256xf32>
    %300 = vector.extract_strided_slice %152 {offsets = [96, 0], sizes = [16, 256], strides = [1, 1]} : vector<128x256xf32> to vector<16x256xf32>
    %301 = arith.mulf %275, %300 : vector<16x256xf32>
    %cst_114 = arith.constant dense<0.000000e+00> : vector<256xf32>
    %302 = vector.multi_reduction <add>, %301, %cst_114 [0] : vector<16x256xf32> to vector<256xf32>
    %303 = vector.shape_cast %302 : vector<256xf32> to vector<1x256xf32>
    %304 = vector.extract_strided_slice %152 {offsets = [112, 0], sizes = [16, 256], strides = [1, 1]} : vector<128x256xf32> to vector<16x256xf32>
    %305 = arith.mulf %275, %304 : vector<16x256xf32>
    %cst_115 = arith.constant dense<0.000000e+00> : vector<256xf32>
    %306 = vector.multi_reduction <add>, %305, %cst_115 [0] : vector<16x256xf32> to vector<256xf32>
    %307 = vector.shape_cast %306 : vector<256xf32> to vector<1x256xf32>
    %308 = vector.extract_strided_slice %157 {offsets = [24, 0], sizes = [8, 256], strides = [1, 1]} : vector<32x256xf32> to vector<8x256xf32>
    %309 = tpu.concatenate %279, %283, %287, %291, %295, %299, %303, %307 in 0 : vector<1x256xf32>, vector<1x256xf32>, vector<1x256xf32>, vector<1x256xf32>, vector<1x256xf32>, vector<1x256xf32>, vector<1x256xf32>, vector<1x256xf32> -> vector<8x256xf32>
    %310 = arith.addf %308, %309 : vector<8x256xf32>
    %c0_116 = arith.constant 0 : index
    %c24_117 = arith.constant 24 : index
    %c0_118 = arith.constant 0 : index
    %311 = vector.load %arg8[%c0_116, %c24_117, %c0_118] : memref<1x32x256xf32, #tpu.memory_space<vmem>>, vector<1x8x256xf32>
    %312 = vector.shape_cast %311 : vector<1x8x256xf32> to vector<8x256xf32>
    %313 = vector.shape_cast %310 : vector<8x256xf32> to vector<1x8x256xf32>
    tpu.vector_store %arg8[%c0_116, %c24_117, %c0_118], %313 {strides = array<i32>} : memref<1x32x256xf32, #tpu.memory_space<vmem>>, vector<1x8x256xf32>,
    return
  }
  func.func @transform_0(%arg0: i32) -> (i32, i32, i32) {
    %c0_i32 = arith.constant 0 : i32
    %c0_i32_0 = arith.constant 0 : i32
    %c0_i32_1 = arith.constant 0 : i32
    return %arg0, %c0_i32, %c0_i32_0 : i32, i32, i32
  }
  func.func @transform_1(%arg0: i32) -> (i32, i32) {
    %c0_i32 = arith.constant 0 : i32
    %c0_i32_0 = arith.constant 0 : i32
    %c0_i32_1 = arith.constant 0 : i32
    return %c0_i32, %c0_i32_0 : i32, i32
  }
  func.func @transform_2(%arg0: i32) -> (i32, i32) {
    %c0_i32 = arith.constant 0 : i32
    %c0_i32_0 = arith.constant 0 : i32
    %c0_i32_1 = arith.constant 0 : i32
    return %c0_i32, %c0_i32_0 : i32, i32
  }
  func.func @transform_3(%arg0: i32) -> (i32, i32) {
    %c0_i32 = arith.constant 0 : i32
    %c0_i32_0 = arith.constant 0 : i32
    %c0_i32_1 = arith.constant 0 : i32
    return %c0_i32, %c0_i32_0 : i32, i32
  }
  func.func @transform_4(%arg0: i32) -> (i32, i32) {
    %c0_i32 = arith.constant 0 : i32
    %c0_i32_0 = arith.constant 0 : i32
    %c0_i32_1 = arith.constant 0 : i32
    return %c0_i32, %c0_i32_0 : i32, i32
  }
  func.func @transform_5(%arg0: i32) -> (i32, i32) {
    %c0_i32 = arith.constant 0 : i32
    %c0_i32_0 = arith.constant 0 : i32
    %c0_i32_1 = arith.constant 0 : i32
    return %c0_i32, %c0_i32_0 : i32, i32
  }
  func.func @transform_6(%arg0: i32) -> (i32, i32) {
    %c0_i32 = arith.constant 0 : i32
    %c0_i32_0 = arith.constant 0 : i32
    %c0_i32_1 = arith.constant 0 : i32
    return %c0_i32, %c0_i32_0 : i32, i32
  }
  func.func @transform_7(%arg0: i32) -> (i32, i32, i32) {
    %c0_i32 = arith.constant 0 : i32
    %c0_i32_0 = arith.constant 0 : i32
    %c0_i32_1 = arith.constant 0 : i32
    return %arg0, %c0_i32, %c0_i32_0 : i32, i32, i32
  }
}

</mosaic_0001>

<llo_original>
// kernel: tpu_custom_call.1
$region0: #{tpu_custom_call.1}
  #allocation0 [shape = 'u32[]', space=smem, size = 0x4, offset = 0x4, fixed_abs, tag = 'smem constant byte address 0x4 - core index']
  #allocation1 [shape = 'u32[144,128]{1,0:T(1,128)}', space=vmem, size = 0x12000, scoped, tag = 'internal scratch']
  #allocation2 [shape = 'f32[200,256]{1,0:T(8,128)}', space=vmem, size = 0x32000, scoped, tag = 'scratch operand']
  %s0 = inlined_call_operand.vmem [shape: f32[2,32,256], index: 0, kind: input, shape index: {}]
  %s1 = inlined_call_operand.vmem [shape: f32[88,32], index: 1, kind: input, shape index: {}]
  %s2 = inlined_call_operand.vmem [shape: f32[88,1], index: 2, kind: input, shape index: {}]
  %s3 = inlined_call_operand.vmem [shape: f32[128,200], index: 3, kind: input, shape index: {}]
  %s4 = inlined_call_operand.vmem [shape: f32[25,256], index: 4, kind: input, shape index: {}]
  %s5 = inlined_call_operand.vmem [shape: f32[32,64], index: 5, kind: input, shape index: {}]
  %s6 = inlined_call_operand.vmem [shape: f32[1,16], index: 6, kind: input, shape index: {}]
  %s7 = inlined_call_operand.hbm [shape: f32[2,32,256], index: 7, kind: output, shape index: {}]
  %s8 = sld [smem:[#allocation0]]
  $region61: #{tpu_custom_call.1} parent=0
    _
  %s10 = ssub.s32 1, %s8
  %s11 = scalar_select 0, %s10, %s8
  $region1: #{tpu_custom_call.1} parent=0
    #allocation3 [shape = 'u8[65536]{0}', space=vmem, size = 0x10000, scoped, tag = 'output window, operand 0']
    #allocation4 [shape = 's32[2]{0}', space=sflag, size = 0x8, scoped, tag = 'scoped memory for tpu_custom_call.1']
    %12 = vsyncpa [#allocation4], 0
    %s13 = scalar_lea.sflag [#allocation4], 1
    %14 = vsyncpa %s13, 0
    loop: start=0, step=1, limit=4
    $region2: #{tpu_custom_call.1} parent=1 // loop_pre_header
      _
    $region3: #{tpu_custom_call.1} parent=1 // loop_header
      %s16 = sphi 0, %s20
      %p17 = scmp.ge.s32.totalorder %s16, 4
      %s26 = sphi 0, %s28
      %s29 = sphi 0, %s26
      %s30 = sphi 0, %s29
      %s46 = sphi 0, %s30
      %s50 = sphi 0, %s50
      %s52 = sphi 0, %s50
      %s53 = sphi 0, %s52
      %s67 = sphi 0, %s53
      %s71 = sphi 0, %s71
      %s73 = sphi 0, %s71
      %s74 = sphi 0, %s73
      %s88 = sphi 0, %s74
      %s92 = sphi 0, %s92
      %s94 = sphi 0, %s92
      %s95 = sphi 0, %s94
      %s109 = sphi 0, %s95
      %s113 = sphi 0, %s113
      %s115 = sphi 0, %s113
      %s116 = sphi 0, %s115
      %s130 = sphi 0, %s116
      %s134 = sphi 0, %s134
      %s136 = sphi 0, %s134
      %s137 = sphi 0, %s136
      %s151 = sphi 0, %s137
      %s155 = sphi 0, %s155
      %s157 = sphi 0, %s155
      %s158 = sphi 0, %s157
      %s172 = sphi 0, %s158
      %s178 = sphi 0, %s180
      %s181 = sphi 0, %s178
      %s182 = sphi 0, %s181
      %s198 = sphi 0, %s182
    $region4: #{tpu_custom_call.1} parent=1 // loop_header_branch
      %19 = sbr.rel (%p17) target = $region8
    $region5: #{tpu_custom_call.1} parent=1 // loop_body
      %s21 = ssub.s32 %s16, 1
      %s22 = ssub.s32 %s16, 2
      %s23 = sadd.s32 %s16, 1
      %s24 = ssub.s32 %s16, %s23
      %p25 = scmp.eq.s32.totalorder %s24, 0
      %s27 = sadd.s32 %s26, 1
      %s28 = scalar_select %p25, %s26, %s27
      %p31 = pneg %p25
      %p32 = scmp.eq.s32.totalorder %s16, 1
      %p33 = por %p31, %p32
      %p34 = scmp.ne.s32.totalorder %s26, %s29
      %p35 = scmp.eq.s32.totalorder %s16, 0
      %p36 = por %p34, %p35
      %p37 = scmp.ne.s32.totalorder %s26, %s29
      %p38 = scmp.eq.s32.totalorder %s21, 1
      %p39 = por %p37, %p38
      %p40 = scmp.ne.s32.totalorder %s29, %s30
      %p41 = scmp.eq.s32.totalorder %s21, 0
      %p42 = por %p40, %p41
      %p43 = scmp.ne.s32.totalorder %s29, %s30
      %p44 = scmp.eq.s32.totalorder %s22, 1
      %p45 = por %p43, %p44
      %p47 = scmp.ne.s32.totalorder %s30, %s46
      %p48 = scmp.eq.s32.totalorder %s22, 0
      %p49 = por %p47, %p48
      %s51 = sadd.s32 %s50, 1
      %p54 = scmp.eq.s32.totalorder %s16, 1
      %p55 = scmp.ne.s32.totalorder %s50, %s52
      %p56 = scmp.eq.s32.totalorder %s16, 0
      %p57 = por %p55, %p56
      %p58 = scmp.ne.s32.totalorder %s50, %s52
      %p59 = scmp.eq.s32.totalorder %s21, 1
      %p60 = por %p58, %p59
      %p61 = scmp.ne.s32.totalorder %s52, %s53
      %p62 = scmp.eq.s32.totalorder %s21, 0
      %p63 = por %p61, %p62
      %p64 = scmp.ne.s32.totalorder %s52, %s53
      %p65 = scmp.eq.s32.totalorder %s22, 1
      %p66 = por %p64, %p65
      %p68 = scmp.ne.s32.totalorder %s53, %s67
      %p69 = scmp.eq.s32.totalorder %s22, 0
      %p70 = por %p68, %p69
      %s72 = sadd.s32 %s71, 1
      %p75 = scmp.eq.s32.totalorder %s16, 1
      %p76 = scmp.ne.s32.totalorder %s71, %s73
      %p77 = scmp.eq.s32.totalorder %s16, 0
      %p78 = por %p76, %p77
      %p79 = scmp.ne.s32.totalorder %s71, %s73
      %p80 = scmp.eq.s32.totalorder %s21, 1
      %p81 = por %p79, %p80
      %p82 = scmp.ne.s32.totalorder %s73, %s74
      %p83 = scmp.eq.s32.totalorder %s21, 0
      %p84 = por %p82, %p83
      %p85 = scmp.ne.s32.totalorder %s73, %s74
      %p86 = scmp.eq.s32.totalorder %s22, 1
      %p87 = por %p85, %p86
      %p89 = scmp.ne.s32.totalorder %s74, %s88
      %p90 = scmp.eq.s32.totalorder %s22, 0
      %p91 = por %p89, %p90
      %s93 = sadd.s32 %s92, 1
      %p96 = scmp.eq.s32.totalorder %s16, 1
      %p97 = scmp.ne.s32.totalorder %s92, %s94
      %p98 = scmp.eq.s32.totalorder %s16, 0
      %p99 = por %p97, %p98
      %p100 = scmp.ne.s32.totalorder %s92, %s94
      %p101 = scmp.eq.s32.totalorder %s21, 1
      %p102 = por %p100, %p101
      %p103 = scmp.ne.s32.totalorder %s94, %s95
      %p104 = scmp.eq.s32.totalorder %s21, 0
      %p105 = por %p103, %p104
      %p106 = scmp.ne.s32.totalorder %s94, %s95
      %p107 = scmp.eq.s32.totalorder %s22, 1
      %p108 = por %p106, %p107
      %p110 = scmp.ne.s32.totalorder %s95, %s109
      %p111 = scmp.eq.s32.totalorder %s22, 0
      %p112 = por %p110, %p111
      %s114 = sadd.s32 %s113, 1
      %p117 = scmp.eq.s32.totalorder %s16, 1
      %p118 = scmp.ne.s32.totalorder %s113, %s115
      %p119 = scmp.eq.s32.totalorder %s16, 0
      %p120 = por %p118, %p119
      %p121 = scmp.ne.s32.totalorder %s113, %s115
      %p122 = scmp.eq.s32.totalorder %s21, 1
      %p123 = por %p121, %p122
      %p124 = scmp.ne.s32.totalorder %s115, %s116
      %p125 = scmp.eq.s32.totalorder %s21, 0
      %p126 = por %p124, %p125
      %p127 = scmp.ne.s32.totalorder %s115, %s116
      %p128 = scmp.eq.s32.totalorder %s22, 1
      %p129 = por %p127, %p128
      %p131 = scmp.ne.s32.totalorder %s116, %s130
      %p132 = scmp.eq.s32.totalorder %s22, 0
      %p133 = por %p131, %p132
      %s135 = sadd.s32 %s134, 1
      %p138 = scmp.eq.s32.totalorder %s16, 1
      %p139 = scmp.ne.s32.totalorder %s134, %s136
      %p140 = scmp.eq.s32.totalorder %s16, 0
      %p141 = por %p139, %p140
      %p142 = scmp.ne.s32.totalorder %s134, %s136
      %p143 = scmp.eq.s32.totalorder %s21, 1
      %p144 = por %p142, %p143
      %p145 = scmp.ne.s32.totalorder %s136, %s137
      %p146 = scmp.eq.s32.totalorder %s21, 0
      %p147 = por %p145, %p146
      %p148 = scmp.ne.s32.totalorder %s136, %s137
      %p149 = scmp.eq.s32.totalorder %s22, 1
      %p150 = por %p148, %p149
      %p152 = scmp.ne.s32.totalorder %s137, %s151
      %p153 = scmp.eq.s32.totalorder %s22, 0
      %p154 = por %p152, %p153
      %s156 = sadd.s32 %s155, 1
      %p159 = scmp.eq.s32.totalorder %s16, 1
      %p160 = scmp.ne.s32.totalorder %s155, %s157
      %p161 = scmp.eq.s32.totalorder %s16, 0
      %p162 = por %p160, %p161
      %p163 = scmp.ne.s32.totalorder %s155, %s157
      %p164 = scmp.eq.s32.totalorder %s21, 1
      %p165 = por %p163, %p164
      %p166 = scmp.ne.s32.totalorder %s157, %s158
      %p167 = scmp.eq.s32.totalorder %s21, 0
      %p168 = por %p166, %p167
      %p169 = scmp.ne.s32.totalorder %s157, %s158
      %p170 = scmp.eq.s32.totalorder %s22, 1
      %p171 = por %p169, %p170
      %p173 = scmp.ne.s32.totalorder %s158, %s172
      %p174 = scmp.eq.s32.totalorder %s22, 0
      %p175 = por %p173, %p174
      %s176 = ssub.s32 %s16, %s23
      %p177 = scmp.eq.s32.totalorder %s176, 0
      %s179 = sadd.s32 %s178, 1
      %s180 = scalar_select %p177, %s178, %s179
      %p183 = pneg %p177
      %p184 = scmp.eq.s32.totalorder %s16, 1
      %p185 = por %p183, %p184
      %p186 = scmp.ne.s32.totalorder %s178, %s181
      %p187 = scmp.eq.s32.totalorder %s16, 0
      %p188 = por %p186, %p187
      %p189 = scmp.ne.s32.totalorder %s178, %s181
      %p190 = scmp.eq.s32.totalorder %s21, 1
      %p191 = por %p189, %p190
      %p192 = scmp.ne.s32.totalorder %s181, %s182
      %p193 = scmp.eq.s32.totalorder %s21, 0
      %p194 = por %p192, %p193
      %p195 = scmp.ne.s32.totalorder %s181, %s182
      %p196 = scmp.eq.s32.totalorder %s22, 1
      %p197 = por %p195, %p196
      %p199 = scmp.ne.s32.totalorder %s182, %s198
      %p200 = scmp.eq.s32.totalorder %s22, 0
      %p201 = por %p199, %p200
      %p202 = scmp.le.s32.totalorder 1, %s16
      %p203 = scmp.lt.s32.totalorder %s16, 3
      %p204 = pnand %p202, %p203
      %p205 = pneg %p204
      // Predicated region
      $region9: #{tpu_custom_call.1} parent=5 // pred_check
        _
      $region10: #{tpu_custom_call.1} parent=5 // pred_check_branch
        %207 = sbr.rel (%p204) target = $region12
      $region11: #{tpu_custom_call.1} parent=5 // pred_region
        %s208 = ssub.s32 %s16, 1
        // Predicated region
        $region13: #{tpu_custom_call.1} parent=11 // pred_check
          %p209 = pneg %p63
        $region14: #{tpu_custom_call.1} parent=11 // pred_check_branch
          %211 = sbr.rel (%p209) target = $region16
        $region15: #{tpu_custom_call.1} parent=11 // pred_region
          _
        $region16: #{tpu_custom_call.1} parent=11 // pred_fallthru
          _
        // Predicated region
        $region17: #{tpu_custom_call.1} parent=11 // pred_check
          %p212 = pneg %p84
        $region18: #{tpu_custom_call.1} parent=11 // pred_check_branch
          %214 = sbr.rel (%p212) target = $region20
        $region19: #{tpu_custom_call.1} parent=11 // pred_region
          _
        $region20: #{tpu_custom_call.1} parent=11 // pred_fallthru
          _
        // Predicated region
        $region21: #{tpu_custom_call.1} parent=11 // pred_check
          %p215 = pneg %p105
        $region22: #{tpu_custom_call.1} parent=11 // pred_check_branch
          %217 = sbr.rel (%p215) target = $region24
        $region23: #{tpu_custom_call.1} parent=11 // pred_region
          _
        $region24: #{tpu_custom_call.1} parent=11 // pred_fallthru
          _
        // Predicated region
        $region25: #{tpu_custom_call.1} parent=11 // pred_check
          %p218 = pneg %p126
        $region26: #{tpu_custom_call.1} parent=11 // pred_check_branch
          %220 = sbr.rel (%p218) target = $region28
        $region27: #{tpu_custom_call.1} parent=11 // pred_region
          _
        $region28: #{tpu_custom_call.1} parent=11 // pred_fallthru
          _
        // Predicated region
        $region29: #{tpu_custom_call.1} parent=11 // pred_check
          %p221 = pneg %p147
        $region30: #{tpu_custom_call.1} parent=11 // pred_check_branch
          %223 = sbr.rel (%p221) target = $region32
        $region31: #{tpu_custom_call.1} parent=11 // pred_region
          _
        $region32: #{tpu_custom_call.1} parent=11 // pred_fallthru
          _
        // Predicated region
        $region33: #{tpu_custom_call.1} parent=11 // pred_check
          %p224 = pneg %p168
        $region34: #{tpu_custom_call.1} parent=11 // pred_check_branch
          %226 = sbr.rel (%p224) target = $region36
        $region35: #{tpu_custom_call.1} parent=11 // pred_region
          _
        $region36: #{tpu_custom_call.1} parent=11 // pred_fallthru
          _
      $region12: #{tpu_custom_call.1} parent=5 // pred_fallthru
        _
      %p227 = scmp.lt.s32.totalorder %s16, 2
      // Predicated region
      $region37: #{tpu_custom_call.1} parent=5 // pred_check
        %p228 = pneg %p227
      $region38: #{tpu_custom_call.1} parent=5 // pred_check_branch
        %230 = sbr.rel (%p228) target = $region40
      $region39: #{tpu_custom_call.1} parent=5 // pred_region
        // Predicated region
        $region41: #{tpu_custom_call.1} parent=39 // pred_check
          %p231 = pneg %p36
        $region42: #{tpu_custom_call.1} parent=39 // pred_check_branch
          %233 = sbr.rel (%p231) target = $region44
        $region43: #{tpu_custom_call.1} parent=39 // pred_region
          %p234 = scmp.lt.s32.totalorder %s16, 1
          %s235 = scalar_select %p234, %s16, 1
          %s236 = smul.addr %s235, 8
          %s237 = smul.addr %s236, 8
          %s238 = scalar_lea.vmem %s0, %s237
        $region44: #{tpu_custom_call.1} parent=39 // pred_fallthru
          _
      $region40: #{tpu_custom_call.1} parent=5 // pred_fallthru
        _
      %p239 = scmp.le.s32.totalorder 1, %s16
      %p240 = scmp.lt.s32.totalorder %s16, 3
      %p241 = pnand %p239, %p240
      %p242 = pneg %p241
      // Predicated region
      $region45: #{tpu_custom_call.1} parent=5 // pred_check
        _
      $region46: #{tpu_custom_call.1} parent=5 // pred_check_branch
        %244 = sbr.rel (%p241) target = $region48
      $region47: #{tpu_custom_call.1} parent=5 // pred_region
        %s245 = ssub.s32 %s16, 1
        %p246 = scmp.lt.s32.totalorder %s21, 1
        %s247 = scalar_select %p246, %s21, 1
        %s248 = smul.addr %s247, 8
        %s249 = smul.addr %s248, 8
        %s250 = scalar_lea.vmem %s0, %s249
        %p251 = pneg %p42
        %p252 = pneg %p39
        %p253 = pneg %p63
        %p254 = pneg %p60
        %p255 = pneg %p84
        %p256 = pneg %p81
        %p257 = pneg %p105
        %p258 = pneg %p102
        %p259 = pneg %p126
        %p260 = pneg %p123
        %p261 = pneg %p147
        %p262 = pneg %p144
        %p263 = pneg %p168
        %p264 = pneg %p165
        %p265 = pneg %p194
        %p266 = pneg %p191
        %s267 = sand.u32 %s181, 1
        %s268 = scalar_lea.sflag [#allocation4], %s267
        %s269 = sand.u32 %s181, 1
        %s270 = smul.addr %s269, 64
        %s271 = scalar_lea.vmem [#allocation3], %s270
        %p272 = scmp.lt.s32.totalorder %s21, 1
        %s273 = scalar_select %p272, %s21, 1
        %s274 = smul.addr %s273, 8
        %s275 = smul.addr %s274, 8
        %s276 = scalar_lea.vmem %s0, %s275
        %v277 = vld [vmem:[%s1] sm:$0xff]
        %v278 = vld [vmem:[%s1 + $0x8] sm:$0xff]
        %v279 = vld [vmem:[%s1 + $0x10] sm:$0xff]
        %v280 = vld [vmem:[%s1 + $0x18] sm:$0xff]
        %v281 = vld [vmem:[%s1 + $0x20] sm:$0xff]
        %v282 = vld [vmem:[%s1 + $0x28] sm:$0xff]
        %v283 = vld [vmem:[%s1 + $0x30] sm:$0xff]
        %v284 = vld [vmem:[%s1 + $0x38] sm:$0xff]
        %v285 = vld [vmem:[%s1 + $0x40] sm:$0xff]
        %v286 = vld [vmem:[%s1 + $0x48] sm:$0xff]
        %v287 = vld [vmem:[%s1 + $0x50] sm:$0xff]
        %v288 = vld [vmem:[%s276] sm:$0xff]
        %v289 = vld [vmem:[%s276 + $0x8] sm:$0xff]
        %v290 = vld [vmem:[%s276 + $0x10] sm:$0xff]
        %v291 = vld [vmem:[%s276 + $0x18] sm:$0xff]
        %v292 = vld [vmem:[%s276 + $0x20] sm:$0xff]
        %v293 = vld [vmem:[%s276 + $0x28] sm:$0xff]
        %v294 = vld [vmem:[%s276 + $0x30] sm:$0xff]
        %v295 = vld [vmem:[%s276 + $0x38] sm:$0xff]
        %v296 = vld [vmem:[%s2] sm:$0xff]
        %v297 = vld [vmem:[%s2 + $0x8] sm:$0xff]
        %v298 = vld [vmem:[%s2 + $0x10] sm:$0xff]
        %v299 = vld [vmem:[%s2 + $0x18] sm:$0xff]
        %v300 = vld [vmem:[%s2 + $0x20] sm:$0xff]
        %v301 = vld [vmem:[%s2 + $0x28] sm:$0xff]
        %v302 = vld [vmem:[%s2 + $0x30] sm:$0xff]
        %v303 = vld [vmem:[%s2 + $0x38] sm:$0xff]
        %v304 = vld [vmem:[%s2 + $0x40] sm:$0xff]
        %v305 = vld [vmem:[%s2 + $0x48] sm:$0xff]
        %v306 = vld [vmem:[%s2 + $0x50] sm:$0xff]
        %308 = vset.pattern.permute.xlu0 0
        %309 = vperm.xlu0 %308, %v296
        %v310 = vpop.permute.xlu0 %309
        %313 = vset.pattern.permute.xlu0 0
        %314 = vperm.xlu0 %313, %v297
        %v315 = vpop.permute.xlu0 %314
        %318 = vset.pattern.permute.xlu0 0
        %319 = vperm.xlu0 %318, %v298
        %v320 = vpop.permute.xlu0 %319
        %323 = vset.pattern.permute.xlu0 0
        %324 = vperm.xlu0 %323, %v299
        %v325 = vpop.permute.xlu0 %324
        %328 = vset.pattern.permute.xlu0 0
        %329 = vperm.xlu0 %328, %v300
        %v330 = vpop.permute.xlu0 %329
        %333 = vset.pattern.permute.xlu0 0
        %334 = vperm.xlu0 %333, %v301
        %v335 = vpop.permute.xlu0 %334
        %338 = vset.pattern.permute.xlu0 0
        %339 = vperm.xlu0 %338, %v302
        %v340 = vpop.permute.xlu0 %339
        %343 = vset.pattern.permute.xlu0 0
        %344 = vperm.xlu0 %343, %v303
        %v345 = vpop.permute.xlu0 %344
        %348 = vset.pattern.permute.xlu0 0
        %349 = vperm.xlu0 %348, %v304
        %v350 = vpop.permute.xlu0 %349
        %353 = vset.pattern.permute.xlu0 0
        %354 = vperm.xlu0 %353, %v305
        %v355 = vpop.permute.xlu0 %354
        %358 = vset.pattern.permute.xlu0 0
        %359 = vperm.xlu0 %358, %v306
        %v360 = vpop.permute.xlu0 %359
        %vm362 = vcmask 261120
        %v364 = vsel %vm362, %v277, 0
        %v367 = vsel %vm362, %v278, 0
        %v370 = vsel %vm362, %v279, 0
        %v373 = vsel %vm362, %v280, 0
        %v376 = vsel %vm362, %v281, 0
        %v379 = vsel %vm362, %v282, 0
        %v382 = vsel %vm362, %v283, 0
        %v385 = vsel %vm362, %v284, 0
        %v388 = vsel %vm362, %v285, 0
        %v391 = vsel %vm362, %v286, 0
        %v394 = vsel %vm362, %v287, 0
        %396 = vmatprep.subr.mxu0 %v289
        %397 = vmatpush1.msra.mxu0 %v288
        %398 = vmatprep.subr.mxu0 %v291
        %399 = vmatpush1.msra.mxu0 %v290
        %400 = vmatprep.subr.mxu0 %v293
        %401 = vmatpush1.msra.mxu0 %v292
        %402 = vmatprep.subr.mxu0 %v295
        %403 = vmatpush1.msra.mxu0 %v294
        %404 = vmatprep.subr.mxu0 0.0
        %405 = vmatpush1.msra.mxu0 0.0
        %406 = vmatprep.subr.mxu0 0.0
        %407 = vmatpush1.msra.mxu0 0.0
        %408 = vmatprep.subr.mxu0 0.0
        %409 = vmatpush1.msra.mxu0 0.0
        %410 = vmatprep.subr.mxu0 0.0
        %411 = vmatpush1.msra.mxu0 0.0
        %412 = vmatprep.subr.mxu0 0.0
        %413 = vmatpush1.msra.mxu0 0.0
        %414 = vmatprep.subr.mxu0 0.0
        %415 = vmatpush1.msra.mxu0 0.0
        %416 = vmatprep.subr.mxu0 0.0
        %417 = vmatpush1.msra.mxu0 0.0
        %418 = vmatprep.subr.mxu0 0.0
        %419 = vmatpush1.msra.mxu0 0.0
        %420 = vmatprep.subr.mxu0 0.0
        %421 = vmatpush1.msra.mxu0 0.0
        %422 = vmatprep.subr.mxu0 0.0
        %423 = vmatpush1.msra.mxu0 0.0
        %424 = vmatprep.subr.mxu0 0.0
        %425 = vmatpush1.msra.mxu0 0.0
        %426 = vmatprep.subr.mxu0 0.0
        %427 = vmatpush1.msra.mxu0 0.0
        %428 = vmatprep.subr.mxu0 0.0
        %429 = vmatpush1.msra.mxu0 0.0
        %430 = vmatprep.subr.mxu0 0.0
        %431 = vmatpush1.msra.mxu0 0.0
        %432 = vmatprep.subr.mxu0 0.0
        %433 = vmatpush1.msra.mxu0 0.0
        %434 = vmatprep.subr.mxu0 0.0
        %435 = vmatpush1.msra.mxu0 0.0
        %436 = vmatprep.subr.mxu0 0.0
        %437 = vmatpush1.msra.mxu0 0.0
        %438 = vmatprep.subr.mxu0 0.0
        %439 = vmatpush1.msra.mxu0 0.0
        %440 = vmatprep.subr.mxu0 0.0
        %441 = vmatpush1.msra.mxu0 0.0
        %442 = vmatprep.subr.mxu0 0.0
        %443 = vmatpush1.msra.mxu0 0.0
        %444 = vmatprep.subr.mxu0 0.0
        %445 = vmatpush1.msra.mxu0 0.0
        %446 = vmatprep.subr.mxu0 0.0
        %447 = vmatpush1.msra.mxu0 0.0
        %448 = vmatprep.subr.mxu0 0.0
        %449 = vmatpush1.msra.mxu0 0.0
        %450 = vmatprep.subr.mxu0 0.0
        %451 = vmatpush1.msra.mxu0 0.0
        %452 = vmatprep.subr.mxu0 0.0
        %453 = vmatpush1.msra.mxu0 0.0
        %454 = vmatprep.subr.mxu0 0.0
        %455 = vmatpush1.msra.mxu0 0.0
        %456 = vmatprep.subr.mxu0 0.0
        %457 = vmatpush1.msra.mxu0 0.0
        %458 = vmatprep.subr.mxu0 0.0
        %459 = vmatpush1.msra.mxu0 0.0
        %460 = vmatprep.mubr.f32.mxu0 0.0
        %461 = vmatmul.mubr.f32.gmra.mrb[0].mxu0 %v364
        %v462 = vpop.f32.mrb[0].mxu0
        %v463 = vadd.f32 %v310, %v462
        %v464 = vpop.f32.mrb[0].mxu0
        %v465 = vadd.f32 %v310, %v464
        %466 = vmatprep.mubr.f32.mxu0 0.0
        %467 = vmatmul.mubr.f32.gmra.mrb[0].mxu0 %v367
        %v468 = vpop.f32.mrb[0].mxu0
        %v469 = vadd.f32 %v315, %v468
        %v470 = vpop.f32.mrb[0].mxu0
        %v471 = vadd.f32 %v315, %v470
        %472 = vmatprep.mubr.f32.mxu0 0.0
        %473 = vmatmul.mubr.f32.gmra.mrb[0].mxu0 %v370
        %v474 = vpop.f32.mrb[0].mxu0
        %v475 = vadd.f32 %v320, %v474
        %v476 = vpop.f32.mrb[0].mxu0
        %v477 = vadd.f32 %v320, %v476
        %478 = vmatprep.mubr.f32.mxu0 0.0
        %479 = vmatmul.mubr.f32.gmra.mrb[0].mxu0 %v373
        %v480 = vpop.f32.mrb[0].mxu0
        %v481 = vadd.f32 %v325, %v480
        %v482 = vpop.f32.mrb[0].mxu0
        %v483 = vadd.f32 %v325, %v482
        %484 = vmatprep.mubr.f32.mxu0 0.0
        %485 = vmatmul.mubr.f32.gmra.mrb[0].mxu0 %v376
        %v486 = vpop.f32.mrb[0].mxu0
        %v487 = vadd.f32 %v330, %v486
        %v488 = vpop.f32.mrb[0].mxu0
        %v489 = vadd.f32 %v330, %v488
        %490 = vmatprep.mubr.f32.mxu0 0.0
        %491 = vmatmul.mubr.f32.gmra.mrb[0].mxu0 %v379
        %v492 = vpop.f32.mrb[0].mxu0
        %v493 = vadd.f32 %v335, %v492
        %v494 = vpop.f32.mrb[0].mxu0
        %v495 = vadd.f32 %v335, %v494
        %496 = vmatprep.mubr.f32.mxu0 0.0
        %497 = vmatmul.mubr.f32.gmra.mrb[0].mxu0 %v382
        %v498 = vpop.f32.mrb[0].mxu0
        %v499 = vadd.f32 %v340, %v498
        %v500 = vpop.f32.mrb[0].mxu0
        %v501 = vadd.f32 %v340, %v500
        %502 = vmatprep.mubr.f32.mxu0 0.0
        %503 = vmatmul.mubr.f32.gmra.mrb[0].mxu0 %v385
        %v504 = vpop.f32.mrb[0].mxu0
        %v505 = vadd.f32 %v345, %v504
        %v506 = vpop.f32.mrb[0].mxu0
        %v507 = vadd.f32 %v345, %v506
        %508 = vmatprep.mubr.f32.mxu0 0.0
        %509 = vmatmul.mubr.f32.gmra.mrb[0].mxu0 %v388
        %v510 = vpop.f32.mrb[0].mxu0
        %v511 = vadd.f32 %v350, %v510
        %v512 = vpop.f32.mrb[0].mxu0
        %v513 = vadd.f32 %v350, %v512
        %514 = vmatprep.mubr.f32.mxu0 0.0
        %515 = vmatmul.mubr.f32.gmra.mrb[0].mxu0 %v391
        %v516 = vpop.f32.mrb[0].mxu0
        %v517 = vadd.f32 %v355, %v516
        %v518 = vpop.f32.mrb[0].mxu0
        %v519 = vadd.f32 %v355, %v518
        %520 = vmatprep.mubr.f32.mxu0 0.0
        %521 = vmatmul.mubr.f32.gmra.mrb[0].mxu0 %v394
        %v522 = vpop.f32.mrb[0].mxu0
        %v523 = vadd.f32 %v360, %v522
        %v524 = vpop.f32.mrb[0].mxu0
        %v525 = vadd.f32 %v360, %v524
        %526 = vdwg.mxu0
        %v527 = vmax.f32 %v511, %v513
        %528 = vmax.xlane.f32.xlu0 %v527
        %v529 = vpop.xlane.xlu0 %528
        %v530 = vmax.f32 %v517, %v519
        %531 = vmax.xlane.f32.xlu0 %v530
        %v532 = vpop.xlane.xlu0 %531
        %v533 = vsub.f32 %v511, %v529
        %v534 = vsub.f32 %v513, %v529
        %v535 = vsub.f32 %v517, %v532
        %v536 = vsub.f32 %v519, %v532
        %v537 = vmul.f32 %v533, 1.442695
        %v538 = vpow.pop %v537
        %v539 = vmul.f32 %v534, 1.442695
        %v540 = vpow.pop %v539
        %v541 = vmul.f32 %v535, 1.442695
        %v542 = vpow.pop %v541
        %v543 = vmul.f32 %v536, 1.442695
        %v544 = vpow.pop %v543
        %v545 = vadd.f32 %v538, %v540
        %546 = vadd.xlane.f32.xlu0 %v545
        %v547 = vpop.xlane.xlu0 %546
        %v548 = vadd.f32 %v542, %v544
        %549 = vadd.xlane.f32.xlu0 %v548
        %v550 = vpop.xlane.xlu0 %549
        %v551 = vrcp.pop %v547
        %v552 = vrcp.pop %v550
        %v553 = vmul.f32 %v538, %v551
        %v554 = vmul.f32 %v540, %v551
        %v555 = vmul.f32 %v542, %v552
        %v556 = vmul.f32 %v544, %v552
        %v557 = vld [vmem:[%s6] sm:$0x1]
        %v559 = vlaneseq
        %v560 = vshrl.u32 %v559, 7
        %v561 = vsub.s32 0, %v560
        %v562 = vrot.slane %v557, %v561
        %564 = vmatprep.subr.mxu0 %v554
        %565 = vmatpush1.xpose.msra.mxu0 %v553
        %566 = vmatprep.subr.mxu0 %v556
        %567 = vmatpush1.xpose.msra.mxu0 %v555
        %568 = vmatprep.subr.mxu0 0.0
        %569 = vmatpush1.xpose.msra.mxu0 0.0
        %570 = vmatprep.subr.mxu0 0.0
        %571 = vmatpush1.xpose.msra.mxu0 0.0
        %572 = vmatprep.subr.mxu0 0.0
        %573 = vmatpush1.xpose.msra.mxu0 0.0
        %574 = vmatprep.subr.mxu0 0.0
        %575 = vmatpush1.xpose.msra.mxu0 0.0
        %576 = vmatprep.subr.mxu0 0.0
        %577 = vmatpush1.xpose.msra.mxu0 0.0
        %578 = vmatprep.subr.mxu0 0.0
        %579 = vmatpush1.xpose.msra.mxu0 0.0
        %580 = vmatprep.subr.mxu0 0.0
        %581 = vmatpush1.xpose.msra.mxu0 0.0
        %582 = vmatprep.subr.mxu0 0.0
        %583 = vmatpush1.xpose.msra.mxu0 0.0
        %584 = vmatprep.subr.mxu0 0.0
        %585 = vmatpush1.xpose.msra.mxu0 0.0
        %586 = vmatprep.subr.mxu0 0.0
        %587 = vmatpush1.xpose.msra.mxu0 0.0
        %588 = vmatprep.subr.mxu0 0.0
        %589 = vmatpush1.xpose.msra.mxu0 0.0
        %590 = vmatprep.subr.mxu0 0.0
        %591 = vmatpush1.xpose.msra.mxu0 0.0
        %592 = vmatprep.subr.mxu0 0.0
        %593 = vmatpush1.xpose.msra.mxu0 0.0
        %594 = vmatprep.subr.mxu0 0.0
        %595 = vmatpush1.xpose.msra.mxu0 0.0
        %596 = vmatprep.subr.mxu0 0.0
        %597 = vmatpush1.xpose.msra.mxu0 0.0
        %598 = vmatprep.subr.mxu0 0.0
        %599 = vmatpush1.xpose.msra.mxu0 0.0
        %600 = vmatprep.subr.mxu0 0.0
        %601 = vmatpush1.xpose.msra.mxu0 0.0
        %602 = vmatprep.subr.mxu0 0.0
        %603 = vmatpush1.xpose.msra.mxu0 0.0
        %604 = vmatprep.subr.mxu0 0.0
        %605 = vmatpush1.xpose.msra.mxu0 0.0
        %606 = vmatprep.subr.mxu0 0.0
        %607 = vmatpush1.xpose.msra.mxu0 0.0
        %608 = vmatprep.subr.mxu0 0.0
        %609 = vmatpush1.xpose.msra.mxu0 0.0
        %610 = vmatprep.subr.mxu0 0.0
        %611 = vmatpush1.xpose.msra.mxu0 0.0
        %612 = vmatprep.subr.mxu0 0.0
        %613 = vmatpush1.xpose.msra.mxu0 0.0
        %614 = vmatprep.subr.mxu0 0.0
        %615 = vmatpush1.xpose.msra.mxu0 0.0
        %616 = vmatprep.subr.mxu0 0.0
        %617 = vmatpush1.xpose.msra.mxu0 0.0
        %618 = vmatprep.subr.mxu0 0.0
        %619 = vmatpush1.xpose.msra.mxu0 0.0
        %620 = vmatprep.subr.mxu0 0.0
        %621 = vmatpush1.xpose.msra.mxu0 0.0
        %622 = vmatprep.subr.mxu0 0.0
        %623 = vmatpush1.xpose.msra.mxu0 0.0
        %624 = vmatprep.subr.mxu0 0.0
        %625 = vmatpush1.xpose.msra.mxu0 0.0
        %626 = vmatprep.subr.mxu0 0.0
        %627 = vmatpush1.xpose.msra.mxu0 0.0
        %628 = vmatprep.mubr.f32.mxu0 %v525
        %629 = vmatmul.mubr.f32.gmra.mrb[0].mxu0 %v523
        %v630 = vpop.f32.mrb[0].mxu0
        %v631 = vadd.f32 %v562, %v630
        %v632 = vpop.f32.mrb[0].mxu0
        %633 = vdwg.mxu0
        %634 = vrot.lane.b32.xlu0 %v523, 34
        %v635 = vpop.permute.xlu0 %634
        %636 = vrot.lane.b32.xlu0 %v525, 34
        %v637 = vpop.permute.xlu0 %636
        %v638 = vlaneseq
        %v639 = vand.u32 %v638, 127
        %vm640 = vcmp.lt.s32.totalorder %v639, 34
        %v641 = vsel %vm640, %v635, %v637
        %v642 = vsel %vm640, %v637, %v635
        %v643 = vld [vmem:[%s4] ss:$8 sm:$0x3]
        %v645 = vlaneseq
        %v646 = vshrl.u32 %v645, 7
        %v647 = vsub.s32 0, %v646
        %v648 = vrot.slane %v643, %v647
        %v649 = vlaneseq
        %v650 = vshrl.u32 %v649, 7
        %v651 = vsub.s32 1, %v650
        %v652 = vrot.slane %v643, %v651
        %v655 = vmul.f32 %v642, %v648
        %v656 = vmul.f32 %v641, %v652
        %657 = vst [vmem:[#allocation2] sm:$0xff] %v655
        %658 = vst [vmem:[#allocation2 + $0x8] sm:$0xff] %v656
        %659 = vrot.lane.b32.xlu0 %v523, 33
        %v660 = vpop.permute.xlu0 %659
        %661 = vrot.lane.b32.xlu0 %v525, 33
        %v662 = vpop.permute.xlu0 %661
        %vm663 = vcmp.lt.s32.totalorder %v639, 33
        %v664 = vsel %vm663, %v660, %v662
        %v665 = vsel %vm663, %v662, %v660
        %s666 = scalar_lea.vmem %s4, 1
        %v667 = vld [vmem:[%s666] ss:$8 sm:$0x3]
        %v669 = vlaneseq
        %v670 = vshrl.u32 %v669, 7
        %v671 = vsub.s32 0, %v670
        %v672 = vrot.slane %v667, %v671
        %v673 = vlaneseq
        %v674 = vshrl.u32 %v673, 7
        %v675 = vsub.s32 1, %v674
        %v676 = vrot.slane %v667, %v675
        %v679 = vmul.f32 %v665, %v672
        %v680 = vmul.f32 %v664, %v676
        %681 = vst [vmem:[#allocation2 + $0x10] sm:$0xff] %v679
        %682 = vst [vmem:[#allocation2 + $0x18] sm:$0xff] %v680
        %683 = vrot.lane.b32.xlu0 %v523, 32
        %v684 = vpop.permute.xlu0 %683
        %685 = vrot.lane.b32.xlu0 %v525, 32
        %v686 = vpop.permute.xlu0 %685
        %vm687 = vcmp.lt.s32.totalorder %v639, 32
        %v688 = vsel %vm687, %v684, %v686
        %v689 = vsel %vm687, %v686, %v684
        %s690 = scalar_lea.vmem %s4, 2
        %v691 = vld [vmem:[%s690] ss:$8 sm:$0x3]
        %v693 = vlaneseq
        %v694 = vshrl.u32 %v693, 7
        %v695 = vsub.s32 0, %v694
        %v696 = vrot.slane %v691, %v695
        %v697 = vlaneseq
        %v698 = vshrl.u32 %v697, 7
        %v699 = vsub.s32 1, %v698
        %v700 = vrot.slane %v691, %v699
        %v703 = vmul.f32 %v689, %v696
        %v704 = vmul.f32 %v688, %v700
        %705 = vst [vmem:[#allocation2 + $0x20] sm:$0xff] %v703
        %706 = vst [vmem:[#allocation2 + $0x28] sm:$0xff] %v704
        %707 = vrot.lane.b32.xlu0 %v523, 31
        %v708 = vpop.permute.xlu0 %707
        %709 = vrot.lane.b32.xlu0 %v525, 31
        %v710 = vpop.permute.xlu0 %709
        %vm711 = vcmp.lt.s32.totalorder %v639, 31
        %v712 = vsel %vm711, %v708, %v710
        %v713 = vsel %vm711, %v710, %v708
        %s714 = scalar_lea.vmem %s4, 3
        %v715 = vld [vmem:[%s714] ss:$8 sm:$0x3]
        %v717 = vlaneseq
        %v718 = vshrl.u32 %v717, 7
        %v719 = vsub.s32 0, %v718
        %v720 = vrot.slane %v715, %v719
        %v721 = vlaneseq
        %v722 = vshrl.u32 %v721, 7
        %v723 = vsub.s32 1, %v722
        %v724 = vrot.slane %v715, %v723
        %v727 = vmul.f32 %v713, %v720
        %v728 = vmul.f32 %v712, %v724
        %729 = vst [vmem:[#allocation2 + $0x30] sm:$0xff] %v727
        %730 = vst [vmem:[#allocation2 + $0x38] sm:$0xff] %v728
        %731 = vrot.lane.b32.xlu0 %v523, 30
        %v732 = vpop.permute.xlu0 %731
        %733 = vrot.lane.b32.xlu0 %v525, 30
        %v734 = vpop.permute.xlu0 %733
        %vm735 = vcmp.lt.s32.totalorder %v639, 30
        %v736 = vsel %vm735, %v732, %v734
        %v737 = vsel %vm735, %v734, %v732
        %s738 = scalar_lea.vmem %s4, 4
        %v739 = vld [vmem:[%s738] ss:$8 sm:$0x3]
        %v741 = vlaneseq
        %v742 = vshrl.u32 %v741, 7
        %v743 = vsub.s32 0, %v742
        %v744 = vrot.slane %v739, %v743
        %v745 = vlaneseq
        %v746 = vshrl.u32 %v745, 7
        %v747 = vsub.s32 1, %v746
        %v748 = vrot.slane %v739, %v747
        %v751 = vmul.f32 %v737, %v744
        %v752 = vmul.f32 %v736, %v748
        %753 = vst [vmem:[#allocation2 + $0x40] sm:$0xff] %v751
        %754 = vst [vmem:[#allocation2 + $0x48] sm:$0xff] %v752
        %755 = vrot.lane.b32.xlu0 %v523, 18
        %v756 = vpop.permute.xlu0 %755
        %757 = vrot.lane.b32.xlu0 %v525, 18
        %v758 = vpop.permute.xlu0 %757
        %vm759 = vcmp.lt.s32.totalorder %v639, 18
        %v760 = vsel %vm759, %v756, %v758
        %v761 = vsel %vm759, %v758, %v756
        %s762 = scalar_lea.vmem %s4, 5
        %v763 = vld [vmem:[%s762] ss:$8 sm:$0x3]
        %v765 = vlaneseq
        %v766 = vshrl.u32 %v765, 7
        %v767 = vsub.s32 0, %v766
        %v768 = vrot.slane %v763, %v767
        %v769 = vlaneseq
        %v770 = vshrl.u32 %v769, 7
        %v771 = vsub.s32 1, %v770
        %v772 = vrot.slane %v763, %v771
        %v775 = vmul.f32 %v761, %v768
        %v776 = vmul.f32 %v760, %v772
        %777 = vst [vmem:[#allocation2 + $0x50] sm:$0xff] %v775
        %778 = vst [vmem:[#allocation2 + $0x58] sm:$0xff] %v776
        %779 = vrot.lane.b32.xlu0 %v523, 17
        %v780 = vpop.permute.xlu0 %779
        %781 = vrot.lane.b32.xlu0 %v525, 17
        %v782 = vpop.permute.xlu0 %781
        %vm783 = vcmp.lt.s32.totalorder %v639, 17
        %v784 = vsel %vm783, %v780, %v782
        %v785 = vsel %vm783, %v782, %v780
        %s786 = scalar_lea.vmem %s4, 6
        %v787 = vld [vmem:[%s786] ss:$8 sm:$0x3]
        %v789 = vlaneseq
        %v790 = vshrl.u32 %v789, 7
        %v791 = vsub.s32 0, %v790
        %v792 = vrot.slane %v787, %v791
        %v793 = vlaneseq
        %v794 = vshrl.u32 %v793, 7
        %v795 = vsub.s32 1, %v794
        %v796 = vrot.slane %v787, %v795
        %v799 = vmul.f32 %v785, %v792
        %v800 = vmul.f32 %v784, %v796
        %801 = vst [vmem:[#allocation2 + $0x60] sm:$0xff] %v799
        %802 = vst [vmem:[#allocation2 + $0x68] sm:$0xff] %v800
        %803 = vrot.lane.b32.xlu0 %v523, 16
        %v804 = vpop.permute.xlu0 %803
        %805 = vrot.lane.b32.xlu0 %v525, 16
        %v806 = vpop.permute.xlu0 %805
        %vm807 = vcmp.lt.s32.totalorder %v639, 16
        %v808 = vsel %vm807, %v804, %v806
        %v809 = vsel %vm807, %v806, %v804
        %s810 = scalar_lea.vmem %s4, 7
        %v811 = vld [vmem:[%s810] ss:$8 sm:$0x3]
        %v813 = vlaneseq
        %v814 = vshrl.u32 %v813, 7
        %v815 = vsub.s32 0, %v814
        %v816 = vrot.slane %v811, %v815
        %v817 = vlaneseq
        %v818 = vshrl.u32 %v817, 7
        %v819 = vsub.s32 1, %v818
        %v820 = vrot.slane %v811, %v819
        %v823 = vmul.f32 %v809, %v816
        %v824 = vmul.f32 %v808, %v820
        %825 = vst [vmem:[#allocation2 + $0x70] sm:$0xff] %v823
        %826 = vst [vmem:[#allocation2 + $0x78] sm:$0xff] %v824
        %827 = vrot.lane.b32.xlu0 %v523, 15
        %v828 = vpop.permute.xlu0 %827
        %829 = vrot.lane.b32.xlu0 %v525, 15
        %v830 = vpop.permute.xlu0 %829
        %vm831 = vcmp.lt.s32.totalorder %v639, 15
        %v832 = vsel %vm831, %v828, %v830
        %v833 = vsel %vm831, %v830, %v828
        %s834 = scalar_lea.vmem %s4, 16
        %v835 = vld [vmem:[%s834] ss:$8 sm:$0x3]
        %v837 = vlaneseq
        %v838 = vshrl.u32 %v837, 7
        %v839 = vsub.s32 0, %v838
        %v840 = vrot.slane %v835, %v839
        %v841 = vlaneseq
        %v842 = vshrl.u32 %v841, 7
        %v843 = vsub.s32 1, %v842
        %v844 = vrot.slane %v835, %v843
        %v847 = vmul.f32 %v833, %v840
        %v848 = vmul.f32 %v832, %v844
        %849 = vst [vmem:[#allocation2 + $0x80] sm:$0xff] %v847
        %850 = vst [vmem:[#allocation2 + $0x88] sm:$0xff] %v848
        %851 = vrot.lane.b32.xlu0 %v523, 14
        %v852 = vpop.permute.xlu0 %851
        %853 = vrot.lane.b32.xlu0 %v525, 14
        %v854 = vpop.permute.xlu0 %853
        %vm855 = vcmp.lt.s32.totalorder %v639, 14
        %v856 = vsel %vm855, %v852, %v854
        %v857 = vsel %vm855, %v854, %v852
        %s858 = scalar_lea.vmem %s4, 17
        %v859 = vld [vmem:[%s858] ss:$8 sm:$0x3]
        %v861 = vlaneseq
        %v862 = vshrl.u32 %v861, 7
        %v863 = vsub.s32 0, %v862
        %v864 = vrot.slane %v859, %v863
        %v865 = vlaneseq
        %v866 = vshrl.u32 %v865, 7
        %v867 = vsub.s32 1, %v866
        %v868 = vrot.slane %v859, %v867
        %v871 = vmul.f32 %v857, %v864
        %v872 = vmul.f32 %v856, %v868
        %873 = vst [vmem:[#allocation2 + $0x90] sm:$0xff] %v871
        %874 = vst [vmem:[#allocation2 + $0x98] sm:$0xff] %v872
        %875 = vrot.lane.b32.xlu0 %v523, 2
        %v876 = vpop.permute.xlu0 %875
        %877 = vrot.lane.b32.xlu0 %v525, 2
        %v878 = vpop.permute.xlu0 %877
        %vm879 = vcmp.lt.s32.totalorder %v639, 2
        %v880 = vsel %vm879, %v876, %v878
        %v881 = vsel %vm879, %v878, %v876
        %s882 = scalar_lea.vmem %s4, 18
        %v883 = vld [vmem:[%s882] ss:$8 sm:$0x3]
        %v885 = vlaneseq
        %v886 = vshrl.u32 %v885, 7
        %v887 = vsub.s32 0, %v886
        %v888 = vrot.slane %v883, %v887
        %v889 = vlaneseq
        %v890 = vshrl.u32 %v889, 7
        %v891 = vsub.s32 1, %v890
        %v892 = vrot.slane %v883, %v891
        %v895 = vmul.f32 %v881, %v888
        %v896 = vmul.f32 %v880, %v892
        %897 = vst [vmem:[#allocation2 + $0xa0] sm:$0xff] %v895
        %898 = vst [vmem:[#allocation2 + $0xa8] sm:$0xff] %v896
        %899 = vrot.lane.b32.xlu0 %v523, 1
        %v900 = vpop.permute.xlu0 %899
        %901 = vrot.lane.b32.xlu0 %v525, 1
        %v902 = vpop.permute.xlu0 %901
        %vm903 = vcmp.lt.s32.totalorder %v639, 1
        %v904 = vsel %vm903, %v900, %v902
        %v905 = vsel %vm903, %v902, %v900
        %s906 = scalar_lea.vmem %s4, 19
        %v907 = vld [vmem:[%s906] ss:$8 sm:$0x3]
        %v909 = vlaneseq
        %v910 = vshrl.u32 %v909, 7
        %v911 = vsub.s32 0, %v910
        %v912 = vrot.slane %v907, %v911
        %v913 = vlaneseq
        %v914 = vshrl.u32 %v913, 7
        %v915 = vsub.s32 1, %v914
        %v916 = vrot.slane %v907, %v915
        %v919 = vmul.f32 %v905, %v912
        %v920 = vmul.f32 %v904, %v916
        %921 = vst [vmem:[#allocation2 + $0xb0] sm:$0xff] %v919
        %922 = vst [vmem:[#allocation2 + $0xb8] sm:$0xff] %v920
        %s923 = scalar_lea.vmem %s4, 20
        %v924 = vld [vmem:[%s923] ss:$8 sm:$0x3]
        %v926 = vlaneseq
        %v927 = vshrl.u32 %v926, 7
        %v928 = vsub.s32 0, %v927
        %v929 = vrot.slane %v924, %v928
        %v930 = vlaneseq
        %v931 = vshrl.u32 %v930, 7
        %v932 = vsub.s32 1, %v931
        %v933 = vrot.slane %v924, %v932
        %v936 = vmul.f32 %v523, %v929
        %v937 = vmul.f32 %v525, %v933
        %938 = vst [vmem:[#allocation2 + $0xc0] sm:$0xff] %v936
        %939 = vst [vmem:[#allocation2 + $0xc8] sm:$0xff] %v937
        %940 = vrot.lane.b32.xlu0 %v523, 127
        %v941 = vpop.permute.xlu0 %940
        %942 = vrot.lane.b32.xlu0 %v525, 127
        %v943 = vpop.permute.xlu0 %942
        %vm944 = vcmp.lt.s32.totalorder %v639, 127
        %v945 = vsel %vm944, %v941, %v943
        %v946 = vsel %vm944, %v943, %v941
        %s947 = scalar_lea.vmem %s4, 21
        %v948 = vld [vmem:[%s947] ss:$8 sm:$0x3]
        %v950 = vlaneseq
        %v951 = vshrl.u32 %v950, 7
        %v952 = vsub.s32 0, %v951
        %v953 = vrot.slane %v948, %v952
        %v954 = vlaneseq
        %v955 = vshrl.u32 %v954, 7
        %v956 = vsub.s32 1, %v955
        %v957 = vrot.slane %v948, %v956
        %v960 = vmul.f32 %v945, %v953
        %v961 = vmul.f32 %v946, %v957
        %962 = vst [vmem:[#allocation2 + $0xd0] sm:$0xff] %v960
        %963 = vst [vmem:[#allocation2 + $0xd8] sm:$0xff] %v961
        %964 = vrot.lane.b32.xlu0 %v523, 126
        %v965 = vpop.permute.xlu0 %964
        %966 = vrot.lane.b32.xlu0 %v525, 126
        %v967 = vpop.permute.xlu0 %966
        %vm968 = vcmp.lt.s32.totalorder %v639, 126
        %v969 = vsel %vm968, %v965, %v967
        %v970 = vsel %vm968, %v967, %v965
        %s971 = scalar_lea.vmem %s4, 22
        %v972 = vld [vmem:[%s971] ss:$8 sm:$0x3]
        %v974 = vlaneseq
        %v975 = vshrl.u32 %v974, 7
        %v976 = vsub.s32 0, %v975
        %v977 = vrot.slane %v972, %v976
        %v978 = vlaneseq
        %v979 = vshrl.u32 %v978, 7
        %v980 = vsub.s32 1, %v979
        %v981 = vrot.slane %v972, %v980
        %v984 = vmul.f32 %v969, %v977
        %v985 = vmul.f32 %v970, %v981
        %986 = vst [vmem:[#allocation2 + $0xe0] sm:$0xff] %v984
        %987 = vst [vmem:[#allocation2 + $0xe8] sm:$0xff] %v985
        %988 = vrot.lane.b32.xlu0 %v523, 114
        %v989 = vpop.permute.xlu0 %988
        %990 = vrot.lane.b32.xlu0 %v525, 114
        %v991 = vpop.permute.xlu0 %990
        %vm992 = vcmp.lt.s32.totalorder %v639, 114
        %v993 = vsel %vm992, %v989, %v991
        %v994 = vsel %vm992, %v991, %v989
        %s995 = scalar_lea.vmem %s4, 23
        %v996 = vld [vmem:[%s995] ss:$8 sm:$0x3]
        %v998 = vlaneseq
        %v999 = vshrl.u32 %v998, 7
        %v1000 = vsub.s32 0, %v999
        %v1001 = vrot.slane %v996, %v1000
        %v1002 = vlaneseq
        %v1003 = vshrl.u32 %v1002, 7
        %v1004 = vsub.s32 1, %v1003
        %v1005 = vrot.slane %v996, %v1004
        %v1008 = vmul.f32 %v993, %v1001
        %v1009 = vmul.f32 %v994, %v1005
        %1010 = vst [vmem:[#allocation2 + $0xf0] sm:$0xff] %v1008
        %1011 = vst [vmem:[#allocation2 + $0xf8] sm:$0xff] %v1009
        %1012 = vrot.lane.b32.xlu0 %v523, 113
        %v1013 = vpop.permute.xlu0 %1012
        %1014 = vrot.lane.b32.xlu0 %v525, 113
        %v1015 = vpop.permute.xlu0 %1014
        %vm1016 = vcmp.lt.s32.totalorder %v639, 113
        %v1017 = vsel %vm1016, %v1013, %v1015
        %v1018 = vsel %vm1016, %v1015, %v1013
        %s1019 = scalar_lea.vmem %s4, 32
        %v1020 = vld [vmem:[%s1019] ss:$8 sm:$0x3]
        %v1022 = vlaneseq
        %v1023 = vshrl.u32 %v1022, 7
        %v1024 = vsub.s32 0, %v1023
        %v1025 = vrot.slane %v1020, %v1024
        %v1026 = vlaneseq
        %v1027 = vshrl.u32 %v1026, 7
        %v1028 = vsub.s32 1, %v1027
        %v1029 = vrot.slane %v1020, %v1028
        %v1032 = vmul.f32 %v1017, %v1025
        %v1033 = vmul.f32 %v1018, %v1029
        %1034 = vst [vmem:[#allocation2 + $0x100] sm:$0xff] %v1032
        %1035 = vst [vmem:[#allocation2 + $0x108] sm:$0xff] %v1033
        %1036 = vrot.lane.b32.xlu0 %v523, 112
        %v1037 = vpop.permute.xlu0 %1036
        %1038 = vrot.lane.b32.xlu0 %v525, 112
        %v1039 = vpop.permute.xlu0 %1038
        %vm1040 = vcmp.lt.s32.totalorder %v639, 112
        %v1041 = vsel %vm1040, %v1037, %v1039
        %v1042 = vsel %vm1040, %v1039, %v1037
        %s1043 = scalar_lea.vmem %s4, 33
        %v1044 = vld [vmem:[%s1043] ss:$8 sm:$0x3]
        %v1046 = vlaneseq
        %v1047 = vshrl.u32 %v1046, 7
        %v1048 = vsub.s32 0, %v1047
        %v1049 = vrot.slane %v1044, %v1048
        %v1050 = vlaneseq
        %v1051 = vshrl.u32 %v1050, 7
        %v1052 = vsub.s32 1, %v1051
        %v1053 = vrot.slane %v1044, %v1052
        %v1056 = vmul.f32 %v1041, %v1049
        %v1057 = vmul.f32 %v1042, %v1053
        %1058 = vst [vmem:[#allocation2 + $0x110] sm:$0xff] %v1056
        %1059 = vst [vmem:[#allocation2 + $0x118] sm:$0xff] %v1057
        %1060 = vrot.lane.b32.xlu0 %v523, 111
        %v1061 = vpop.permute.xlu0 %1060
        %1062 = vrot.lane.b32.xlu0 %v525, 111
        %v1063 = vpop.permute.xlu0 %1062
        %vm1064 = vcmp.lt.s32.totalorder %v639, 111
        %v1065 = vsel %vm1064, %v1061, %v1063
        %v1066 = vsel %vm1064, %v1063, %v1061
        %s1067 = scalar_lea.vmem %s4, 34
        %v1068 = vld [vmem:[%s1067] ss:$8 sm:$0x3]
        %v1070 = vlaneseq
        %v1071 = vshrl.u32 %v1070, 7
        %v1072 = vsub.s32 0, %v1071
        %v1073 = vrot.slane %v1068, %v1072
        %v1074 = vlaneseq
        %v1075 = vshrl.u32 %v1074, 7
        %v1076 = vsub.s32 1, %v1075
        %v1077 = vrot.slane %v1068, %v1076
        %v1080 = vmul.f32 %v1065, %v1073
        %v1081 = vmul.f32 %v1066, %v1077
        %1082 = vst [vmem:[#allocation2 + $0x120] sm:$0xff] %v1080
        %1083 = vst [vmem:[#allocation2 + $0x128] sm:$0xff] %v1081
        %1084 = vrot.lane.b32.xlu0 %v523, 110
        %v1085 = vpop.permute.xlu0 %1084
        %1086 = vrot.lane.b32.xlu0 %v525, 110
        %v1087 = vpop.permute.xlu0 %1086
        %vm1088 = vcmp.lt.s32.totalorder %v639, 110
        %v1089 = vsel %vm1088, %v1085, %v1087
        %v1090 = vsel %vm1088, %v1087, %v1085
        %s1091 = scalar_lea.vmem %s4, 35
        %v1092 = vld [vmem:[%s1091] ss:$8 sm:$0x3]
        %v1094 = vlaneseq
        %v1095 = vshrl.u32 %v1094, 7
        %v1096 = vsub.s32 0, %v1095
        %v1097 = vrot.slane %v1092, %v1096
        %v1098 = vlaneseq
        %v1099 = vshrl.u32 %v1098, 7
        %v1100 = vsub.s32 1, %v1099
        %v1101 = vrot.slane %v1092, %v1100
        %v1104 = vmul.f32 %v1089, %v1097
        %v1105 = vmul.f32 %v1090, %v1101
        %1106 = vst [vmem:[#allocation2 + $0x130] sm:$0xff] %v1104
        %1107 = vst [vmem:[#allocation2 + $0x138] sm:$0xff] %v1105
        %1108 = vrot.lane.b32.xlu0 %v523, 98
        %v1109 = vpop.permute.xlu0 %1108
        %1110 = vrot.lane.b32.xlu0 %v525, 98
        %v1111 = vpop.permute.xlu0 %1110
        %vm1112 = vcmp.lt.s32.totalorder %v639, 98
        %v1113 = vsel %vm1112, %v1109, %v1111
        %v1114 = vsel %vm1112, %v1111, %v1109
        %s1115 = scalar_lea.vmem %s4, 36
        %v1116 = vld [vmem:[%s1115] ss:$8 sm:$0x3]
        %v1118 = vlaneseq
        %v1119 = vshrl.u32 %v1118, 7
        %v1120 = vsub.s32 0, %v1119
        %v1121 = vrot.slane %v1116, %v1120
        %v1122 = vlaneseq
        %v1123 = vshrl.u32 %v1122, 7
        %v1124 = vsub.s32 1, %v1123
        %v1125 = vrot.slane %v1116, %v1124
        %v1128 = vmul.f32 %v1113, %v1121
        %v1129 = vmul.f32 %v1114, %v1125
        %1130 = vst [vmem:[#allocation2 + $0x140] sm:$0xff] %v1128
        %1131 = vst [vmem:[#allocation2 + $0x148] sm:$0xff] %v1129
        %1132 = vrot.lane.b32.xlu0 %v523, 97
        %v1133 = vpop.permute.xlu0 %1132
        %1134 = vrot.lane.b32.xlu0 %v525, 97
        %v1135 = vpop.permute.xlu0 %1134
        %vm1136 = vcmp.lt.s32.totalorder %v639, 97
        %v1137 = vsel %vm1136, %v1133, %v1135
        %v1138 = vsel %vm1136, %v1135, %v1133
        %s1139 = scalar_lea.vmem %s4, 37
        %v1140 = vld [vmem:[%s1139] ss:$8 sm:$0x3]
        %v1142 = vlaneseq
        %v1143 = vshrl.u32 %v1142, 7
        %v1144 = vsub.s32 0, %v1143
        %v1145 = vrot.slane %v1140, %v1144
        %v1146 = vlaneseq
        %v1147 = vshrl.u32 %v1146, 7
        %v1148 = vsub.s32 1, %v1147
        %v1149 = vrot.slane %v1140, %v1148
        %v1152 = vmul.f32 %v1137, %v1145
        %v1153 = vmul.f32 %v1138, %v1149
        %1154 = vst [vmem:[#allocation2 + $0x150] sm:$0xff] %v1152
        %1155 = vst [vmem:[#allocation2 + $0x158] sm:$0xff] %v1153
        %1156 = vrot.lane.b32.xlu0 %v523, 96
        %v1157 = vpop.permute.xlu0 %1156
        %1158 = vrot.lane.b32.xlu0 %v525, 96
        %v1159 = vpop.permute.xlu0 %1158
        %vm1160 = vcmp.lt.s32.totalorder %v639, 96
        %v1161 = vsel %vm1160, %v1157, %v1159
        %v1162 = vsel %vm1160, %v1159, %v1157
        %s1163 = scalar_lea.vmem %s4, 38
        %v1164 = vld [vmem:[%s1163] ss:$8 sm:$0x3]
        %v1166 = vlaneseq
        %v1167 = vshrl.u32 %v1166, 7
        %v1168 = vsub.s32 0, %v1167
        %v1169 = vrot.slane %v1164, %v1168
        %v1170 = vlaneseq
        %v1171 = vshrl.u32 %v1170, 7
        %v1172 = vsub.s32 1, %v1171
        %v1173 = vrot.slane %v1164, %v1172
        %v1176 = vmul.f32 %v1161, %v1169
        %v1177 = vmul.f32 %v1162, %v1173
        %1178 = vst [vmem:[#allocation2 + $0x160] sm:$0xff] %v1176
        %1179 = vst [vmem:[#allocation2 + $0x168] sm:$0xff] %v1177
        %1180 = vrot.lane.b32.xlu0 %v523, 95
        %v1181 = vpop.permute.xlu0 %1180
        %1182 = vrot.lane.b32.xlu0 %v525, 95
        %v1183 = vpop.permute.xlu0 %1182
        %vm1184 = vcmp.lt.s32.totalorder %v639, 95
        %v1185 = vsel %vm1184, %v1181, %v1183
        %v1186 = vsel %vm1184, %v1183, %v1181
        %s1187 = scalar_lea.vmem %s4, 39
        %v1188 = vld [vmem:[%s1187] ss:$8 sm:$0x3]
        %v1190 = vlaneseq
        %v1191 = vshrl.u32 %v1190, 7
        %v1192 = vsub.s32 0, %v1191
        %v1193 = vrot.slane %v1188, %v1192
        %v1194 = vlaneseq
        %v1195 = vshrl.u32 %v1194, 7
        %v1196 = vsub.s32 1, %v1195
        %v1197 = vrot.slane %v1188, %v1196
        %v1200 = vmul.f32 %v1185, %v1193
        %v1201 = vmul.f32 %v1186, %v1197
        %1202 = vst [vmem:[#allocation2 + $0x170] sm:$0xff] %v1200
        %1203 = vst [vmem:[#allocation2 + $0x178] sm:$0xff] %v1201
        %1204 = vrot.lane.b32.xlu0 %v523, 94
        %v1205 = vpop.permute.xlu0 %1204
        %1206 = vrot.lane.b32.xlu0 %v525, 94
        %v1207 = vpop.permute.xlu0 %1206
        %vm1208 = vcmp.lt.s32.totalorder %v639, 94
        %v1209 = vsel %vm1208, %v1205, %v1207
        %v1210 = vsel %vm1208, %v1207, %v1205
        %s1211 = scalar_lea.vmem %s4, 48
        %v1212 = vld [vmem:[%s1211] ss:$8 sm:$0x3]
        %v1214 = vlaneseq
        %v1215 = vshrl.u32 %v1214, 7
        %v1216 = vsub.s32 0, %v1215
        %v1217 = vrot.slane %v1212, %v1216
        %v1218 = vlaneseq
        %v1219 = vshrl.u32 %v1218, 7
        %v1220 = vsub.s32 1, %v1219
        %v1221 = vrot.slane %v1212, %v1220
        %v1224 = vmul.f32 %v1209, %v1217
        %v1225 = vmul.f32 %v1210, %v1221
        %1226 = vst [vmem:[#allocation2 + $0x180] sm:$0xff] %v1224
        %1227 = vst [vmem:[#allocation2 + $0x188] sm:$0xff] %v1225
        %v1228 = vld [vmem:[%s3] sm:$0xff]
        %v1229 = vld [vmem:[%s3 + $0x8] sm:$0xff]
        %v1230 = vld [vmem:[%s3 + $0x10] sm:$0xff]
        %v1231 = vld [vmem:[%s3 + $0x18] sm:$0xff]
        %v1232 = vld [vmem:[%s3 + $0x20] sm:$0xff]
        %v1233 = vld [vmem:[%s3 + $0x28] sm:$0xff]
        %v1234 = vld [vmem:[%s3 + $0x30] sm:$0xff]
        %v1235 = vld [vmem:[%s3 + $0x38] sm:$0xff]
        %v1236 = vld [vmem:[%s3 + $0x40] sm:$0xff]
        %v1237 = vld [vmem:[%s3 + $0x48] sm:$0xff]
        %v1238 = vld [vmem:[%s3 + $0x50] sm:$0xff]
        %v1239 = vld [vmem:[%s3 + $0x58] sm:$0xff]
        %v1240 = vld [vmem:[%s3 + $0x60] sm:$0xff]
        %v1241 = vld [vmem:[%s3 + $0x68] sm:$0xff]
        %v1242 = vld [vmem:[%s3 + $0x70] sm:$0xff]
        %v1243 = vld [vmem:[%s3 + $0x78] sm:$0xff]
        %v1244 = vld [vmem:[%s3 + $0x80] sm:$0xff]
        %v1245 = vld [vmem:[%s3 + $0x88] sm:$0xff]
        %v1246 = vld [vmem:[%s3 + $0x90] sm:$0xff]
        %v1247 = vld [vmem:[%s3 + $0x98] sm:$0xff]
        %v1248 = vld [vmem:[%s3 + $0xa0] sm:$0xff]
        %v1249 = vld [vmem:[%s3 + $0xa8] sm:$0xff]
        %v1250 = vld [vmem:[%s3 + $0xb0] sm:$0xff]
        %v1251 = vld [vmem:[%s3 + $0xb8] sm:$0xff]
        %v1252 = vld [vmem:[%s3 + $0xc0] sm:$0xff]
        %v1253 = vld [vmem:[%s3 + $0xc8] sm:$0xff]
        %v1254 = vld [vmem:[%s3 + $0xd0] sm:$0xff]
        %v1255 = vld [vmem:[%s3 + $0xd8] sm:$0xff]
        %v1256 = vld [vmem:[%s3 + $0xe0] sm:$0xff]
        %v1257 = vld [vmem:[%s3 + $0xe8] sm:$0xff]
        %v1258 = vld [vmem:[%s3 + $0xf0] sm:$0xff]
        %v1259 = vld [vmem:[%s3 + $0xf8] sm:$0xff]
        %v1260 = vld [vmem:[#allocation2] sm:$0xff]
        %v1261 = vld [vmem:[#allocation2 + $0x8] sm:$0xff]
        %v1262 = vld [vmem:[#allocation2 + $0x10] sm:$0xff]
        %v1263 = vld [vmem:[#allocation2 + $0x18] sm:$0xff]
        %v1264 = vld [vmem:[#allocation2 + $0x20] sm:$0xff]
        %v1265 = vld [vmem:[#allocation2 + $0x28] sm:$0xff]
        %v1266 = vld [vmem:[#allocation2 + $0x30] sm:$0xff]
        %v1267 = vld [vmem:[#allocation2 + $0x38] sm:$0xff]
        %v1268 = vld [vmem:[#allocation2 + $0x40] sm:$0xff]
        %v1269 = vld [vmem:[#allocation2 + $0x48] sm:$0xff]
        %v1270 = vld [vmem:[#allocation2 + $0x50] sm:$0xff]
        %v1271 = vld [vmem:[#allocation2 + $0x58] sm:$0xff]
        %v1272 = vld [vmem:[#allocation2 + $0x60] sm:$0xff]
        %v1273 = vld [vmem:[#allocation2 + $0x68] sm:$0xff]
        %v1274 = vld [vmem:[#allocation2 + $0x70] sm:$0xff]
        %v1275 = vld [vmem:[#allocation2 + $0x78] sm:$0xff]
        %v1276 = vld [vmem:[#allocation2 + $0x80] sm:$0xff]
        %v1277 = vld [vmem:[#allocation2 + $0x88] sm:$0xff]
        %v1278 = vld [vmem:[#allocation2 + $0x90] sm:$0xff]
        %v1279 = vld [vmem:[#allocation2 + $0x98] sm:$0xff]
        %v1280 = vld [vmem:[#allocation2 + $0xa0] sm:$0xff]
        %v1281 = vld [vmem:[#allocation2 + $0xa8] sm:$0xff]
        %v1282 = vld [vmem:[#allocation2 + $0xb0] sm:$0xff]
        %v1283 = vld [vmem:[#allocation2 + $0xb8] sm:$0xff]
        %v1284 = vld [vmem:[#allocation2 + $0xc0] sm:$0xff]
        %v1285 = vld [vmem:[#allocation2 + $0xc8] sm:$0xff]
        %v1286 = vld [vmem:[#allocation2 + $0xd0] sm:$0xff]
        %v1287 = vld [vmem:[#allocation2 + $0xd8] sm:$0xff]
        %v1288 = vld [vmem:[#allocation2 + $0xe0] sm:$0xff]
        %v1289 = vld [vmem:[#allocation2 + $0xe8] sm:$0xff]
        %v1290 = vld [vmem:[#allocation2 + $0xf0] sm:$0xff]
        %v1291 = vld [vmem:[#allocation2 + $0xf8] sm:$0xff]
        %v1292 = vld [vmem:[#allocation2 + $0x100] sm:$0xff]
        %v1293 = vld [vmem:[#allocation2 + $0x108] sm:$0xff]
        %v1294 = vld [vmem:[#allocation2 + $0x110] sm:$0xff]
        %v1295 = vld [vmem:[#allocation2 + $0x118] sm:$0xff]
        %v1296 = vld [vmem:[#allocation2 + $0x120] sm:$0xff]
        %v1297 = vld [vmem:[#allocation2 + $0x128] sm:$0xff]
        %v1298 = vld [vmem:[#allocation2 + $0x130] sm:$0xff]
        %v1299 = vld [vmem:[#allocation2 + $0x138] sm:$0xff]
        %v1300 = vld [vmem:[#allocation2 + $0x140] sm:$0xff]
        %v1301 = vld [vmem:[#allocation2 + $0x148] sm:$0xff]
        %v1302 = vld [vmem:[#allocation2 + $0x150] sm:$0xff]
        %v1303 = vld [vmem:[#allocation2 + $0x158] sm:$0xff]
        %v1304 = vld [vmem:[#allocation2 + $0x160] sm:$0xff]
        %v1305 = vld [vmem:[#allocation2 + $0x168] sm:$0xff]
        %v1306 = vld [vmem:[#allocation2 + $0x170] sm:$0xff]
        %v1307 = vld [vmem:[#allocation2 + $0x178] sm:$0xff]
        %v1308 = vld [vmem:[#allocation2 + $0x180] sm:$0xff]
        %v1309 = vld [vmem:[#allocation2 + $0x188] sm:$0xff]
        %vm1310 = vcmask 588800
        %v1312 = vsel %vm1310, %v1229, 0
        %v1315 = vsel %vm1310, %v1231, 0
        %v1318 = vsel %vm1310, %v1233, 0
        %v1321 = vsel %vm1310, %v1235, 0
        %v1324 = vsel %vm1310, %v1237, 0
        %v1327 = vsel %vm1310, %v1239, 0
        %v1330 = vsel %vm1310, %v1241, 0
        %v1333 = vsel %vm1310, %v1243, 0
        %v1336 = vsel %vm1310, %v1245, 0
        %v1339 = vsel %vm1310, %v1247, 0
        %v1342 = vsel %vm1310, %v1249, 0
        %v1345 = vsel %vm1310, %v1251, 0
        %v1348 = vsel %vm1310, %v1253, 0
        %v1351 = vsel %vm1310, %v1255, 0
        %v1354 = vsel %vm1310, %v1257, 0
        %v1357 = vsel %vm1310, %v1259, 0
        %1359 = vmatprep.subr.mxu0 %v1261
        %1360 = vmatpush1.msra.mxu0 %v1260
        %1361 = vmatprep.subr.mxu0 %v1263
        %1362 = vmatpush1.msra.mxu0 %v1262
        %1363 = vmatprep.subr.mxu0 %v1265
        %1364 = vmatpush1.msra.mxu0 %v1264
        %1365 = vmatprep.subr.mxu0 %v1267
        %1366 = vmatpush1.msra.mxu0 %v1266
        %1367 = vmatprep.subr.mxu0 %v1269
        %1368 = vmatpush1.msra.mxu0 %v1268
        %1369 = vmatprep.subr.mxu0 %v1271
        %1370 = vmatpush1.msra.mxu0 %v1270
        %1371 = vmatprep.subr.mxu0 %v1273
        %1372 = vmatpush1.msra.mxu0 %v1272
        %1373 = vmatprep.subr.mxu0 %v1275
        %1374 = vmatpush1.msra.mxu0 %v1274
        %1375 = vmatprep.subr.mxu0 %v1277
        %1376 = vmatpush1.msra.mxu0 %v1276
        %1377 = vmatprep.subr.mxu0 %v1279
        %1378 = vmatpush1.msra.mxu0 %v1278
        %1379 = vmatprep.subr.mxu0 %v1281
        %1380 = vmatpush1.msra.mxu0 %v1280
        %1381 = vmatprep.subr.mxu0 %v1283
        %1382 = vmatpush1.msra.mxu0 %v1282
        %1383 = vmatprep.subr.mxu0 %v1285
        %1384 = vmatpush1.msra.mxu0 %v1284
        %1385 = vmatprep.subr.mxu0 %v1287
        %1386 = vmatpush1.msra.mxu0 %v1286
        %1387 = vmatprep.subr.mxu0 %v1289
        %1388 = vmatpush1.msra.mxu0 %v1288
        %1389 = vmatprep.subr.mxu0 %v1291
        %1390 = vmatpush1.msra.mxu0 %v1290
        %1391 = vmatprep.subr.mxu0 %v1293
        %1392 = vmatpush1.msra.mxu0 %v1292
        %1393 = vmatprep.subr.mxu0 %v1295
        %1394 = vmatpush1.msra.mxu0 %v1294
        %1395 = vmatprep.subr.mxu0 %v1297
        %1396 = vmatpush1.msra.mxu0 %v1296
        %1397 = vmatprep.subr.mxu0 %v1299
        %1398 = vmatpush1.msra.mxu0 %v1298
        %1399 = vmatprep.subr.mxu0 %v1301
        %1400 = vmatpush1.msra.mxu0 %v1300
        %1401 = vmatprep.subr.mxu0 %v1303
        %1402 = vmatpush1.msra.mxu0 %v1302
        %1403 = vmatprep.subr.mxu0 %v1305
        %1404 = vmatpush1.msra.mxu0 %v1304
        %1405 = vmatprep.subr.mxu0 %v1307
        %1406 = vmatpush1.msra.mxu0 %v1306
        %1407 = vmatprep.subr.mxu0 %v1309
        %1408 = vmatpush1.msra.mxu0 %v1308
        %1409 = vmatprep.subr.mxu0 0.0
        %1410 = vmatpush1.msra.mxu0 0.0
        %1411 = vmatprep.subr.mxu0 0.0
        %1412 = vmatpush1.msra.mxu0 0.0
        %1413 = vmatprep.subr.mxu0 0.0
        %1414 = vmatpush1.msra.mxu0 0.0
        %1415 = vmatprep.subr.mxu0 0.0
        %1416 = vmatpush1.msra.mxu0 0.0
        %1417 = vmatprep.subr.mxu0 0.0
        %1418 = vmatpush1.msra.mxu0 0.0
        %1419 = vmatprep.subr.mxu0 0.0
        %1420 = vmatpush1.msra.mxu0 0.0
        %1421 = vmatprep.subr.mxu0 0.0
        %1422 = vmatpush1.msra.mxu0 0.0
        %1423 = vmatprep.mubr.f32.mxu0 %v1312
        %1424 = vmatmul.mubr.f32.gmra.mrb[0].mxu0 %v1228
        %v1425 = vpop.f32.mrb[0].mxu0
        %v1426 = vadd.f32 0.0, %v1425
        %v1427 = vpop.f32.mrb[0].mxu0
        %v1428 = vadd.f32 0.0, %v1427
        %1429 = vmatprep.mubr.f32.mxu0 %v1315
        %1430 = vmatmul.mubr.f32.gmra.mrb[0].mxu0 %v1230
        %v1431 = vpop.f32.mrb[0].mxu0
        %v1432 = vadd.f32 0.0, %v1431
        %v1433 = vpop.f32.mrb[0].mxu0
        %v1434 = vadd.f32 0.0, %v1433
        %1435 = vmatprep.mubr.f32.mxu0 %v1318
        %1436 = vmatmul.mubr.f32.gmra.mrb[0].mxu0 %v1232
        %v1437 = vpop.f32.mrb[0].mxu0
        %v1438 = vadd.f32 0.0, %v1437
        %v1439 = vpop.f32.mrb[0].mxu0
        %v1440 = vadd.f32 0.0, %v1439
        %1441 = vmatprep.mubr.f32.mxu0 %v1321
        %1442 = vmatmul.mubr.f32.gmra.mrb[0].mxu0 %v1234
        %v1443 = vpop.f32.mrb[0].mxu0
        %v1444 = vadd.f32 0.0, %v1443
        %v1445 = vpop.f32.mrb[0].mxu0
        %v1446 = vadd.f32 0.0, %v1445
        %1447 = vmatprep.mubr.f32.mxu0 %v1324
        %1448 = vmatmul.mubr.f32.gmra.mrb[0].mxu0 %v1236
        %v1449 = vpop.f32.mrb[0].mxu0
        %v1450 = vadd.f32 0.0, %v1449
        %v1451 = vpop.f32.mrb[0].mxu0
        %v1452 = vadd.f32 0.0, %v1451
        %1453 = vmatprep.mubr.f32.mxu0 %v1327
        %1454 = vmatmul.mubr.f32.gmra.mrb[0].mxu0 %v1238
        %v1455 = vpop.f32.mrb[0].mxu0
        %v1456 = vadd.f32 0.0, %v1455
        %v1457 = vpop.f32.mrb[0].mxu0
        %v1458 = vadd.f32 0.0, %v1457
        %1459 = vmatprep.mubr.f32.mxu0 %v1330
        %1460 = vmatmul.mubr.f32.gmra.mrb[0].mxu0 %v1240
        %v1461 = vpop.f32.mrb[0].mxu0
        %v1462 = vadd.f32 0.0, %v1461
        %v1463 = vpop.f32.mrb[0].mxu0
        %v1464 = vadd.f32 0.0, %v1463
        %1465 = vmatprep.mubr.f32.mxu0 %v1333
        %1466 = vmatmul.mubr.f32.gmra.mrb[0].mxu0 %v1242
        %v1467 = vpop.f32.mrb[0].mxu0
        %v1468 = vadd.f32 0.0, %v1467
        %v1469 = vpop.f32.mrb[0].mxu0
        %v1470 = vadd.f32 0.0, %v1469
        %1471 = vmatprep.mubr.f32.mxu0 %v1336
        %1472 = vmatmul.mubr.f32.gmra.mrb[0].mxu0 %v1244
        %v1473 = vpop.f32.mrb[0].mxu0
        %v1474 = vadd.f32 0.0, %v1473
        %v1475 = vpop.f32.mrb[0].mxu0
        %v1476 = vadd.f32 0.0, %v1475
        %1477 = vmatprep.mubr.f32.mxu0 %v1339
        %1478 = vmatmul.mubr.f32.gmra.mrb[0].mxu0 %v1246
        %v1479 = vpop.f32.mrb[0].mxu0
        %v1480 = vadd.f32 0.0, %v1479
        %v1481 = vpop.f32.mrb[0].mxu0
        %v1482 = vadd.f32 0.0, %v1481
        %1483 = vmatprep.mubr.f32.mxu0 %v1342
        %1484 = vmatmul.mubr.f32.gmra.mrb[0].mxu0 %v1248
        %v1485 = vpop.f32.mrb[0].mxu0
        %v1486 = vadd.f32 0.0, %v1485
        %v1487 = vpop.f32.mrb[0].mxu0
        %v1488 = vadd.f32 0.0, %v1487
        %1489 = vmatprep.mubr.f32.mxu0 %v1345
        %1490 = vmatmul.mubr.f32.gmra.mrb[0].mxu0 %v1250
        %v1491 = vpop.f32.mrb[0].mxu0
        %v1492 = vadd.f32 0.0, %v1491
        %v1493 = vpop.f32.mrb[0].mxu0
        %v1494 = vadd.f32 0.0, %v1493
        %1495 = vmatprep.mubr.f32.mxu0 %v1348
        %1496 = vmatmul.mubr.f32.gmra.mrb[0].mxu0 %v1252
        %v1497 = vpop.f32.mrb[0].mxu0
        %v1498 = vadd.f32 0.0, %v1497
        %v1499 = vpop.f32.mrb[0].mxu0
        %v1500 = vadd.f32 0.0, %v1499
        %1501 = vmatprep.mubr.f32.mxu0 %v1351
        %1502 = vmatmul.mubr.f32.gmra.mrb[0].mxu0 %v1254
        %v1503 = vpop.f32.mrb[0].mxu0
        %v1504 = vadd.f32 0.0, %v1503
        %v1505 = vpop.f32.mrb[0].mxu0
        %v1506 = vadd.f32 0.0, %v1505
        %1507 = vmatprep.mubr.f32.mxu0 %v1354
        %1508 = vmatmul.mubr.f32.gmra.mrb[0].mxu0 %v1256
        %v1509 = vpop.f32.mrb[0].mxu0
        %v1510 = vadd.f32 0.0, %v1509
        %v1511 = vpop.f32.mrb[0].mxu0
        %v1512 = vadd.f32 0.0, %v1511
        %1513 = vmatprep.mubr.f32.mxu0 %v1357
        %1514 = vmatmul.mubr.f32.gmra.mrb[0].mxu0 %v1258
        %v1515 = vpop.f32.mrb[0].mxu0
        %v1516 = vadd.f32 0.0, %v1515
        %v1517 = vpop.f32.mrb[0].mxu0
        %v1518 = vadd.f32 0.0, %v1517
        %1519 = vdwg.mxu0
        %1521 = vrot.lane.b32.xlu0 %v631, 16
        %v1522 = vpop.permute.xlu0 %1521
        %1524 = vrot.lane.b32.xlu0 %v631, 32
        %v1525 = vpop.permute.xlu0 %1524
        %1527 = vrot.lane.b32.xlu0 %v631, 48
        %v1528 = vpop.permute.xlu0 %1527
        %vm1530 = vcmask 130048
        %v1531 = vsel %vm1530, %v631, %v1522
        %v1532 = vsel %vm362, %v1531, %v1525
        %vm1533 = vcmask 392192
        %v1534 = vsel %vm1533, %v1532, %v1528
        %v1535 = vld [vmem:[%s5] sm:$0xff]
        %v1536 = vld [vmem:[%s5 + $0x8] sm:$0xff]
        %v1537 = vld [vmem:[%s5 + $0x10] sm:$0xff]
        %v1538 = vld [vmem:[%s5 + $0x18] sm:$0xff]
        %v1539 = vmul.f32 %v1534, %v1535
        %v1540 = vmul.f32 %v1534, %v1536
        %v1541 = vmul.f32 %v1534, %v1537
        %v1542 = vmul.f32 %v1534, %v1538
        %vm1543 = vcmask 523264
        %v1545 = vsel %vm1543, %v1539, 0
        %v1548 = vsel %vm1543, %v1540, 0
        %v1551 = vsel %vm1543, %v1541, 0
        %v1554 = vsel %vm1543, %v1542, 0
        %1556 = vmatprep.subr.mxu0 %v465
        %1557 = vmatpush1.msra.mxu0 %v463
        %1558 = vmatprep.subr.mxu0 %v471
        %1559 = vmatpush1.msra.mxu0 %v469
        %1560 = vmatprep.subr.mxu0 %v477
        %1561 = vmatpush1.msra.mxu0 %v475
        %1562 = vmatprep.subr.mxu0 %v483
        %1563 = vmatpush1.msra.mxu0 %v481
        %1564 = vmatprep.subr.mxu0 %v489
        %1565 = vmatpush1.msra.mxu0 %v487
        %1566 = vmatprep.subr.mxu0 %v495
        %1567 = vmatpush1.msra.mxu0 %v493
        %1568 = vmatprep.subr.mxu0 %v501
        %1569 = vmatpush1.msra.mxu0 %v499
        %1570 = vmatprep.subr.mxu0 %v507
        %1571 = vmatpush1.msra.mxu0 %v505
        %1572 = vmatprep.subr.mxu0 0.0
        %1573 = vmatpush1.msra.mxu0 0.0
        %1574 = vmatprep.subr.mxu0 0.0
        %1575 = vmatpush1.msra.mxu0 0.0
        %1576 = vmatprep.subr.mxu0 0.0
        %1577 = vmatpush1.msra.mxu0 0.0
        %1578 = vmatprep.subr.mxu0 0.0
        %1579 = vmatpush1.msra.mxu0 0.0
        %1580 = vmatprep.subr.mxu0 0.0
        %1581 = vmatpush1.msra.mxu0 0.0
        %1582 = vmatprep.subr.mxu0 0.0
        %1583 = vmatpush1.msra.mxu0 0.0
        %1584 = vmatprep.subr.mxu0 0.0
        %1585 = vmatpush1.msra.mxu0 0.0
        %1586 = vmatprep.subr.mxu0 0.0
        %1587 = vmatpush1.msra.mxu0 0.0
        %1588 = vmatprep.subr.mxu0 0.0
        %1589 = vmatpush1.msra.mxu0 0.0
        %1590 = vmatprep.subr.mxu0 0.0
        %1591 = vmatpush1.msra.mxu0 0.0
        %1592 = vmatprep.subr.mxu0 0.0
        %1593 = vmatpush1.msra.mxu0 0.0
        %1594 = vmatprep.subr.mxu0 0.0
        %1595 = vmatpush1.msra.mxu0 0.0
        %1596 = vmatprep.subr.mxu0 0.0
        %1597 = vmatpush1.msra.mxu0 0.0
        %1598 = vmatprep.subr.mxu0 0.0
        %1599 = vmatpush1.msra.mxu0 0.0
        %1600 = vmatprep.subr.mxu0 0.0
        %1601 = vmatpush1.msra.mxu0 0.0
        %1602 = vmatprep.subr.mxu0 0.0
        %1603 = vmatpush1.msra.mxu0 0.0
        %1604 = vmatprep.subr.mxu0 0.0
        %1605 = vmatpush1.msra.mxu0 0.0
        %1606 = vmatprep.subr.mxu0 0.0
        %1607 = vmatpush1.msra.mxu0 0.0
        %1608 = vmatprep.subr.mxu0 0.0
        %1609 = vmatpush1.msra.mxu0 0.0
        %1610 = vmatprep.subr.mxu0 0.0
        %1611 = vmatpush1.msra.mxu0 0.0
        %1612 = vmatprep.subr.mxu0 0.0
        %1613 = vmatpush1.msra.mxu0 0.0
        %1614 = vmatprep.subr.mxu0 0.0
        %1615 = vmatpush1.msra.mxu0 0.0
        %1616 = vmatprep.subr.mxu0 0.0
        %1617 = vmatpush1.msra.mxu0 0.0
        %1618 = vmatprep.subr.mxu0 0.0
        %1619 = vmatpush1.msra.mxu0 0.0
        %1620 = vmatprep.mubr.f32.mxu0 0.0
        %1621 = vmatmul.mubr.f32.gmra.mrb[0].mxu0 %v1545
        %v1622 = vpop.f32.mrb[0].mxu0
        %v1623 = vadd.f32 0.0, %v1622
        %v1624 = vpop.f32.mrb[0].mxu0
        %v1625 = vadd.f32 0.0, %v1624
        %1626 = vmatprep.mubr.f32.mxu0 0.0
        %1627 = vmatmul.mubr.f32.gmra.mrb[0].mxu0 %v1548
        %v1628 = vpop.f32.mrb[0].mxu0
        %v1629 = vadd.f32 0.0, %v1628
        %v1630 = vpop.f32.mrb[0].mxu0
        %v1631 = vadd.f32 0.0, %v1630
        %1632 = vmatprep.mubr.f32.mxu0 0.0
        %1633 = vmatmul.mubr.f32.gmra.mrb[0].mxu0 %v1551
        %v1634 = vpop.f32.mrb[0].mxu0
        %v1635 = vadd.f32 0.0, %v1634
        %v1636 = vpop.f32.mrb[0].mxu0
        %v1637 = vadd.f32 0.0, %v1636
        %1638 = vmatprep.mubr.f32.mxu0 0.0
        %1639 = vmatmul.mubr.f32.gmra.mrb[0].mxu0 %v1554
        %v1640 = vpop.f32.mrb[0].mxu0
        %v1641 = vadd.f32 0.0, %v1640
        %v1642 = vpop.f32.mrb[0].mxu0
        %v1643 = vadd.f32 0.0, %v1642
        %1644 = vdwg.mxu0
        %v1645 = vmul.f32 %v463, %v1426
        %v1646 = vmul.f32 %v465, %v1428
        %v1647 = vmul.f32 %v469, %v1432
        %v1648 = vmul.f32 %v471, %v1434
        %v1649 = vadd.f32 %v1645, %v1647
        %v1650 = vrot.slane %v1649, 4
        %v1651 = vadd.f32 %v1649, %v1650
        %v1652 = vrot.slane %v1651, 2
        %v1653 = vadd.f32 %v1651, %v1652
        %v1654 = vrot.slane %v1653, 1
        %v1655 = vadd.f32 %v1653, %v1654
        %v1656 = vadd.f32 %v1646, %v1648
        %v1657 = vrot.slane %v1656, 4
        %v1658 = vadd.f32 %v1656, %v1657
        %v1659 = vrot.slane %v1658, 2
        %v1660 = vadd.f32 %v1658, %v1659
        %v1661 = vrot.slane %v1660, 1
        %v1662 = vadd.f32 %v1660, %v1661
        %v1663 = vmul.f32 %v463, %v1438
        %v1664 = vmul.f32 %v465, %v1440
        %v1665 = vmul.f32 %v469, %v1444
        %v1666 = vmul.f32 %v471, %v1446
        %v1667 = vadd.f32 %v1663, %v1665
        %v1668 = vrot.slane %v1667, 4
        %v1669 = vadd.f32 %v1667, %v1668
        %v1670 = vrot.slane %v1669, 2
        %v1671 = vadd.f32 %v1669, %v1670
        %v1672 = vrot.slane %v1671, 1
        %v1673 = vadd.f32 %v1671, %v1672
        %v1674 = vadd.f32 %v1664, %v1666
        %v1675 = vrot.slane %v1674, 4
        %v1676 = vadd.f32 %v1674, %v1675
        %v1677 = vrot.slane %v1676, 2
        %v1678 = vadd.f32 %v1676, %v1677
        %v1679 = vrot.slane %v1678, 1
        %v1680 = vadd.f32 %v1678, %v1679
        %v1681 = vmul.f32 %v463, %v1450
        %v1682 = vmul.f32 %v465, %v1452
        %v1683 = vmul.f32 %v469, %v1456
        %v1684 = vmul.f32 %v471, %v1458
        %v1685 = vadd.f32 %v1681, %v1683
        %v1686 = vrot.slane %v1685, 4
        %v1687 = vadd.f32 %v1685, %v1686
        %v1688 = vrot.slane %v1687, 2
        %v1689 = vadd.f32 %v1687, %v1688
        %v1690 = vrot.slane %v1689, 1
        %v1691 = vadd.f32 %v1689, %v1690
        %v1692 = vadd.f32 %v1682, %v1684
        %v1693 = vrot.slane %v1692, 4
        %v1694 = vadd.f32 %v1692, %v1693
        %v1695 = vrot.slane %v1694, 2
        %v1696 = vadd.f32 %v1694, %v1695
        %v1697 = vrot.slane %v1696, 1
        %v1698 = vadd.f32 %v1696, %v1697
        %v1699 = vmul.f32 %v463, %v1462
        %v1700 = vmul.f32 %v465, %v1464
        %v1701 = vmul.f32 %v469, %v1468
        %v1702 = vmul.f32 %v471, %v1470
        %v1703 = vadd.f32 %v1699, %v1701
        %v1704 = vrot.slane %v1703, 4
        %v1705 = vadd.f32 %v1703, %v1704
        %v1706 = vrot.slane %v1705, 2
        %v1707 = vadd.f32 %v1705, %v1706
        %v1708 = vrot.slane %v1707, 1
        %v1709 = vadd.f32 %v1707, %v1708
        %v1710 = vadd.f32 %v1700, %v1702
        %v1711 = vrot.slane %v1710, 4
        %v1712 = vadd.f32 %v1710, %v1711
        %v1713 = vrot.slane %v1712, 2
        %v1714 = vadd.f32 %v1712, %v1713
        %v1715 = vrot.slane %v1714, 1
        %v1716 = vadd.f32 %v1714, %v1715
        %v1717 = vmul.f32 %v463, %v1474
        %v1718 = vmul.f32 %v465, %v1476
        %v1719 = vmul.f32 %v469, %v1480
        %v1720 = vmul.f32 %v471, %v1482
        %v1721 = vadd.f32 %v1717, %v1719
        %v1722 = vrot.slane %v1721, 4
        %v1723 = vadd.f32 %v1721, %v1722
        %v1724 = vrot.slane %v1723, 2
        %v1725 = vadd.f32 %v1723, %v1724
        %v1726 = vrot.slane %v1725, 1
        %v1727 = vadd.f32 %v1725, %v1726
        %v1728 = vadd.f32 %v1718, %v1720
        %v1729 = vrot.slane %v1728, 4
        %v1730 = vadd.f32 %v1728, %v1729
        %v1731 = vrot.slane %v1730, 2
        %v1732 = vadd.f32 %v1730, %v1731
        %v1733 = vrot.slane %v1732, 1
        %v1734 = vadd.f32 %v1732, %v1733
        %v1735 = vmul.f32 %v463, %v1486
        %v1736 = vmul.f32 %v465, %v1488
        %v1737 = vmul.f32 %v469, %v1492
        %v1738 = vmul.f32 %v471, %v1494
        %v1739 = vadd.f32 %v1735, %v1737
        %v1740 = vrot.slane %v1739, 4
        %v1741 = vadd.f32 %v1739, %v1740
        %v1742 = vrot.slane %v1741, 2
        %v1743 = vadd.f32 %v1741, %v1742
        %v1744 = vrot.slane %v1743, 1
        %v1745 = vadd.f32 %v1743, %v1744
        %v1746 = vadd.f32 %v1736, %v1738
        %v1747 = vrot.slane %v1746, 4
        %v1748 = vadd.f32 %v1746, %v1747
        %v1749 = vrot.slane %v1748, 2
        %v1750 = vadd.f32 %v1748, %v1749
        %v1751 = vrot.slane %v1750, 1
        %v1752 = vadd.f32 %v1750, %v1751
        %v1753 = vmul.f32 %v463, %v1498
        %v1754 = vmul.f32 %v465, %v1500
        %v1755 = vmul.f32 %v469, %v1504
        %v1756 = vmul.f32 %v471, %v1506
        %v1757 = vadd.f32 %v1753, %v1755
        %v1758 = vrot.slane %v1757, 4
        %v1759 = vadd.f32 %v1757, %v1758
        %v1760 = vrot.slane %v1759, 2
        %v1761 = vadd.f32 %v1759, %v1760
        %v1762 = vrot.slane %v1761, 1
        %v1763 = vadd.f32 %v1761, %v1762
        %v1764 = vadd.f32 %v1754, %v1756
        %v1765 = vrot.slane %v1764, 4
        %v1766 = vadd.f32 %v1764, %v1765
        %v1767 = vrot.slane %v1766, 2
        %v1768 = vadd.f32 %v1766, %v1767
        %v1769 = vrot.slane %v1768, 1
        %v1770 = vadd.f32 %v1768, %v1769
        %v1771 = vmul.f32 %v463, %v1510
        %v1772 = vmul.f32 %v465, %v1512
        %v1773 = vmul.f32 %v469, %v1516
        %v1774 = vmul.f32 %v471, %v1518
        %v1775 = vadd.f32 %v1771, %v1773
        %v1776 = vrot.slane %v1775, 4
        %v1777 = vadd.f32 %v1775, %v1776
        %v1778 = vrot.slane %v1777, 2
        %v1779 = vadd.f32 %v1777, %v1778
        %v1780 = vrot.slane %v1779, 1
        %v1781 = vadd.f32 %v1779, %v1780
        %v1782 = vadd.f32 %v1772, %v1774
        %v1783 = vrot.slane %v1782, 4
        %v1784 = vadd.f32 %v1782, %v1783
        %v1785 = vrot.slane %v1784, 2
        %v1786 = vadd.f32 %v1784, %v1785
        %v1787 = vrot.slane %v1786, 1
        %v1788 = vadd.f32 %v1786, %v1787
        %vm1789 = vcmask 1040384
        %v1790 = vsel %vm1789, %v1655, %v1673
        %v1791 = vsel %vm1789, %v1662, %v1680
        %vm1792 = vcmask 1041408
        %v1793 = vsel %vm1792, %v1790, %v1691
        %v1794 = vsel %vm1792, %v1791, %v1698
        %vm1795 = vcmask 1042432
        %v1796 = vsel %vm1795, %v1793, %v1709
        %v1797 = vsel %vm1795, %v1794, %v1716
        %vm1798 = vcmask 1043456
        %v1799 = vsel %vm1798, %v1796, %v1727
        %v1800 = vsel %vm1798, %v1797, %v1734
        %vm1801 = vcmask 1044480
        %v1802 = vsel %vm1801, %v1799, %v1745
        %v1803 = vsel %vm1801, %v1800, %v1752
        %vm1804 = vcmask 1045504
        %v1805 = vsel %vm1804, %v1802, %v1763
        %v1806 = vsel %vm1804, %v1803, %v1770
        %vm1807 = vcmask 1046528
        %v1808 = vsel %vm1807, %v1805, %v1781
        %v1809 = vsel %vm1807, %v1806, %v1788
        %v1810 = vadd.f32 %v1623, %v1808
        %v1811 = vadd.f32 %v1625, %v1809
        %1812 = vst [vmem:[%s271] sm:$0xff] %v1810
        %1813 = vst [vmem:[%s271 + $0x8] sm:$0xff] %v1811
        %v1814 = vmul.f32 %v475, %v1426
        %v1815 = vmul.f32 %v477, %v1428
        %v1816 = vmul.f32 %v481, %v1432
        %v1817 = vmul.f32 %v483, %v1434
        %v1818 = vadd.f32 %v1814, %v1816
        %v1819 = vrot.slane %v1818, 4
        %v1820 = vadd.f32 %v1818, %v1819
        %v1821 = vrot.slane %v1820, 2
        %v1822 = vadd.f32 %v1820, %v1821
        %v1823 = vrot.slane %v1822, 1
        %v1824 = vadd.f32 %v1822, %v1823
        %v1825 = vadd.f32 %v1815, %v1817
        %v1826 = vrot.slane %v1825, 4
        %v1827 = vadd.f32 %v1825, %v1826
        %v1828 = vrot.slane %v1827, 2
        %v1829 = vadd.f32 %v1827, %v1828
        %v1830 = vrot.slane %v1829, 1
        %v1831 = vadd.f32 %v1829, %v1830
        %v1832 = vmul.f32 %v475, %v1438
        %v1833 = vmul.f32 %v477, %v1440
        %v1834 = vmul.f32 %v481, %v1444
        %v1835 = vmul.f32 %v483, %v1446
        %v1836 = vadd.f32 %v1832, %v1834
        %v1837 = vrot.slane %v1836, 4
        %v1838 = vadd.f32 %v1836, %v1837
        %v1839 = vrot.slane %v1838, 2
        %v1840 = vadd.f32 %v1838, %v1839
        %v1841 = vrot.slane %v1840, 1
        %v1842 = vadd.f32 %v1840, %v1841
        %v1843 = vadd.f32 %v1833, %v1835
        %v1844 = vrot.slane %v1843, 4
        %v1845 = vadd.f32 %v1843, %v1844
        %v1846 = vrot.slane %v1845, 2
        %v1847 = vadd.f32 %v1845, %v1846
        %v1848 = vrot.slane %v1847, 1
        %v1849 = vadd.f32 %v1847, %v1848
        %v1850 = vmul.f32 %v475, %v1450
        %v1851 = vmul.f32 %v477, %v1452
        %v1852 = vmul.f32 %v481, %v1456
        %v1853 = vmul.f32 %v483, %v1458
        %v1854 = vadd.f32 %v1850, %v1852
        %v1855 = vrot.slane %v1854, 4
        %v1856 = vadd.f32 %v1854, %v1855
        %v1857 = vrot.slane %v1856, 2
        %v1858 = vadd.f32 %v1856, %v1857
        %v1859 = vrot.slane %v1858, 1
        %v1860 = vadd.f32 %v1858, %v1859
        %v1861 = vadd.f32 %v1851, %v1853
        %v1862 = vrot.slane %v1861, 4
        %v1863 = vadd.f32 %v1861, %v1862
        %v1864 = vrot.slane %v1863, 2
        %v1865 = vadd.f32 %v1863, %v1864
        %v1866 = vrot.slane %v1865, 1
        %v1867 = vadd.f32 %v1865, %v1866
        %v1868 = vmul.f32 %v475, %v1462
        %v1869 = vmul.f32 %v477, %v1464
        %v1870 = vmul.f32 %v481, %v1468
        %v1871 = vmul.f32 %v483, %v1470
        %v1872 = vadd.f32 %v1868, %v1870
        %v1873 = vrot.slane %v1872, 4
        %v1874 = vadd.f32 %v1872, %v1873
        %v1875 = vrot.slane %v1874, 2
        %v1876 = vadd.f32 %v1874, %v1875
        %v1877 = vrot.slane %v1876, 1
        %v1878 = vadd.f32 %v1876, %v1877
        %v1879 = vadd.f32 %v1869, %v1871
        %v1880 = vrot.slane %v1879, 4
        %v1881 = vadd.f32 %v1879, %v1880
        %v1882 = vrot.slane %v1881, 2
        %v1883 = vadd.f32 %v1881, %v1882
        %v1884 = vrot.slane %v1883, 1
        %v1885 = vadd.f32 %v1883, %v1884
        %v1886 = vmul.f32 %v475, %v1474
        %v1887 = vmul.f32 %v477, %v1476
        %v1888 = vmul.f32 %v481, %v1480
        %v1889 = vmul.f32 %v483, %v1482
        %v1890 = vadd.f32 %v1886, %v1888
        %v1891 = vrot.slane %v1890, 4
        %v1892 = vadd.f32 %v1890, %v1891
        %v1893 = vrot.slane %v1892, 2
        %v1894 = vadd.f32 %v1892, %v1893
        %v1895 = vrot.slane %v1894, 1
        %v1896 = vadd.f32 %v1894, %v1895
        %v1897 = vadd.f32 %v1887, %v1889
        %v1898 = vrot.slane %v1897, 4
        %v1899 = vadd.f32 %v1897, %v1898
        %v1900 = vrot.slane %v1899, 2
        %v1901 = vadd.f32 %v1899, %v1900
        %v1902 = vrot.slane %v1901, 1
        %v1903 = vadd.f32 %v1901, %v1902
        %v1904 = vmul.f32 %v475, %v1486
        %v1905 = vmul.f32 %v477, %v1488
        %v1906 = vmul.f32 %v481, %v1492
        %v1907 = vmul.f32 %v483, %v1494
        %v1908 = vadd.f32 %v1904, %v1906
        %v1909 = vrot.slane %v1908, 4
        %v1910 = vadd.f32 %v1908, %v1909
        %v1911 = vrot.slane %v1910, 2
        %v1912 = vadd.f32 %v1910, %v1911
        %v1913 = vrot.slane %v1912, 1
        %v1914 = vadd.f32 %v1912, %v1913
        %v1915 = vadd.f32 %v1905, %v1907
        %v1916 = vrot.slane %v1915, 4
        %v1917 = vadd.f32 %v1915, %v1916
        %v1918 = vrot.slane %v1917, 2
        %v1919 = vadd.f32 %v1917, %v1918
        %v1920 = vrot.slane %v1919, 1
        %v1921 = vadd.f32 %v1919, %v1920
        %v1922 = vmul.f32 %v475, %v1498
        %v1923 = vmul.f32 %v477, %v1500
        %v1924 = vmul.f32 %v481, %v1504
        %v1925 = vmul.f32 %v483, %v1506
        %v1926 = vadd.f32 %v1922, %v1924
        %v1927 = vrot.slane %v1926, 4
        %v1928 = vadd.f32 %v1926, %v1927
        %v1929 = vrot.slane %v1928, 2
        %v1930 = vadd.f32 %v1928, %v1929
        %v1931 = vrot.slane %v1930, 1
        %v1932 = vadd.f32 %v1930, %v1931
        %v1933 = vadd.f32 %v1923, %v1925
        %v1934 = vrot.slane %v1933, 4
        %v1935 = vadd.f32 %v1933, %v1934
        %v1936 = vrot.slane %v1935, 2
        %v1937 = vadd.f32 %v1935, %v1936
        %v1938 = vrot.slane %v1937, 1
        %v1939 = vadd.f32 %v1937, %v1938
        %v1940 = vmul.f32 %v475, %v1510
        %v1941 = vmul.f32 %v477, %v1512
        %v1942 = vmul.f32 %v481, %v1516
        %v1943 = vmul.f32 %v483, %v1518
        %v1944 = vadd.f32 %v1940, %v1942
        %v1945 = vrot.slane %v1944, 4
        %v1946 = vadd.f32 %v1944, %v1945
        %v1947 = vrot.slane %v1946, 2
        %v1948 = vadd.f32 %v1946, %v1947
        %v1949 = vrot.slane %v1948, 1
        %v1950 = vadd.f32 %v1948, %v1949
        %v1951 = vadd.f32 %v1941, %v1943
        %v1952 = vrot.slane %v1951, 4
        %v1953 = vadd.f32 %v1951, %v1952
        %v1954 = vrot.slane %v1953, 2
        %v1955 = vadd.f32 %v1953, %v1954
        %v1956 = vrot.slane %v1955, 1
        %v1957 = vadd.f32 %v1955, %v1956
        %v1958 = vsel %vm1789, %v1824, %v1842
        %v1959 = vsel %vm1789, %v1831, %v1849
        %v1960 = vsel %vm1792, %v1958, %v1860
        %v1961 = vsel %vm1792, %v1959, %v1867
        %v1962 = vsel %vm1795, %v1960, %v1878
        %v1963 = vsel %vm1795, %v1961, %v1885
        %v1964 = vsel %vm1798, %v1962, %v1896
        %v1965 = vsel %vm1798, %v1963, %v1903
        %v1966 = vsel %vm1801, %v1964, %v1914
        %v1967 = vsel %vm1801, %v1965, %v1921
        %v1968 = vsel %vm1804, %v1966, %v1932
        %v1969 = vsel %vm1804, %v1967, %v1939
        %v1970 = vsel %vm1807, %v1968, %v1950
        %v1971 = vsel %vm1807, %v1969, %v1957
        %v1972 = vadd.f32 %v1629, %v1970
        %v1973 = vadd.f32 %v1631, %v1971
        %1974 = vst [vmem:[%s271 + $0x10] sm:$0xff] %v1972
        %1975 = vst [vmem:[%s271 + $0x18] sm:$0xff] %v1973
        %v1976 = vmul.f32 %v487, %v1426
        %v1977 = vmul.f32 %v489, %v1428
        %v1978 = vmul.f32 %v493, %v1432
        %v1979 = vmul.f32 %v495, %v1434
        %v1980 = vadd.f32 %v1976, %v1978
        %v1981 = vrot.slane %v1980, 4
        %v1982 = vadd.f32 %v1980, %v1981
        %v1983 = vrot.slane %v1982, 2
        %v1984 = vadd.f32 %v1982, %v1983
        %v1985 = vrot.slane %v1984, 1
        %v1986 = vadd.f32 %v1984, %v1985
        %v1987 = vadd.f32 %v1977, %v1979
        %v1988 = vrot.slane %v1987, 4
        %v1989 = vadd.f32 %v1987, %v1988
        %v1990 = vrot.slane %v1989, 2
        %v1991 = vadd.f32 %v1989, %v1990
        %v1992 = vrot.slane %v1991, 1
        %v1993 = vadd.f32 %v1991, %v1992
        %v1994 = vmul.f32 %v487, %v1438
        %v1995 = vmul.f32 %v489, %v1440
        %v1996 = vmul.f32 %v493, %v1444
        %v1997 = vmul.f32 %v495, %v1446
        %v1998 = vadd.f32 %v1994, %v1996
        %v1999 = vrot.slane %v1998, 4
        %v2000 = vadd.f32 %v1998, %v1999
        %v2001 = vrot.slane %v2000, 2
        %v2002 = vadd.f32 %v2000, %v2001
        %v2003 = vrot.slane %v2002, 1
        %v2004 = vadd.f32 %v2002, %v2003
        %v2005 = vadd.f32 %v1995, %v1997
        %v2006 = vrot.slane %v2005, 4
        %v2007 = vadd.f32 %v2005, %v2006
        %v2008 = vrot.slane %v2007, 2
        %v2009 = vadd.f32 %v2007, %v2008
        %v2010 = vrot.slane %v2009, 1
        %v2011 = vadd.f32 %v2009, %v2010
        %v2012 = vmul.f32 %v487, %v1450
        %v2013 = vmul.f32 %v489, %v1452
        %v2014 = vmul.f32 %v493, %v1456
        %v2015 = vmul.f32 %v495, %v1458
        %v2016 = vadd.f32 %v2012, %v2014
        %v2017 = vrot.slane %v2016, 4
        %v2018 = vadd.f32 %v2016, %v2017
        %v2019 = vrot.slane %v2018, 2
        %v2020 = vadd.f32 %v2018, %v2019
        %v2021 = vrot.slane %v2020, 1
        %v2022 = vadd.f32 %v2020, %v2021
        %v2023 = vadd.f32 %v2013, %v2015
        %v2024 = vrot.slane %v2023, 4
        %v2025 = vadd.f32 %v2023, %v2024
        %v2026 = vrot.slane %v2025, 2
        %v2027 = vadd.f32 %v2025, %v2026
        %v2028 = vrot.slane %v2027, 1
        %v2029 = vadd.f32 %v2027, %v2028
        %v2030 = vmul.f32 %v487, %v1462
        %v2031 = vmul.f32 %v489, %v1464
        %v2032 = vmul.f32 %v493, %v1468
        %v2033 = vmul.f32 %v495, %v1470
        %v2034 = vadd.f32 %v2030, %v2032
        %v2035 = vrot.slane %v2034, 4
        %v2036 = vadd.f32 %v2034, %v2035
        %v2037 = vrot.slane %v2036, 2
        %v2038 = vadd.f32 %v2036, %v2037
        %v2039 = vrot.slane %v2038, 1
        %v2040 = vadd.f32 %v2038, %v2039
        %v2041 = vadd.f32 %v2031, %v2033
        %v2042 = vrot.slane %v2041, 4
        %v2043 = vadd.f32 %v2041, %v2042
        %v2044 = vrot.slane %v2043, 2
        %v2045 = vadd.f32 %v2043, %v2044
        %v2046 = vrot.slane %v2045, 1
        %v2047 = vadd.f32 %v2045, %v2046
        %v2048 = vmul.f32 %v487, %v1474
        %v2049 = vmul.f32 %v489, %v1476
        %v2050 = vmul.f32 %v493, %v1480
        %v2051 = vmul.f32 %v495, %v1482
        %v2052 = vadd.f32 %v2048, %v2050
        %v2053 = vrot.slane %v2052, 4
        %v2054 = vadd.f32 %v2052, %v2053
        %v2055 = vrot.slane %v2054, 2
        %v2056 = vadd.f32 %v2054, %v2055
        %v2057 = vrot.slane %v2056, 1
        %v2058 = vadd.f32 %v2056, %v2057
        %v2059 = vadd.f32 %v2049, %v2051
        %v2060 = vrot.slane %v2059, 4
        %v2061 = vadd.f32 %v2059, %v2060
        %v2062 = vrot.slane %v2061, 2
        %v2063 = vadd.f32 %v2061, %v2062
        %v2064 = vrot.slane %v2063, 1
        %v2065 = vadd.f32 %v2063, %v2064
        %v2066 = vmul.f32 %v487, %v1486
        %v2067 = vmul.f32 %v489, %v1488
        %v2068 = vmul.f32 %v493, %v1492
        %v2069 = vmul.f32 %v495, %v1494
        %v2070 = vadd.f32 %v2066, %v2068
        %v2071 = vrot.slane %v2070, 4
        %v2072 = vadd.f32 %v2070, %v2071
        %v2073 = vrot.slane %v2072, 2
        %v2074 = vadd.f32 %v2072, %v2073
        %v2075 = vrot.slane %v2074, 1
        %v2076 = vadd.f32 %v2074, %v2075
        %v2077 = vadd.f32 %v2067, %v2069
        %v2078 = vrot.slane %v2077, 4
        %v2079 = vadd.f32 %v2077, %v2078
        %v2080 = vrot.slane %v2079, 2
        %v2081 = vadd.f32 %v2079, %v2080
        %v2082 = vrot.slane %v2081, 1
        %v2083 = vadd.f32 %v2081, %v2082
        %v2084 = vmul.f32 %v487, %v1498
        %v2085 = vmul.f32 %v489, %v1500
        %v2086 = vmul.f32 %v493, %v1504
        %v2087 = vmul.f32 %v495, %v1506
        %v2088 = vadd.f32 %v2084, %v2086
        %v2089 = vrot.slane %v2088, 4
        %v2090 = vadd.f32 %v2088, %v2089
        %v2091 = vrot.slane %v2090, 2
        %v2092 = vadd.f32 %v2090, %v2091
        %v2093 = vrot.slane %v2092, 1
        %v2094 = vadd.f32 %v2092, %v2093
        %v2095 = vadd.f32 %v2085, %v2087
        %v2096 = vrot.slane %v2095, 4
        %v2097 = vadd.f32 %v2095, %v2096
        %v2098 = vrot.slane %v2097, 2
        %v2099 = vadd.f32 %v2097, %v2098
        %v2100 = vrot.slane %v2099, 1
        %v2101 = vadd.f32 %v2099, %v2100
        %v2102 = vmul.f32 %v487, %v1510
        %v2103 = vmul.f32 %v489, %v1512
        %v2104 = vmul.f32 %v493, %v1516
        %v2105 = vmul.f32 %v495, %v1518
        %v2106 = vadd.f32 %v2102, %v2104
        %v2107 = vrot.slane %v2106, 4
        %v2108 = vadd.f32 %v2106, %v2107
        %v2109 = vrot.slane %v2108, 2
        %v2110 = vadd.f32 %v2108, %v2109
        %v2111 = vrot.slane %v2110, 1
        %v2112 = vadd.f32 %v2110, %v2111
        %v2113 = vadd.f32 %v2103, %v2105
        %v2114 = vrot.slane %v2113, 4
        %v2115 = vadd.f32 %v2113, %v2114
        %v2116 = vrot.slane %v2115, 2
        %v2117 = vadd.f32 %v2115, %v2116
        %v2118 = vrot.slane %v2117, 1
        %v2119 = vadd.f32 %v2117, %v2118
        %v2120 = vsel %vm1789, %v1986, %v2004
        %v2121 = vsel %vm1789, %v1993, %v2011
        %v2122 = vsel %vm1792, %v2120, %v2022
        %v2123 = vsel %vm1792, %v2121, %v2029
        %v2124 = vsel %vm1795, %v2122, %v2040
        %v2125 = vsel %vm1795, %v2123, %v2047
        %v2126 = vsel %vm1798, %v2124, %v2058
        %v2127 = vsel %vm1798, %v2125, %v2065
        %v2128 = vsel %vm1801, %v2126, %v2076
        %v2129 = vsel %vm1801, %v2127, %v2083
        %v2130 = vsel %vm1804, %v2128, %v2094
        %v2131 = vsel %vm1804, %v2129, %v2101
        %v2132 = vsel %vm1807, %v2130, %v2112
        %v2133 = vsel %vm1807, %v2131, %v2119
        %v2134 = vadd.f32 %v1635, %v2132
        %v2135 = vadd.f32 %v1637, %v2133
        %2136 = vst [vmem:[%s271 + $0x20] sm:$0xff] %v2134
        %2137 = vst [vmem:[%s271 + $0x28] sm:$0xff] %v2135
        %v2138 = vmul.f32 %v499, %v1426
        %v2139 = vmul.f32 %v501, %v1428
        %v2140 = vmul.f32 %v505, %v1432
        %v2141 = vmul.f32 %v507, %v1434
        %v2142 = vadd.f32 %v2138, %v2140
        %v2143 = vrot.slane %v2142, 4
        %v2144 = vadd.f32 %v2142, %v2143
        %v2145 = vrot.slane %v2144, 2
        %v2146 = vadd.f32 %v2144, %v2145
        %v2147 = vrot.slane %v2146, 1
        %v2148 = vadd.f32 %v2146, %v2147
        %v2149 = vadd.f32 %v2139, %v2141
        %v2150 = vrot.slane %v2149, 4
        %v2151 = vadd.f32 %v2149, %v2150
        %v2152 = vrot.slane %v2151, 2
        %v2153 = vadd.f32 %v2151, %v2152
        %v2154 = vrot.slane %v2153, 1
        %v2155 = vadd.f32 %v2153, %v2154
        %v2156 = vmul.f32 %v499, %v1438
        %v2157 = vmul.f32 %v501, %v1440
        %v2158 = vmul.f32 %v505, %v1444
        %v2159 = vmul.f32 %v507, %v1446
        %v2160 = vadd.f32 %v2156, %v2158
        %v2161 = vrot.slane %v2160, 4
        %v2162 = vadd.f32 %v2160, %v2161
        %v2163 = vrot.slane %v2162, 2
        %v2164 = vadd.f32 %v2162, %v2163
        %v2165 = vrot.slane %v2164, 1
        %v2166 = vadd.f32 %v2164, %v2165
        %v2167 = vadd.f32 %v2157, %v2159
        %v2168 = vrot.slane %v2167, 4
        %v2169 = vadd.f32 %v2167, %v2168
        %v2170 = vrot.slane %v2169, 2
        %v2171 = vadd.f32 %v2169, %v2170
        %v2172 = vrot.slane %v2171, 1
        %v2173 = vadd.f32 %v2171, %v2172
        %v2174 = vmul.f32 %v499, %v1450
        %v2175 = vmul.f32 %v501, %v1452
        %v2176 = vmul.f32 %v505, %v1456
        %v2177 = vmul.f32 %v507, %v1458
        %v2178 = vadd.f32 %v2174, %v2176
        %v2179 = vrot.slane %v2178, 4
        %v2180 = vadd.f32 %v2178, %v2179
        %v2181 = vrot.slane %v2180, 2
        %v2182 = vadd.f32 %v2180, %v2181
        %v2183 = vrot.slane %v2182, 1
        %v2184 = vadd.f32 %v2182, %v2183
        %v2185 = vadd.f32 %v2175, %v2177
        %v2186 = vrot.slane %v2185, 4
        %v2187 = vadd.f32 %v2185, %v2186
        %v2188 = vrot.slane %v2187, 2
        %v2189 = vadd.f32 %v2187, %v2188
        %v2190 = vrot.slane %v2189, 1
        %v2191 = vadd.f32 %v2189, %v2190
        %v2192 = vmul.f32 %v499, %v1462
        %v2193 = vmul.f32 %v501, %v1464
        %v2194 = vmul.f32 %v505, %v1468
        %v2195 = vmul.f32 %v507, %v1470
        %v2196 = vadd.f32 %v2192, %v2194
        %v2197 = vrot.slane %v2196, 4
        %v2198 = vadd.f32 %v2196, %v2197
        %v2199 = vrot.slane %v2198, 2
        %v2200 = vadd.f32 %v2198, %v2199
        %v2201 = vrot.slane %v2200, 1
        %v2202 = vadd.f32 %v2200, %v2201
        %v2203 = vadd.f32 %v2193, %v2195
        %v2204 = vrot.slane %v2203, 4
        %v2205 = vadd.f32 %v2203, %v2204
        %v2206 = vrot.slane %v2205, 2
        %v2207 = vadd.f32 %v2205, %v2206
        %v2208 = vrot.slane %v2207, 1
        %v2209 = vadd.f32 %v2207, %v2208
        %v2210 = vmul.f32 %v499, %v1474
        %v2211 = vmul.f32 %v501, %v1476
        %v2212 = vmul.f32 %v505, %v1480
        %v2213 = vmul.f32 %v507, %v1482
        %v2214 = vadd.f32 %v2210, %v2212
        %v2215 = vrot.slane %v2214, 4
        %v2216 = vadd.f32 %v2214, %v2215
        %v2217 = vrot.slane %v2216, 2
        %v2218 = vadd.f32 %v2216, %v2217
        %v2219 = vrot.slane %v2218, 1
        %v2220 = vadd.f32 %v2218, %v2219
        %v2221 = vadd.f32 %v2211, %v2213
        %v2222 = vrot.slane %v2221, 4
        %v2223 = vadd.f32 %v2221, %v2222
        %v2224 = vrot.slane %v2223, 2
        %v2225 = vadd.f32 %v2223, %v2224
        %v2226 = vrot.slane %v2225, 1
        %v2227 = vadd.f32 %v2225, %v2226
        %v2228 = vmul.f32 %v499, %v1486
        %v2229 = vmul.f32 %v501, %v1488
        %v2230 = vmul.f32 %v505, %v1492
        %v2231 = vmul.f32 %v507, %v1494
        %v2232 = vadd.f32 %v2228, %v2230
        %v2233 = vrot.slane %v2232, 4
        %v2234 = vadd.f32 %v2232, %v2233
        %v2235 = vrot.slane %v2234, 2
        %v2236 = vadd.f32 %v2234, %v2235
        %v2237 = vrot.slane %v2236, 1
        %v2238 = vadd.f32 %v2236, %v2237
        %v2239 = vadd.f32 %v2229, %v2231
        %v2240 = vrot.slane %v2239, 4
        %v2241 = vadd.f32 %v2239, %v2240
        %v2242 = vrot.slane %v2241, 2
        %v2243 = vadd.f32 %v2241, %v2242
        %v2244 = vrot.slane %v2243, 1
        %v2245 = vadd.f32 %v2243, %v2244
        %v2246 = vmul.f32 %v499, %v1498
        %v2247 = vmul.f32 %v501, %v1500
        %v2248 = vmul.f32 %v505, %v1504
        %v2249 = vmul.f32 %v507, %v1506
        %v2250 = vadd.f32 %v2246, %v2248
        %v2251 = vrot.slane %v2250, 4
        %v2252 = vadd.f32 %v2250, %v2251
        %v2253 = vrot.slane %v2252, 2
        %v2254 = vadd.f32 %v2252, %v2253
        %v2255 = vrot.slane %v2254, 1
        %v2256 = vadd.f32 %v2254, %v2255
        %v2257 = vadd.f32 %v2247, %v2249
        %v2258 = vrot.slane %v2257, 4
        %v2259 = vadd.f32 %v2257, %v2258
        %v2260 = vrot.slane %v2259, 2
        %v2261 = vadd.f32 %v2259, %v2260
        %v2262 = vrot.slane %v2261, 1
        %v2263 = vadd.f32 %v2261, %v2262
        %v2264 = vmul.f32 %v499, %v1510
        %v2265 = vmul.f32 %v501, %v1512
        %v2266 = vmul.f32 %v505, %v1516
        %v2267 = vmul.f32 %v507, %v1518
        %v2268 = vadd.f32 %v2264, %v2266
        %v2269 = vrot.slane %v2268, 4
        %v2270 = vadd.f32 %v2268, %v2269
        %v2271 = vrot.slane %v2270, 2
        %v2272 = vadd.f32 %v2270, %v2271
        %v2273 = vrot.slane %v2272, 1
        %v2274 = vadd.f32 %v2272, %v2273
        %v2275 = vadd.f32 %v2265, %v2267
        %v2276 = vrot.slane %v2275, 4
        %v2277 = vadd.f32 %v2275, %v2276
        %v2278 = vrot.slane %v2277, 2
        %v2279 = vadd.f32 %v2277, %v2278
        %v2280 = vrot.slane %v2279, 1
        %v2281 = vadd.f32 %v2279, %v2280
        %v2282 = vsel %vm1789, %v2148, %v2166
        %v2283 = vsel %vm1789, %v2155, %v2173
        %v2284 = vsel %vm1792, %v2282, %v2184
        %v2285 = vsel %vm1792, %v2283, %v2191
        %v2286 = vsel %vm1795, %v2284, %v2202
        %v2287 = vsel %vm1795, %v2285, %v2209
        %v2288 = vsel %vm1798, %v2286, %v2220
        %v2289 = vsel %vm1798, %v2287, %v2227
        %v2290 = vsel %vm1801, %v2288, %v2238
        %v2291 = vsel %vm1801, %v2289, %v2245
        %v2292 = vsel %vm1804, %v2290, %v2256
        %v2293 = vsel %vm1804, %v2291, %v2263
        %v2294 = vsel %vm1807, %v2292, %v2274
        %v2295 = vsel %vm1807, %v2293, %v2281
        %v2296 = vadd.f32 %v1641, %v2294
        %v2297 = vadd.f32 %v1643, %v2295
        %2298 = vst [vmem:[%s271 + $0x30] sm:$0xff] %v2296
        %2299 = vst [vmem:[%s271 + $0x38] sm:$0xff] %v2297
        %s2300 = sand.u32 %s181, 1
        %s2301 = scalar_lea.sflag [#allocation4], %s2300
        %s2302 = sand.u32 %s181, 1
        %s2303 = smul.addr %s2302, 64
        %s2304 = scalar_lea.vmem [#allocation3], %s2303
        // Predicated region
        $region49: #{tpu_custom_call.1} parent=47 // pred_check
          %p2305 = pneg %p191
        $region50: #{tpu_custom_call.1} parent=47 // pred_check_branch
          %2307 = sbr.rel (%p2305) target = $region52
        $region51: #{tpu_custom_call.1} parent=47 // pred_region
          %s2309 = ssub.s32 1024, 1024
          %2310 = vsyncadd %s2301, %s2309
          %s2311 = smul.addr %s21, 8
          %s2312 = smul.addr %s2311, 128
          %s2313 = scalar_lea.hbm %s7, %s2312
          %s2314 = sshll.u32 %s2304, 4
          %s2315 = int_to_ptr.vmem [resolvable:$true] %s2314
          %2320 = dma.vmem_to_hbm [thread:$0]  %s2315, 1024, %s2313, %s2301, 256, 256, 16
        $region52: #{tpu_custom_call.1} parent=47 // pred_fallthru
          _
      $region48: #{tpu_custom_call.1} parent=5 // pred_fallthru
        _
      %p2321 = scmp.le.s32.totalorder 2, %s16
      // Predicated region
      $region53: #{tpu_custom_call.1} parent=5 // pred_check
        %p2322 = pneg %p2321
      $region54: #{tpu_custom_call.1} parent=5 // pred_check_branch
        %2324 = sbr.rel (%p2322) target = $region56
      $region55: #{tpu_custom_call.1} parent=5 // pred_region
        %s2325 = ssub.s32 %s16, 2
        // Predicated region
        $region57: #{tpu_custom_call.1} parent=55 // pred_check
          %p2326 = pneg %p197
        $region58: #{tpu_custom_call.1} parent=55 // pred_check_branch
          %2328 = sbr.rel (%p2326) target = $region60
        $region59: #{tpu_custom_call.1} parent=55 // pred_region
          %s2329 = sand.u32 %s182, 1
          %s2330 = scalar_lea.sflag [#allocation4], %s2329
          %s2331 = sand.u32 %s182, 1
          %s2332 = smul.addr %s2331, 64
          %s2333 = scalar_lea.vmem [#allocation3], %s2332
          %2334 = dma.done %s2330, 1024
        $region60: #{tpu_custom_call.1} parent=55 // pred_fallthru
          _
      $region56: #{tpu_custom_call.1} parent=5 // pred_fallthru
        _
    $region6: #{tpu_custom_call.1} parent=1 // loop_footer
      %s20 = sadd.s32 1, %s16
    $region7: #{tpu_custom_call.1} parent=1 // loop_footer_branch
      %15 = sbr.rel target = $region3
    $region8: #{tpu_custom_call.1} parent=1 // loop_exit
      _
    %2335 = vsyncpa [#allocation4], 1
    %s2336 = scalar_lea.sflag [#allocation4], 1
    %2337 = vsyncpa %s2336, 1

</llo_original>
